<compile_context>
chip_gen: v5e
topology: v5e:2x2
jax: 0.10.0
libtpu: 0.0.40
codegen_flags: <defaults>
</compile_context>

<pallas_src>
import functools

import jax
import jax.numpy as jnp
from jax.experimental import pallas as pl
from jax.experimental.pallas import tpu as pltpu

N_ = 256        # `n` in the PyTorch module
N_PRIME = 512   # `n_prime` in the PyTorch module


def coverage_attention_kernel(x_ref, p_ref, st_ref,
                              ua_ref, quf_ref, bkc_ref,
                              wa_ref, va_ref, vab_ref,
                              ctx_ref, alpha_ref,
                              *, c_channels, hw_tile, use_bf16_tanh):
    """One batch element x one HW chunk per grid step (batch dim squeezed).

    Kernel-visible shapes:
      x_ref    : (C,  HW_TILE)   encoder features, HW in lanes
      p_ref    : (kk, HW_TILE)   im2col of the coverage map beta
      st_ref   : (1,  n)         decoder state
      ua_ref   : (n', C)         conv_Ua weight
      quf_ref  : (n', kk)        fc_Uf.weight @ conv_Q weight (folded)
      bkc_ref  : (n', 1)         folded key+cover+query bias
      wa_ref   : (n', n)         fc_Wa weight
      va_ref   : (1, n')         fc_Va weight;  vab_ref: (1, 1) fc_Va bias
      ctx_ref  : (1, C_PAD)      resident across the HW axis (accumulator)
      alpha_ref: (1, HW)         resident across the HW axis
    """
    h = pl.program_id(1)
    nh = pl.num_programs(1)

    @pl.when(h == 0)
    def _init():
        ctx_ref[...] = jnp.zeros_like(ctx_ref)

    x_t = x_ref[...]                                   # (C,  HW_TILE)
    p_t = p_ref[...]                                   # (kk, HW_TILE)

    # key + cover: conv_Ua(x) + fc_Uf(conv_Q(beta)), folded into two MXU
    # contractions over the feature dim; HW stays in lanes.
    kc = (jnp.dot(ua_ref[...], x_t, preferred_element_type=jnp.float32)
          + jnp.dot(quf_ref[...], p_t, preferred_element_type=jnp.float32)
          + bkc_ref[...])                              # (n', HW_TILE)

    # query = fc_Wa(st_hat), produced directly as an (n', 1) column so the
    # broadcast over HW lanes needs no lane->sublane relayout.
    # (Recomputed per HW chunk -- it is a tiny n' x n matvec.)
    q_col = jax.lax.dot_general(wa_ref[...], st_ref[...],
                                (((1,), (1,)), ((), ())),
                                preferred_element_type=jnp.float32)   # (n', 1)

    pre = kc + q_col
    if use_bf16_tanh:
        pre = pre.astype(jnp.bfloat16)    # ~2x EUP throughput on v6e/v7x
    score = jnp.tanh(pre)                 # (n', HW_TILE) -- dominant (EUP) cost

    # e = fc_Va(score): (1, n') @ (n', HW) on the MXU, lane-dense in HW.
    e = (jnp.dot(va_ref[...].astype(score.dtype), score,
                 preferred_element_type=jnp.float32)
         + vab_ref[...])                               # (1, HW_TILE)

    # Exact PyTorch normalisation: exp / (sum + 1e-8), no max-subtraction.
    # TODO(synk): subtract max(e) before exp if overflow robustness is
    # preferred over bit-matching the PyTorch module.
    e_exp = jnp.exp(e)                                 # (1, HW_TILE) f32

    start = pl.multiple_of(h * hw_tile, hw_tile)
    alpha_ref[:, pl.ds(start, hw_tile)] = e_exp        # un-normalised for now

    # Partial context: contract HW on the MXU (rhs is HW-major, i.e. trans_b).
    # x is upcast to f32 so the context term never multiplies a bf16-rounded
    # exp(e) through a bf16 accumulator.
    ctx_part = jax.lax.dot_general(e_exp, x_t.astype(jnp.float32),
                                   (((1,), (1,)), ((), ())),
                                   preferred_element_type=jnp.float32)  # (1, C)
    ctx_ref[:, :c_channels] = ctx_ref[:, :c_channels] + ctx_part

    @pl.when(h == nh - 1)
    def _finalize():
        denom = jnp.sum(alpha_ref[...], axis=-1, keepdims=True) + 1e-8   # (1, 1)
        inv = pl.reciprocal(denom)     # exact (approx=False) keeps tight alpha tol
        alpha_ref[...] = alpha_ref[...] * inv
        ctx_ref[...] = ctx_ref[...] * inv


def init_params(key, input_size, output_size, kernel_size):
    """Deterministic parameter init matching the module's parameter shapes."""
    ks = jax.random.split(key, 10)

    def xavier(k, shape):  # shape = (out_features, in_features)
        fan_out, fan_in = shape
        std = (2.0 / (fan_in + fan_out)) ** 0.5
        return std * jax.random.normal(k, shape, jnp.float32)

    return {
        'conv_Q_w': 0.1 * jax.random.normal(ks[0], (output_size, 1, kernel_size, kernel_size), jnp.float32),
        'conv_Q_b': 0.1 * jax.random.normal(ks[1], (output_size,), jnp.float32),
        'fc_Wa_w': xavier(ks[2], (N_PRIME, N_)),
        'fc_Wa_b': 0.1 * jax.random.normal(ks[3], (N_PRIME,), jnp.float32),
        'conv_Ua_w': 0.1 * jax.random.normal(ks[4], (N_PRIME, input_size, 1, 1), jnp.float32),
        'conv_Ua_b': 0.1 * jax.random.normal(ks[5], (N_PRIME,), jnp.float32),
        'fc_Uf_w': xavier(ks[6], (N_PRIME, output_size)),
        'fc_Uf_b': 0.1 * jax.random.normal(ks[7], (N_PRIME,), jnp.float32),
        'fc_Va_w': xavier(ks[8], (1, N_PRIME)),
        'fc_Va_b': 0.1 * jax.random.normal(ks[9], (1,), jnp.float32),
    }


def _pick_hw_tile(hw, max_tile=1024):
    """Largest multiple-of-128 divisor of HW below max_tile (or HW itself)."""
    if hw <= max_tile:
        return hw
    t = (max_tile // 128) * 128
    while t >= 128:
        if hw % t == 0:
            return t
        t -= 128
    # TODO(synk): HW larger than max_tile with no multiple-of-128 divisor falls
    # back to a single full-width chunk (VMEM permitting).
    return hw


def _default_vmem_limit_bytes():
    """~3/4 of physical VMEM (v7x: 48 MiB, v5e/v6e: 96 MiB), capped at 100 MiB."""
    try:
        cap = getattr(pltpu.get_tpu_info(), "vmem_capacity_bytes", None)
        if cap:
            return int(min(int(cap) * 3 // 4, 100 * 1024 * 1024))
    except Exception:
        pass
    return 48 * 1024 * 1024


def coverage_attention_forward(params, x, st_hat, alpha_state, kernel_size, padding,
                               use_bf16_inputs=False, use_bf16_tanh=False,
                               hw_tile=None):
    """x: (bs, C, H, W) NCHW; st_hat: (bs, 1, n); alpha_state: (bs, T, H*W).

    Assumes padding == (kernel_size - 1) // 2 (the module itself only works in
    that "same conv" regime, since F must match key spatially).
    """
    bs, C, H, W = x.shape
    HW = H * W
    Q = params['conv_Q_w'].shape[0]
    kk = kernel_size * kernel_size

    # ---- glue (pure JAX): coverage sum + im2col for conv_Q (no transpose of x) ----
    beta = alpha_state.sum(axis=1).reshape(bs, H, W)
    beta_p = jnp.pad(beta, ((0, 0), (padding, padding), (padding, padding)))
    patch_list = [beta_p[:, di:di + H, dj:dj + W]
                  for di in range(kernel_size) for dj in range(kernel_size)]
    patches = jnp.stack(patch_list, axis=1).reshape(bs, kk, HW)     # (bs, kk, HW)

    x_flat = x.reshape(bs, C, HW)                                   # native (bs, C, HW)
    st = st_hat.reshape(bs, 1, N_)

    # ---- weight prep: fold conv_Q . fc_Uf; all weights stay (out, in) ----
    ua_w = params['conv_Ua_w'].reshape(N_PRIME, C)                  # (n', C)
    q_w = params['conv_Q_w'].reshape(Q, kk)                         # (Q, kk)
    uf_w = params['fc_Uf_w']                                        # (n', Q)
    quf_w = uf_w @ q_w                                              # (n', kk)
    # conv_Ua, folded conv_Q.fc_Uf and fc_Wa biases all add per-n' before the
    # tanh -> fold them into a single (n', 1) column bias.
    bkc = (params['conv_Ua_b'] + uf_w @ params['conv_Q_b'] + params['fc_Uf_b']
           + params['fc_Wa_b']).reshape(N_PRIME, 1)
    wa_w = params['fc_Wa_w']                                        # (n', n)
    va_w = params['fc_Va_w'].reshape(1, N_PRIME)
    va_b = params['fc_Va_b'].reshape(1, 1)

    if use_bf16_inputs:
        # Halves streamed DMA bytes / MXU operand width; dots still accumulate
        # in f32. TODO(synk): context then includes bf16 input rounding of x.
        x_flat = x_flat.astype(jnp.bfloat16)
        patches = patches.astype(jnp.bfloat16)
        st = st.astype(jnp.bfloat16)
        ua_w = ua_w.astype(jnp.bfloat16)
        quf_w = quf_w.astype(jnp.bfloat16)
        wa_w = wa_w.astype(jnp.bfloat16)

    # ---- tiling: batch = parallel axis (1 elem/step), HW chunked (arbitrary) ----
    if hw_tile is None:
        hw_tile = _pick_hw_tile(HW)
    if HW % hw_tile != 0:
        hw_tile = HW
    nh = HW // hw_tile
    C_PAD = ((max(C, 1) + 127) // 128) * 128     # lane-dense ctx writeback

    def _full_spec(shape):
        nd = len(shape)
        return pl.BlockSpec(shape, lambda b, h, _nd=nd: (0,) * _nd)

    kern = functools.partial(coverage_attention_kernel, c_channels=C,
                             hw_tile=hw_tile, use_bf16_tanh=use_bf16_tanh)

    ctx_pad, alpha = pl.pallas_call(
        kern,
        grid=(bs, nh),
        in_specs=[
            pl.BlockSpec((pl.Squeezed(), C, hw_tile), lambda b, h: (b, 0, h)),
            pl.BlockSpec((pl.Squeezed(), kk, hw_tile), lambda b, h: (b, 0, h)),
            pl.BlockSpec((pl.Squeezed(), 1, N_), lambda b, h: (b, 0, 0)),
            _full_spec((N_PRIME, C)),
            _full_spec((N_PRIME, kk)),
            _full_spec((N_PRIME, 1)),
            _full_spec((N_PRIME, N_)),
            _full_spec((1, N_PRIME)),
            _full_spec((1, 1)),
        ],
        out_specs=[
            pl.BlockSpec((pl.Squeezed(), 1, C_PAD), lambda b, h: (b, 0, 0)),
            pl.BlockSpec((pl.Squeezed(), 1, HW), lambda b, h: (b, 0, 0)),
        ],
        out_shape=[
            jax.ShapeDtypeStruct((bs, 1, C_PAD), jnp.float32),
            jax.ShapeDtypeStruct((bs, 1, HW), jnp.float32),
        ],
        compiler_params=pltpu.CompilerParams(
            dimension_semantics=("parallel", "arbitrary"),
            vmem_limit_bytes=_default_vmem_limit_bytes()),
    )(x_flat, patches, st, ua_w, quf_w, bkc, wa_w, va_w, va_b)

    context = ctx_pad[:, 0, :C]
    alpha_t = alpha.reshape(bs, 1, H, W)
    # TODO(synk): the module's `self.alpha = torch.cat((alpha, alpha_t), dim=1)`
    # state update is module state; the caller carries alpha_state explicitly.
    return context, alpha_t


def reference_forward(params, x, st_hat, alpha_state, kernel_size, padding):
    """Pure-JAX transcription of the PyTorch forward for verification."""
    bs, C, H, W = x.shape
    beta = alpha_state.sum(1).reshape(bs, H, W)
    F_ = jax.lax.conv_general_dilated(
        beta[:, None, :, :], params['conv_Q_w'], (1, 1),
        [(padding, padding), (padding, padding)],
        dimension_numbers=('NCHW', 'OIHW', 'NCHW')) + params['conv_Q_b'][None, :, None, None]
    F_ = F_.transpose(2, 3, 0, 1)                                           # (H, W, bs, Q)
    cover = F_ @ params['fc_Uf_w'].T + params['fc_Uf_b']
    key = jax.lax.conv_general_dilated(
        x, params['conv_Ua_w'], (1, 1), 'VALID',
        dimension_numbers=('NCHW', 'OIHW', 'NCHW')) + params['conv_Ua_b'][None, :, None, None]
    key = key.transpose(2, 3, 0, 1)                                         # (H, W, bs, n')
    query = st_hat.reshape(bs, N_) @ params['fc_Wa_w'].T + params['fc_Wa_b']
    score = jnp.tanh(key + query[None, None, :, :] + cover)
    e_t = (score @ params['fc_Va_w'].T + params['fc_Va_b'])[..., 0]         # (H, W, bs)
    e_t = e_t.transpose(2, 0, 1).reshape(bs, -1)
    e_exp = jnp.exp(e_t)
    alpha_t = e_exp / (e_exp.sum(1, keepdims=True) + 1e-8)
    x_flat = x.reshape(bs, C, -1)
    context = (alpha_t[:, None, :] * x_flat).sum(2)
    return context, alpha_t.reshape(bs, 1, x.shape[2], x.shape[3])


if __name__ == "__main__":
    kernel_size, padding = 3, 1       # "same" conv so F matches key spatially

    def run_case(case_key, bs, C, H, W, output_size, n_prev, hw_tile=None):
        k_params, k_x, k_st, k_alpha = jax.random.split(case_key, 4)
        params = init_params(k_params, C, output_size, kernel_size)
        x = jax.random.normal(k_x, (bs, C, H, W), jnp.float32)
        st_hat = jax.random.normal(k_st, (bs, 1, N_), jnp.float32)
        alpha_state = jax.nn.softmax(
            jax.random.normal(k_alpha, (bs, n_prev, H * W), jnp.float32), axis=-1)

        ctx, alpha_t = coverage_attention_forward(params, x, st_hat, alpha_state,
                                                  kernel_size, padding,
                                                  hw_tile=hw_tile)
        jax.block_until_ready((ctx, alpha_t))

        ref_ctx, ref_alpha = reference_forward(params, x, st_hat, alpha_state,
                                               kernel_size, padding)
        # MXU f32 accumulation order differs slightly from the XLA reference.
        assert jnp.allclose(ctx, ref_ctx, atol=5e-4, rtol=1e-3), "context mismatch"
        assert jnp.allclose(alpha_t, ref_alpha, atol=5e-5, rtol=1e-3), "alpha mismatch"

    key = jax.random.PRNGKey(0)
    k1, k2 = jax.random.split(key)
    # Small case: single HW chunk per batch element.
    run_case(k1, bs=2, C=4, H=16, W=16, output_size=8, n_prev=2)
    # Larger spatial case exercising the HW-chunked accumulation path (4 chunks).
    run_case(k2, bs=2, C=4, H=32, W=32, output_size=8, n_prev=2, hw_tile=256)

    print("KERNEL_OK")
</pallas_src>

<mosaic_0001>
module attributes {stable_mosaic.version = 11 : i64} {
  func.func @coverage_attention_kernel(%arg0: i32, %arg1: i32, %arg2: memref<1x4x256xf32, #tpu.memory_space<vmem>>, %arg3: memref<1x9x256xf32, #tpu.memory_space<vmem>>, %arg4: memref<1x1x256xf32, #tpu.memory_space<vmem>>, %arg5: memref<512x4xf32, #tpu.memory_space<vmem>>, %arg6: memref<512x9xf32, #tpu.memory_space<vmem>>, %arg7: memref<512x1xf32, #tpu.memory_space<vmem>>, %arg8: memref<512x256xf32, #tpu.memory_space<vmem>>, %arg9: memref<1x512xf32, #tpu.memory_space<vmem>>, %arg10: memref<1x1xf32, #tpu.memory_space<vmem>>, %arg11: memref<1x1x128xf32, #tpu.memory_space<vmem>>, %arg12: memref<1x1x256xf32, #tpu.memory_space<vmem>>) attributes {dimension_semantics = [#tpu.dimension_semantics<parallel>, #tpu.dimension_semantics<arbitrary>], iteration_bounds = array<i64: 2, 1>, scalar_prefetch = 0 : i64, scratch_operands = 0 : i64, tpu.core_type = #tpu.core_type<tc>, window_params = [{transform_indices = @transform_0, window_bounds = array<i64: 1, 4, 256>}, {transform_indices = @transform_1, window_bounds = array<i64: 1, 9, 256>}, {transform_indices = @transform_2, window_bounds = array<i64: 1, 1, 256>}, {pipeline_mode = #tpu.pipeline_mode<synchronous>, transform_indices = @transform_3, window_bounds = array<i64: 512, 4>}, {pipeline_mode = #tpu.pipeline_mode<synchronous>, transform_indices = @transform_4, window_bounds = array<i64: 512, 9>}, {pipeline_mode = #tpu.pipeline_mode<synchronous>, transform_indices = @transform_5, window_bounds = array<i64: 512, 1>}, {pipeline_mode = #tpu.pipeline_mode<synchronous>, transform_indices = @transform_6, window_bounds = array<i64: 512, 256>}, {pipeline_mode = #tpu.pipeline_mode<synchronous>, transform_indices = @transform_7, window_bounds = array<i64: 1, 512>}, {pipeline_mode = #tpu.pipeline_mode<synchronous>, transform_indices = @transform_8, window_bounds = array<i64: 1, 1>}, {transform_indices = @transform_9, window_bounds = array<i64: 1, 1, 128>}, {transform_indices = @transform_10, window_bounds = array<i64: 1, 1, 256>}]} {
    %c0_i32 = arith.constant 0 : i32
    %0 = arith.cmpi eq, %arg1, %c0_i32 : i32
    %1 = arith.extui %0 : i1 to i32
    %c0_i32_0 = arith.constant 0 : i32
    %2 = arith.cmpi ne, %1, %c0_i32_0 : i32
    scf.if %2 {
      %cst_35 = arith.constant 0.000000e+00 : f32
      %44 = vector.broadcast %cst_35 : f32 to vector<1x128xf32>
      %c0_36 = arith.constant 0 : index
      %c0_37 = arith.constant 0 : index
      %c0_38 = arith.constant 0 : index
      %45 = vector.load %arg11[%c0_36, %c0_37, %c0_38] : memref<1x1x128xf32, #tpu.memory_space<vmem>>, vector<1x1x128xf32>
      %46 = vector.shape_cast %45 : vector<1x1x128xf32> to vector<1x128xf32>
      %47 = vector.shape_cast %44 : vector<1x128xf32> to vector<1x1x128xf32>
      tpu.vector_store %arg11[%c0_36, %c0_37, %c0_38], %47 {strides = array<i32>} : memref<1x1x128xf32, #tpu.memory_space<vmem>>, vector<1x1x128xf32>,
    } else {
    }
    %c0 = arith.constant 0 : index
    %c0_1 = arith.constant 0 : index
    %c0_2 = arith.constant 0 : index
    %3 = vector.load %arg2[%c0, %c0_1, %c0_2] : memref<1x4x256xf32, #tpu.memory_space<vmem>>, vector<1x4x256xf32>
    %4 = vector.shape_cast %3 : vector<1x4x256xf32> to vector<4x256xf32>
    %c0_3 = arith.constant 0 : index
    %c0_4 = arith.constant 0 : index
    %c0_5 = arith.constant 0 : index
    %5 = vector.load %arg3[%c0_3, %c0_4, %c0_5] : memref<1x9x256xf32, #tpu.memory_space<vmem>>, vector<1x9x256xf32>
    %6 = vector.shape_cast %5 : vector<1x9x256xf32> to vector<9x256xf32>
    %c0_6 = arith.constant 0 : index
    %c0_7 = arith.constant 0 : index
    %7 = vector.load %arg5[%c0_6, %c0_7] : memref<512x4xf32, #tpu.memory_space<vmem>>, vector<512x4xf32>
    %cst = arith.constant dense<0.000000e+00> : vector<512x256xf32>
    %8 = tpu.matmul %7, %4, %cst {dimension_numbers = #tpu.dot_dimension_numbers<[1], [0], [0], [1], [0, 0, 1, 1], [], []>} : vector<512x4xf32>, vector<4x256xf32>, vector<512x256xf32> -> vector<512x256xf32>
    %c0_8 = arith.constant 0 : index
    %c0_9 = arith.constant 0 : index
    %9 = vector.load %arg6[%c0_8, %c0_9] : memref<512x9xf32, #tpu.memory_space<vmem>>, vector<512x9xf32>
    %cst_10 = arith.constant dense<0.000000e+00> : vector<512x256xf32>
    %10 = tpu.matmul %9, %6, %cst_10 {dimension_numbers = #tpu.dot_dimension_numbers<[1], [0], [0], [1], [0, 0, 1, 1], [], []>} : vector<512x9xf32>, vector<9x256xf32>, vector<512x256xf32> -> vector<512x256xf32>
    %11 = arith.addf %8, %10 : vector<512x256xf32>
    %c0_11 = arith.constant 0 : index
    %c0_12 = arith.constant 0 : index
    %12 = vector.load %arg7[%c0_11, %c0_12] : memref<512x1xf32, #tpu.memory_space<vmem>>, vector<512x1xf32>
    %13 = vector.broadcast %12 : vector<512x1xf32> to vector<512x256xf32>
    %14 = arith.addf %11, %13 : vector<512x256xf32>
    %c0_13 = arith.constant 0 : index
    %c0_14 = arith.constant 0 : index
    %15 = vector.load %arg8[%c0_13, %c0_14] : memref<512x256xf32, #tpu.memory_space<vmem>>, vector<512x256xf32>
    %c0_15 = arith.constant 0 : index
    %c0_16 = arith.constant 0 : index
    %c0_17 = arith.constant 0 : index
    %16 = vector.load %arg4[%c0_15, %c0_16, %c0_17] : memref<1x1x256xf32, #tpu.memory_space<vmem>>, vector<1x1x256xf32>
    %17 = vector.shape_cast %16 : vector<1x1x256xf32> to vector<1x256xf32>
    %cst_18 = arith.constant dense<0.000000e+00> : vector<512x1xf32>
    %18 = tpu.matmul %15, %17, %cst_18 {dimension_numbers = #tpu.dot_dimension_numbers<[1], [1], [0], [0], [0, 0, 1, 0], [], []>} : vector<512x256xf32>, vector<1x256xf32>, vector<512x1xf32> -> vector<512x1xf32>
    %19 = vector.broadcast %18 : vector<512x1xf32> to vector<512x256xf32>
    %20 = arith.addf %14, %19 : vector<512x256xf32>
    %21 = math.tanh %20 : vector<512x256xf32>
    %c0_19 = arith.constant 0 : index
    %c0_20 = arith.constant 0 : index
    %22 = vector.load %arg9[%c0_19, %c0_20] : memref<1x512xf32, #tpu.memory_space<vmem>>, vector<1x512xf32>
    %cst_21 = arith.constant dense<0.000000e+00> : vector<1x256xf32>
    %23 = tpu.matmul %22, %21, %cst_21 {dimension_numbers = #tpu.dot_dimension_numbers<[1], [0], [0], [1], [0, 0, 1, 1], [], []>} : vector<1x512xf32>, vector<512x256xf32>, vector<1x256xf32> -> vector<1x256xf32>
    %c0_22 = arith.constant 0 : index
    %c0_23 = arith.constant 0 : index
    %24 = vector.load %arg10[%c0_22, %c0_23] : memref<1x1xf32, #tpu.memory_space<vmem>>, vector<1x1xf32>
    %25 = vector.broadcast %24 : vector<1x1xf32> to vector<1x256xf32>
    %26 = arith.addf %23, %25 : vector<1x256xf32>
    %27 = math.exp %26 : vector<1x256xf32>
    %c256_i32 = arith.constant 256 : i32
    %28 = arith.muli %arg1, %c256_i32 : i32
    %29 = tpu.assume_multiple %28, 256 : i32
    %c0_24 = arith.constant 0 : index
    %c0_25 = arith.constant 0 : index
    %30 = arith.index_cast %29 : i32 to index
    %31 = vector.load %arg12[%c0_24, %c0_25, %30] : memref<1x1x256xf32, #tpu.memory_space<vmem>>, vector<1x1x256xf32>
    %32 = vector.shape_cast %31 : vector<1x1x256xf32> to vector<1x256xf32>
    %33 = vector.shape_cast %27 : vector<1x256xf32> to vector<1x1x256xf32>
    tpu.vector_store %arg12[%c0_24, %c0_25, %30], %33 {strides = array<i32>} : memref<1x1x256xf32, #tpu.memory_space<vmem>>, vector<1x1x256xf32>,
    %cst_26 = arith.constant dense<0.000000e+00> : vector<1x4xf32>
    %34 = tpu.matmul %27, %4, %cst_26 {dimension_numbers = #tpu.dot_dimension_numbers<[1], [1], [0], [0], [0, 0, 1, 0], [], []>} : vector<1x256xf32>, vector<4x256xf32>, vector<1x4xf32> -> vector<1x4xf32>
    %c0_27 = arith.constant 0 : index
    %c0_28 = arith.constant 0 : index
    %c0_29 = arith.constant 0 : index
    %35 = vector.load %arg11[%c0_27, %c0_28, %c0_29] : memref<1x1x128xf32, #tpu.memory_space<vmem>>, vector<1x1x4xf32>
    %36 = vector.shape_cast %35 : vector<1x1x4xf32> to vector<1x4xf32>
    %37 = arith.addf %36, %34 : vector<1x4xf32>
    %c0_30 = arith.constant 0 : index
    %c0_31 = arith.constant 0 : index
    %c0_32 = arith.constant 0 : index
    %38 = vector.load %arg11[%c0_30, %c0_31, %c0_32] : memref<1x1x128xf32, #tpu.memory_space<vmem>>, vector<1x1x4xf32>
    %39 = vector.shape_cast %38 : vector<1x1x4xf32> to vector<1x4xf32>
    %40 = vector.shape_cast %37 : vector<1x4xf32> to vector<1x1x4xf32>
    tpu.vector_store %arg11[%c0_30, %c0_31, %c0_32], %40 {strides = array<i32>} : memref<1x1x128xf32, #tpu.memory_space<vmem>>, vector<1x1x4xf32>,
    %c0_i32_33 = arith.constant 0 : i32
    %41 = arith.cmpi eq, %arg1, %c0_i32_33 : i32
    %42 = arith.extui %41 : i1 to i32
    %c0_i32_34 = arith.constant 0 : i32
    %43 = arith.cmpi ne, %42, %c0_i32_34 : i32
    scf.if %43 {
      %c0_35 = arith.constant 0 : index
      %c0_36 = arith.constant 0 : index
      %c0_37 = arith.constant 0 : index
      %44 = vector.load %arg12[%c0_35, %c0_36, %c0_37] : memref<1x1x256xf32, #tpu.memory_space<vmem>>, vector<1x1x256xf32>
      %45 = vector.shape_cast %44 : vector<1x1x256xf32> to vector<1x256xf32>
      %cst_38 = arith.constant dense<0.000000e+00> : vector<1xf32>
      %46 = vector.multi_reduction <add>, %45, %cst_38 [1] : vector<1x256xf32> to vector<1xf32>
      %47 = vector.shape_cast %46 : vector<1xf32> to vector<1x1xf32>
      %cst_39 = arith.constant 9.99999993E-9 : f32
      %48 = vector.broadcast %cst_39 : f32 to vector<1x1xf32>
      %49 = arith.addf %47, %48 : vector<1x1xf32>
      %50 = tpu.reciprocal %49 : vector<1x1xf32> -> vector<1x1xf32>
      %c0_40 = arith.constant 0 : index
      %c0_41 = arith.constant 0 : index
      %c0_42 = arith.constant 0 : index
      %51 = vector.load %arg12[%c0_40, %c0_41, %c0_42] : memref<1x1x256xf32, #tpu.memory_space<vmem>>, vector<1x1x256xf32>
      %52 = vector.shape_cast %51 : vector<1x1x256xf32> to vector<1x256xf32>
      %53 = vector.broadcast %50 : vector<1x1xf32> to vector<1x256xf32>
      %54 = arith.mulf %52, %53 : vector<1x256xf32>
      %c0_43 = arith.constant 0 : index
      %c0_44 = arith.constant 0 : index
      %c0_45 = arith.constant 0 : index
      %55 = vector.load %arg12[%c0_43, %c0_44, %c0_45] : memref<1x1x256xf32, #tpu.memory_space<vmem>>, vector<1x1x256xf32>
      %56 = vector.shape_cast %55 : vector<1x1x256xf32> to vector<1x256xf32>
      %57 = vector.shape_cast %54 : vector<1x256xf32> to vector<1x1x256xf32>
      tpu.vector_store %arg12[%c0_43, %c0_44, %c0_45], %57 {strides = array<i32>} : memref<1x1x256xf32, #tpu.memory_space<vmem>>, vector<1x1x256xf32>,
      %c0_46 = arith.constant 0 : index
      %c0_47 = arith.constant 0 : index
      %c0_48 = arith.constant 0 : index
      %58 = vector.load %arg11[%c0_46, %c0_47, %c0_48] : memref<1x1x128xf32, #tpu.memory_space<vmem>>, vector<1x1x128xf32>
      %59 = vector.shape_cast %58 : vector<1x1x128xf32> to vector<1x128xf32>
      %60 = vector.broadcast %50 : vector<1x1xf32> to vector<1x128xf32>
      %61 = arith.mulf %59, %60 : vector<1x128xf32>
      %c0_49 = arith.constant 0 : index
      %c0_50 = arith.constant 0 : index
      %c0_51 = arith.constant 0 : index
      %62 = vector.load %arg11[%c0_49, %c0_50, %c0_51] : memref<1x1x128xf32, #tpu.memory_space<vmem>>, vector<1x1x128xf32>
      %63 = vector.shape_cast %62 : vector<1x1x128xf32> to vector<1x128xf32>
      %64 = vector.shape_cast %61 : vector<1x128xf32> to vector<1x1x128xf32>
      tpu.vector_store %arg11[%c0_49, %c0_50, %c0_51], %64 {strides = array<i32>} : memref<1x1x128xf32, #tpu.memory_space<vmem>>, vector<1x1x128xf32>,
    } else {
    }
    return
  }
  func.func @transform_0(%arg0: i32, %arg1: i32) -> (i32, i32, i32) {
    %c0_i32 = arith.constant 0 : i32
    %c0_i32_0 = arith.constant 0 : i32
    return %arg0, %c0_i32, %arg1 : i32, i32, i32
  }
  func.func @transform_1(%arg0: i32, %arg1: i32) -> (i32, i32, i32) {
    %c0_i32 = arith.constant 0 : i32
    %c0_i32_0 = arith.constant 0 : i32
    return %arg0, %c0_i32, %arg1 : i32, i32, i32
  }
  func.func @transform_2(%arg0: i32, %arg1: i32) -> (i32, i32, i32) {
    %c0_i32 = arith.constant 0 : i32
    %c0_i32_0 = arith.constant 0 : i32
    %c0_i32_1 = arith.constant 0 : i32
    return %arg0, %c0_i32, %c0_i32_0 : i32, i32, i32
  }
  func.func @transform_3(%arg0: i32, %arg1: i32) -> (i32, i32) {
    %c0_i32 = arith.constant 0 : i32
    %c0_i32_0 = arith.constant 0 : i32
    %c0_i32_1 = arith.constant 0 : i32
    return %c0_i32, %c0_i32_0 : i32, i32
  }
  func.func @transform_4(%arg0: i32, %arg1: i32) -> (i32, i32) {
    %c0_i32 = arith.constant 0 : i32
    %c0_i32_0 = arith.constant 0 : i32
    %c0_i32_1 = arith.constant 0 : i32
    return %c0_i32, %c0_i32_0 : i32, i32
  }
  func.func @transform_5(%arg0: i32, %arg1: i32) -> (i32, i32) {
    %c0_i32 = arith.constant 0 : i32
    %c0_i32_0 = arith.constant 0 : i32
    %c0_i32_1 = arith.constant 0 : i32
    return %c0_i32, %c0_i32_0 : i32, i32
  }
  func.func @transform_6(%arg0: i32, %arg1: i32) -> (i32, i32) {
    %c0_i32 = arith.constant 0 : i32
    %c0_i32_0 = arith.constant 0 : i32
    %c0_i32_1 = arith.constant 0 : i32
    return %c0_i32, %c0_i32_0 : i32, i32
  }
  func.func @transform_7(%arg0: i32, %arg1: i32) -> (i32, i32) {
    %c0_i32 = arith.constant 0 : i32
    %c0_i32_0 = arith.constant 0 : i32
    %c0_i32_1 = arith.constant 0 : i32
    return %c0_i32, %c0_i32_0 : i32, i32
  }
  func.func @transform_8(%arg0: i32, %arg1: i32) -> (i32, i32) {
    %c0_i32 = arith.constant 0 : i32
    %c0_i32_0 = arith.constant 0 : i32
    %c0_i32_1 = arith.constant 0 : i32
    return %c0_i32, %c0_i32_0 : i32, i32
  }
  func.func @transform_9(%arg0: i32, %arg1: i32) -> (i32, i32, i32) {
    %c0_i32 = arith.constant 0 : i32
    %c0_i32_0 = arith.constant 0 : i32
    %c0_i32_1 = arith.constant 0 : i32
    return %arg0, %c0_i32, %c0_i32_0 : i32, i32, i32
  }
  func.func @transform_10(%arg0: i32, %arg1: i32) -> (i32, i32, i32) {
    %c0_i32 = arith.constant 0 : i32
    %c0_i32_0 = arith.constant 0 : i32
    %c0_i32_1 = arith.constant 0 : i32
    return %arg0, %c0_i32, %c0_i32_0 : i32, i32, i32
  }
}

</mosaic_0001>

<llo_original>
// kernel: tpu_custom_call.1
$region0: #{tpu_custom_call.1}
  #allocation0 [shape = 'u32[]', space=smem, size = 0x4, offset = 0x4, fixed_abs, tag = 'smem constant byte address 0x4 - core index']
  #allocation1 [shape = 'u32[72,128]{1,0:T(1,128)}', space=vmem, size = 0x9000, scoped, tag = 'internal scratch']
  #allocation2 [shape = 'f32[1,1]{1,0:T(1,128)S(1)}', space=vmem, size = 0x200, scoped, tag = 'scoped memory for tpu_custom_call.1']
  %s0 = inlined_call_operand.vmem [shape: f32[2,4,256], index: 0, kind: input, shape index: {}]
  %s1 = inlined_call_operand.vmem [shape: f32[2,9,256], index: 1, kind: input, shape index: {}]
  %s2 = inlined_call_operand.vmem [shape: f32[2,1,256], index: 2, kind: input, shape index: {}]
  %s3 = inlined_call_operand.vmem [shape: f32[512,4], index: 3, kind: input, shape index: {}]
  %s4 = inlined_call_operand.vmem [shape: f32[512,9], index: 4, kind: input, shape index: {}]
  %s5 = inlined_call_operand.vmem [shape: f32[512,1], index: 5, kind: input, shape index: {}]
  %s6 = inlined_call_operand.vmem [shape: f32[512,256], index: 6, kind: input, shape index: {}]
  %s7 = inlined_call_operand.vmem [shape: f32[1,512], index: 7, kind: input, shape index: {}]
  %s8 = inlined_call_operand.<no memory space> [shape: f32[1,1], index: 8, kind: input, shape index: {}]
  %s9 = inlined_call_operand.hbm [shape: f32[2,1,128], index: 9, kind: output, shape index: {0}]
  %s10 = inlined_call_operand.hbm [shape: f32[2,1,256], index: 10, kind: output, shape index: {1}]
  %11 = xla_tuple %s9, %s10
  %s12 = sld [smem:[#allocation0]]
  $region85: #{tpu_custom_call.1} parent=0
    _
  %s14 = ssub.s32 1, %s12
  %s15 = scalar_select 0, %s14, %s12
  %v16 = vstv %s8
  %17 = vst [vmem:[#allocation2] sm:$0x1] %v16
  $region1: #{tpu_custom_call.1} parent=0
    #allocation3 [shape = 'u8[1024]{0}', space=vmem, size = 0x400, scoped, tag = 'output window, operand 0']
    #allocation4 [shape = 's32[2]{0}', space=sflag, size = 0x8, scoped, tag = 'scoped memory for tpu_custom_call.1']
    #allocation5 [shape = 'u8[2048]{0}', space=vmem, size = 0x800, scoped, tag = 'output window, operand 1']
    #allocation6 [shape = 's32[2]{0}', space=sflag, size = 0x8, scoped, tag = 'scoped memory for tpu_custom_call.1']
    %18 = vsyncpa [#allocation4], 0
    %s19 = scalar_lea.sflag [#allocation4], 1
    %20 = vsyncpa %s19, 0
    %21 = vsyncpa [#allocation6], 0
    %s22 = scalar_lea.sflag [#allocation6], 1
    %23 = vsyncpa %s22, 0
    loop: start=0, step=1, limit=4
    $region2: #{tpu_custom_call.1} parent=1 // loop_pre_header
      _
    $region3: #{tpu_custom_call.1} parent=1 // loop_header
      %s25 = sphi 0, %s29
      %p26 = scmp.ge.s32.totalorder %s25, 4
      %s32 = sphi 0, %s44
      %s33 = sphi 0, %s40
      %s34 = sphi 0, %s32
      %s35 = sphi 0, %s33
      %s36 = sphi 0, %s34
      %s37 = sphi 0, %s35
      %s49 = sphi 0, %s51
      %s52 = sphi 0, %s49
      %s53 = sphi 0, %s52
      %s69 = sphi 0, %s53
      %s77 = sphi 0, %s79
      %s80 = sphi 0, %s77
      %s81 = sphi 0, %s80
      %s97 = sphi 0, %s81
      %s103 = sphi 0, %s105
      %s106 = sphi 0, %s103
      %s107 = sphi 0, %s106
      %s123 = sphi 0, %s107
      %s127 = sphi 0, %s127
      %s129 = sphi 0, %s127
      %s130 = sphi 0, %s129
      %s144 = sphi 0, %s130
      %s148 = sphi 0, %s148
      %s150 = sphi 0, %s148
      %s151 = sphi 0, %s150
      %s165 = sphi 0, %s151
      %s169 = sphi 0, %s169
      %s171 = sphi 0, %s169
      %s172 = sphi 0, %s171
      %s186 = sphi 0, %s172
      %s190 = sphi 0, %s190
      %s192 = sphi 0, %s190
      %s193 = sphi 0, %s192
      %s207 = sphi 0, %s193
      %s211 = sphi 0, %s211
      %s213 = sphi 0, %s211
      %s214 = sphi 0, %s213
      %s228 = sphi 0, %s214
      %s232 = sphi 0, %s232
      %s234 = sphi 0, %s232
      %s235 = sphi 0, %s234
      %s249 = sphi 0, %s235
      %s255 = sphi 0, %s257
      %s258 = sphi 0, %s255
      %s259 = sphi 0, %s258
      %s275 = sphi 0, %s259
      %s281 = sphi 0, %s283
      %s284 = sphi 0, %s281
      %s285 = sphi 0, %s284
      %s301 = sphi 0, %s285
    $region4: #{tpu_custom_call.1} parent=1 // loop_header_branch
      %28 = sbr.rel (%p26) target = $region8
    $region5: #{tpu_custom_call.1} parent=1 // loop_body
      %s30 = ssub.s32 %s25, 1
      %s31 = ssub.s32 %s25, 2
      %s38 = sadd.s32 1, %s33
      %p39 = scmp.ge.s32.totalorder %s38, 1
      %s40 = scalar_select %p39, 0, %s38
      %s41 = sadd.s32 1, %s32
      %s42 = scalar_select %p39, %s41, %s32
      %p43 = scmp.ge.s32.totalorder %s42, 2
      %s44 = scalar_select %p43, 0, %s42
      %s45 = ssub.s32 %s32, %s44
      %s46 = ssub.s32 %s33, %s40
      %s47 = sor.u32 %s45, %s46
      %p48 = scmp.eq.s32.totalorder %s47, 0
      %s50 = sadd.s32 %s49, 1
      %s51 = scalar_select %p48, %s49, %s50
      %p54 = pneg %p48
      %p55 = scmp.eq.s32.totalorder %s25, 1
      %p56 = por %p54, %p55
      %p57 = scmp.ne.s32.totalorder %s49, %s52
      %p58 = scmp.eq.s32.totalorder %s25, 0
      %p59 = por %p57, %p58
      %p60 = scmp.ne.s32.totalorder %s49, %s52
      %p61 = scmp.eq.s32.totalorder %s30, 1
      %p62 = por %p60, %p61
      %p63 = scmp.ne.s32.totalorder %s52, %s53
      %p64 = scmp.eq.s32.totalorder %s30, 0
      %p65 = por %p63, %p64
      %p66 = scmp.ne.s32.totalorder %s52, %s53
      %p67 = scmp.eq.s32.totalorder %s31, 1
      %p68 = por %p66, %p67
      %p70 = scmp.ne.s32.totalorder %s53, %s69
      %p71 = scmp.eq.s32.totalorder %s31, 0
      %p72 = por %p70, %p71
      %s73 = ssub.s32 %s32, %s44
      %s74 = ssub.s32 %s33, %s40
      %s75 = sor.u32 %s73, %s74
      %p76 = scmp.eq.s32.totalorder %s75, 0
      %s78 = sadd.s32 %s77, 1
      %s79 = scalar_select %p76, %s77, %s78
      %p82 = pneg %p76
      %p83 = scmp.eq.s32.totalorder %s25, 1
      %p84 = por %p82, %p83
      %p85 = scmp.ne.s32.totalorder %s77, %s80
      %p86 = scmp.eq.s32.totalorder %s25, 0
      %p87 = por %p85, %p86
      %p88 = scmp.ne.s32.totalorder %s77, %s80
      %p89 = scmp.eq.s32.totalorder %s30, 1
      %p90 = por %p88, %p89
      %p91 = scmp.ne.s32.totalorder %s80, %s81
      %p92 = scmp.eq.s32.totalorder %s30, 0
      %p93 = por %p91, %p92
      %p94 = scmp.ne.s32.totalorder %s80, %s81
      %p95 = scmp.eq.s32.totalorder %s31, 1
      %p96 = por %p94, %p95
      %p98 = scmp.ne.s32.totalorder %s81, %s97
      %p99 = scmp.eq.s32.totalorder %s31, 0
      %p100 = por %p98, %p99
      %s101 = ssub.s32 %s32, %s44
      %p102 = scmp.eq.s32.totalorder %s101, 0
      %s104 = sadd.s32 %s103, 1
      %s105 = scalar_select %p102, %s103, %s104
      %p108 = pneg %p102
      %p109 = scmp.eq.s32.totalorder %s25, 1
      %p110 = por %p108, %p109
      %p111 = scmp.ne.s32.totalorder %s103, %s106
      %p112 = scmp.eq.s32.totalorder %s25, 0
      %p113 = por %p111, %p112
      %p114 = scmp.ne.s32.totalorder %s103, %s106
      %p115 = scmp.eq.s32.totalorder %s30, 1
      %p116 = por %p114, %p115
      %p117 = scmp.ne.s32.totalorder %s106, %s107
      %p118 = scmp.eq.s32.totalorder %s30, 0
      %p119 = por %p117, %p118
      %p120 = scmp.ne.s32.totalorder %s106, %s107
      %p121 = scmp.eq.s32.totalorder %s31, 1
      %p122 = por %p120, %p121
      %p124 = scmp.ne.s32.totalorder %s107, %s123
      %p125 = scmp.eq.s32.totalorder %s31, 0
      %p126 = por %p124, %p125
      %s128 = sadd.s32 %s127, 1
      %p131 = scmp.eq.s32.totalorder %s25, 1
      %p132 = scmp.ne.s32.totalorder %s127, %s129
      %p133 = scmp.eq.s32.totalorder %s25, 0
      %p134 = por %p132, %p133
      %p135 = scmp.ne.s32.totalorder %s127, %s129
      %p136 = scmp.eq.s32.totalorder %s30, 1
      %p137 = por %p135, %p136
      %p138 = scmp.ne.s32.totalorder %s129, %s130
      %p139 = scmp.eq.s32.totalorder %s30, 0
      %p140 = por %p138, %p139
      %p141 = scmp.ne.s32.totalorder %s129, %s130
      %p142 = scmp.eq.s32.totalorder %s31, 1
      %p143 = por %p141, %p142
      %p145 = scmp.ne.s32.totalorder %s130, %s144
      %p146 = scmp.eq.s32.totalorder %s31, 0
      %p147 = por %p145, %p146
      %s149 = sadd.s32 %s148, 1
      %p152 = scmp.eq.s32.totalorder %s25, 1
      %p153 = scmp.ne.s32.totalorder %s148, %s150
      %p154 = scmp.eq.s32.totalorder %s25, 0
      %p155 = por %p153, %p154
      %p156 = scmp.ne.s32.totalorder %s148, %s150
      %p157 = scmp.eq.s32.totalorder %s30, 1
      %p158 = por %p156, %p157
      %p159 = scmp.ne.s32.totalorder %s150, %s151
      %p160 = scmp.eq.s32.totalorder %s30, 0
      %p161 = por %p159, %p160
      %p162 = scmp.ne.s32.totalorder %s150, %s151
      %p163 = scmp.eq.s32.totalorder %s31, 1
      %p164 = por %p162, %p163
      %p166 = scmp.ne.s32.totalorder %s151, %s165
      %p167 = scmp.eq.s32.totalorder %s31, 0
      %p168 = por %p166, %p167
      %s170 = sadd.s32 %s169, 1
      %p173 = scmp.eq.s32.totalorder %s25, 1
      %p174 = scmp.ne.s32.totalorder %s169, %s171
      %p175 = scmp.eq.s32.totalorder %s25, 0
      %p176 = por %p174, %p175
      %p177 = scmp.ne.s32.totalorder %s169, %s171
      %p178 = scmp.eq.s32.totalorder %s30, 1
      %p179 = por %p177, %p178
      %p180 = scmp.ne.s32.totalorder %s171, %s172
      %p181 = scmp.eq.s32.totalorder %s30, 0
      %p182 = por %p180, %p181
      %p183 = scmp.ne.s32.totalorder %s171, %s172
      %p184 = scmp.eq.s32.totalorder %s31, 1
      %p185 = por %p183, %p184
      %p187 = scmp.ne.s32.totalorder %s172, %s186
      %p188 = scmp.eq.s32.totalorder %s31, 0
      %p189 = por %p187, %p188
      %s191 = sadd.s32 %s190, 1
      %p194 = scmp.eq.s32.totalorder %s25, 1
      %p195 = scmp.ne.s32.totalorder %s190, %s192
      %p196 = scmp.eq.s32.totalorder %s25, 0
      %p197 = por %p195, %p196
      %p198 = scmp.ne.s32.totalorder %s190, %s192
      %p199 = scmp.eq.s32.totalorder %s30, 1
      %p200 = por %p198, %p199
      %p201 = scmp.ne.s32.totalorder %s192, %s193
      %p202 = scmp.eq.s32.totalorder %s30, 0
      %p203 = por %p201, %p202
      %p204 = scmp.ne.s32.totalorder %s192, %s193
      %p205 = scmp.eq.s32.totalorder %s31, 1
      %p206 = por %p204, %p205
      %p208 = scmp.ne.s32.totalorder %s193, %s207
      %p209 = scmp.eq.s32.totalorder %s31, 0
      %p210 = por %p208, %p209
      %s212 = sadd.s32 %s211, 1
      %p215 = scmp.eq.s32.totalorder %s25, 1
      %p216 = scmp.ne.s32.totalorder %s211, %s213
      %p217 = scmp.eq.s32.totalorder %s25, 0
      %p218 = por %p216, %p217
      %p219 = scmp.ne.s32.totalorder %s211, %s213
      %p220 = scmp.eq.s32.totalorder %s30, 1
      %p221 = por %p219, %p220
      %p222 = scmp.ne.s32.totalorder %s213, %s214
      %p223 = scmp.eq.s32.totalorder %s30, 0
      %p224 = por %p222, %p223
      %p225 = scmp.ne.s32.totalorder %s213, %s214
      %p226 = scmp.eq.s32.totalorder %s31, 1
      %p227 = por %p225, %p226
      %p229 = scmp.ne.s32.totalorder %s214, %s228
      %p230 = scmp.eq.s32.totalorder %s31, 0
      %p231 = por %p229, %p230
      %s233 = sadd.s32 %s232, 1
      %p236 = scmp.eq.s32.totalorder %s25, 1
      %p237 = scmp.ne.s32.totalorder %s232, %s234
      %p238 = scmp.eq.s32.totalorder %s25, 0
      %p239 = por %p237, %p238
      %p240 = scmp.ne.s32.totalorder %s232, %s234
      %p241 = scmp.eq.s32.totalorder %s30, 1
      %p242 = por %p240, %p241
      %p243 = scmp.ne.s32.totalorder %s234, %s235
      %p244 = scmp.eq.s32.totalorder %s30, 0
      %p245 = por %p243, %p244
      %p246 = scmp.ne.s32.totalorder %s234, %s235
      %p247 = scmp.eq.s32.totalorder %s31, 1
      %p248 = por %p246, %p247
      %p250 = scmp.ne.s32.totalorder %s235, %s249
      %p251 = scmp.eq.s32.totalorder %s31, 0
      %p252 = por %p250, %p251
      %s253 = ssub.s32 %s32, %s44
      %p254 = scmp.eq.s32.totalorder %s253, 0
      %s256 = sadd.s32 %s255, 1
      %s257 = scalar_select %p254, %s255, %s256
      %p260 = pneg %p254
      %p261 = scmp.eq.s32.totalorder %s25, 1
      %p262 = por %p260, %p261
      %p263 = scmp.ne.s32.totalorder %s255, %s258
      %p264 = scmp.eq.s32.totalorder %s25, 0
      %p265 = por %p263, %p264
      %p266 = scmp.ne.s32.totalorder %s255, %s258
      %p267 = scmp.eq.s32.totalorder %s30, 1
      %p268 = por %p266, %p267
      %p269 = scmp.ne.s32.totalorder %s258, %s259
      %p270 = scmp.eq.s32.totalorder %s30, 0
      %p271 = por %p269, %p270
      %p272 = scmp.ne.s32.totalorder %s258, %s259
      %p273 = scmp.eq.s32.totalorder %s31, 1
      %p274 = por %p272, %p273
      %p276 = scmp.ne.s32.totalorder %s259, %s275
      %p277 = scmp.eq.s32.totalorder %s31, 0
      %p278 = por %p276, %p277
      %s279 = ssub.s32 %s32, %s44
      %p280 = scmp.eq.s32.totalorder %s279, 0
      %s282 = sadd.s32 %s281, 1
      %s283 = scalar_select %p280, %s281, %s282
      %p286 = pneg %p280
      %p287 = scmp.eq.s32.totalorder %s25, 1
      %p288 = por %p286, %p287
      %p289 = scmp.ne.s32.totalorder %s281, %s284
      %p290 = scmp.eq.s32.totalorder %s25, 0
      %p291 = por %p289, %p290
      %p292 = scmp.ne.s32.totalorder %s281, %s284
      %p293 = scmp.eq.s32.totalorder %s30, 1
      %p294 = por %p292, %p293
      %p295 = scmp.ne.s32.totalorder %s284, %s285
      %p296 = scmp.eq.s32.totalorder %s30, 0
      %p297 = por %p295, %p296
      %p298 = scmp.ne.s32.totalorder %s284, %s285
      %p299 = scmp.eq.s32.totalorder %s31, 1
      %p300 = por %p298, %p299
      %p302 = scmp.ne.s32.totalorder %s285, %s301
      %p303 = scmp.eq.s32.totalorder %s31, 0
      %p304 = por %p302, %p303
      %p305 = scmp.le.s32.totalorder 1, %s25
      %p306 = scmp.lt.s32.totalorder %s25, 3
      %p307 = pnand %p305, %p306
      %p308 = pneg %p307
      // Predicated region
      $region9: #{tpu_custom_call.1} parent=5 // pred_check
        _
      $region10: #{tpu_custom_call.1} parent=5 // pred_check_branch
        %310 = sbr.rel (%p307) target = $region12
      $region11: #{tpu_custom_call.1} parent=5 // pred_region
        %s311 = ssub.s32 %s25, 1
        // Predicated region
        $region13: #{tpu_custom_call.1} parent=11 // pred_check
          %p312 = pneg %p140
        $region14: #{tpu_custom_call.1} parent=11 // pred_check_branch
          %314 = sbr.rel (%p312) target = $region16
        $region15: #{tpu_custom_call.1} parent=11 // pred_region
          _
        $region16: #{tpu_custom_call.1} parent=11 // pred_fallthru
          _
        // Predicated region
        $region17: #{tpu_custom_call.1} parent=11 // pred_check
          %p315 = pneg %p161
        $region18: #{tpu_custom_call.1} parent=11 // pred_check_branch
          %317 = sbr.rel (%p315) target = $region20
        $region19: #{tpu_custom_call.1} parent=11 // pred_region
          _
        $region20: #{tpu_custom_call.1} parent=11 // pred_fallthru
          _
        // Predicated region
        $region21: #{tpu_custom_call.1} parent=11 // pred_check
          %p318 = pneg %p182
        $region22: #{tpu_custom_call.1} parent=11 // pred_check_branch
          %320 = sbr.rel (%p318) target = $region24
        $region23: #{tpu_custom_call.1} parent=11 // pred_region
          _
        $region24: #{tpu_custom_call.1} parent=11 // pred_fallthru
          _
        // Predicated region
        $region25: #{tpu_custom_call.1} parent=11 // pred_check
          %p321 = pneg %p203
        $region26: #{tpu_custom_call.1} parent=11 // pred_check_branch
          %323 = sbr.rel (%p321) target = $region28
        $region27: #{tpu_custom_call.1} parent=11 // pred_region
          _
        $region28: #{tpu_custom_call.1} parent=11 // pred_fallthru
          _
        // Predicated region
        $region29: #{tpu_custom_call.1} parent=11 // pred_check
          %p324 = pneg %p224
        $region30: #{tpu_custom_call.1} parent=11 // pred_check_branch
          %326 = sbr.rel (%p324) target = $region32
        $region31: #{tpu_custom_call.1} parent=11 // pred_region
          _
        $region32: #{tpu_custom_call.1} parent=11 // pred_fallthru
          _
        // Predicated region
        $region33: #{tpu_custom_call.1} parent=11 // pred_check
          %p327 = pneg %p245
        $region34: #{tpu_custom_call.1} parent=11 // pred_check_branch
          %329 = sbr.rel (%p327) target = $region36
        $region35: #{tpu_custom_call.1} parent=11 // pred_region
          _
        $region36: #{tpu_custom_call.1} parent=11 // pred_fallthru
          _
      $region12: #{tpu_custom_call.1} parent=5 // pred_fallthru
        _
      %p330 = scmp.lt.s32.totalorder %s25, 2
      // Predicated region
      $region37: #{tpu_custom_call.1} parent=5 // pred_check
        %p331 = pneg %p330
      $region38: #{tpu_custom_call.1} parent=5 // pred_check_branch
        %333 = sbr.rel (%p331) target = $region40
      $region39: #{tpu_custom_call.1} parent=5 // pred_region
        // Predicated region
        $region41: #{tpu_custom_call.1} parent=39 // pred_check
          %p334 = pneg %p59
        $region42: #{tpu_custom_call.1} parent=39 // pred_check_branch
          %336 = sbr.rel (%p334) target = $region44
        $region43: #{tpu_custom_call.1} parent=39 // pred_region
          %s337 = smul.u32 2, %s33
          %p338 = scmp.lt.s32.totalorder %s32, 1
          %s339 = scalar_select %p338, %s32, 1
          %p340 = scmp.lt.s32.totalorder %s337, 1
          %s341 = scalar_select %p340, %s337, 1
          %s342 = smul.addr %s339, 2
          %s343 = sadd.s32 %s341, %s342
          %s344 = smul.addr %s343, 4
          %s345 = scalar_lea.vmem %s0, %s344
          %s346 = smul.u32 2, %s33
        $region44: #{tpu_custom_call.1} parent=39 // pred_fallthru
          _
        // Predicated region
        $region45: #{tpu_custom_call.1} parent=39 // pred_check
          %p347 = pneg %p87
        $region46: #{tpu_custom_call.1} parent=39 // pred_check_branch
          %349 = sbr.rel (%p347) target = $region48
        $region47: #{tpu_custom_call.1} parent=39 // pred_region
          %s350 = smul.u32 2, %s33
          %p351 = scmp.lt.s32.totalorder %s32, 1
          %s352 = scalar_select %p351, %s32, 1
          %p353 = scmp.lt.s32.totalorder %s350, 1
          %s354 = scalar_select %p353, %s350, 1
          %s355 = smul.addr %s352, 4
          %s356 = sadd.s32 %s354, %s355
          %s357 = smul.addr %s356, 8
          %s358 = scalar_lea.vmem %s1, %s357
          %s359 = smul.u32 2, %s33
        $region48: #{tpu_custom_call.1} parent=39 // pred_fallthru
          _
        // Predicated region
        $region49: #{tpu_custom_call.1} parent=39 // pred_check
          %p360 = pneg %p113
        $region50: #{tpu_custom_call.1} parent=39 // pred_check_branch
          %362 = sbr.rel (%p360) target = $region52
        $region51: #{tpu_custom_call.1} parent=39 // pred_region
          %p363 = scmp.lt.s32.totalorder %s32, 1
          %s364 = scalar_select %p363, %s32, 1
          %s365 = smul.addr %s364, 2
          %s366 = scalar_lea.vmem %s2, %s365
        $region52: #{tpu_custom_call.1} parent=39 // pred_fallthru
          _
      $region40: #{tpu_custom_call.1} parent=5 // pred_fallthru
        _
      %p367 = scmp.le.s32.totalorder 1, %s25
      %p368 = scmp.lt.s32.totalorder %s25, 3
      %p369 = pnand %p367, %p368
      %p370 = pneg %p369
      // Predicated region
      $region53: #{tpu_custom_call.1} parent=5 // pred_check
        _
      $region54: #{tpu_custom_call.1} parent=5 // pred_check_branch
        %372 = sbr.rel (%p369) target = $region56
      $region55: #{tpu_custom_call.1} parent=5 // pred_region
        %s373 = ssub.s32 %s25, 1
        %s374 = smul.u32 2, %s35
        %p375 = scmp.lt.s32.totalorder %s34, 1
        %s376 = scalar_select %p375, %s34, 1
        %p377 = scmp.lt.s32.totalorder %s374, 1
        %s378 = scalar_select %p377, %s374, 1
        %s379 = smul.addr %s376, 2
        %s380 = sadd.s32 %s378, %s379
        %s381 = smul.addr %s380, 4
        %s382 = scalar_lea.vmem %s0, %s381
        %p383 = pneg %p65
        %p384 = pneg %p62
        %s385 = smul.u32 2, %s35
        %p386 = scmp.lt.s32.totalorder %s34, 1
        %s387 = scalar_select %p386, %s34, 1
        %p388 = scmp.lt.s32.totalorder %s385, 1
        %s389 = scalar_select %p388, %s385, 1
        %s390 = smul.addr %s387, 4
        %s391 = sadd.s32 %s389, %s390
        %s392 = smul.addr %s391, 8
        %s393 = scalar_lea.vmem %s1, %s392
        %p394 = pneg %p93
        %p395 = pneg %p90
        %p396 = scmp.lt.s32.totalorder %s34, 1
        %s397 = scalar_select %p396, %s34, 1
        %s398 = smul.addr %s397, 2
        %s399 = scalar_lea.vmem %s2, %s398
        %p400 = pneg %p119
        %p401 = pneg %p116
        %p402 = pneg %p140
        %p403 = pneg %p137
        %p404 = pneg %p161
        %p405 = pneg %p158
        %p406 = pneg %p182
        %p407 = pneg %p179
        %p408 = pneg %p203
        %p409 = pneg %p200
        %p410 = pneg %p224
        %p411 = pneg %p221
        %p412 = pneg %p245
        %p413 = pneg %p242
        %p414 = pneg %p271
        %p415 = pneg %p268
        %s416 = sand.u32 %s258, 1
        %s417 = scalar_lea.sflag [#allocation4], %s416
        %s418 = sand.u32 %s258, 1
        %s419 = scalar_lea.vmem [#allocation3], %s418
        %p420 = pneg %p297
        %p421 = pneg %p294
        %s422 = sand.u32 %s284, 1
        %s423 = scalar_lea.sflag [#allocation6], %s422
        %s424 = sand.u32 %s284, 1
        %s425 = smul.addr %s424, 2
        %s426 = scalar_lea.vmem [#allocation5], %s425
        %s427 = smul.u32 2, %s35
        %p428 = scmp.lt.s32.totalorder %s34, 1
        %s429 = scalar_select %p428, %s34, 1
        %p430 = scmp.lt.s32.totalorder %s427, 1
        %s431 = scalar_select %p430, %s427, 1
        %s432 = smul.addr %s429, 2
        %s433 = sadd.s32 %s431, %s432
        %s434 = smul.addr %s433, 4
        %s435 = scalar_lea.vmem %s0, %s434
        %s436 = smul.u32 2, %s35
        %s437 = smul.u32 2, %s35
        %p438 = scmp.lt.s32.totalorder %s34, 1
        %s439 = scalar_select %p438, %s34, 1
        %p440 = scmp.lt.s32.totalorder %s437, 1
        %s441 = scalar_select %p440, %s437, 1
        %s442 = smul.addr %s439, 4
        %s443 = sadd.s32 %s441, %s442
        %s444 = smul.addr %s443, 8
        %s445 = scalar_lea.vmem %s1, %s444
        %s446 = smul.u32 2, %s35
        %p447 = scmp.lt.s32.totalorder %s34, 1
        %s448 = scalar_select %p447, %s34, 1
        %s449 = smul.addr %s448, 2
        %s450 = scalar_lea.vmem %s2, %s449
        %p451 = scmp.eq.s32.totalorder %s35, 0
        // Predicated region
        $region57: #{tpu_custom_call.1} parent=55 // pred_check
          %p452 = pneg %p451
        $region58: #{tpu_custom_call.1} parent=55 // pred_check_branch
          %454 = sbr.rel (%p452) target = $region60
        $region59: #{tpu_custom_call.1} parent=55 // pred_region
          %455 = vst [vmem:[%s419] sm:$0x1] 0.0
        $region60: #{tpu_custom_call.1} parent=55 // pred_fallthru
          _
        %v456 = vld [vmem:[%s435] sm:$0xff]
        %v457 = vld [vmem:[%s445] sm:$0xff]
        %v458 = vld [vmem:[%s445 + $0x8] sm:$0xff]
        %v459 = vld [vmem:[%s445 + $0x10] sm:$0x1]
        %v460 = vld [vmem:[%s445 + $0x18] sm:$0x1]
        %v461 = vld [vmem:[%s3] sm:$0xff]
        %v462 = vld [vmem:[%s3 + $0x8] sm:$0xff]
        %v463 = vld [vmem:[%s3 + $0x10] sm:$0xff]
        %v464 = vld [vmem:[%s3 + $0x18] sm:$0xff]
        %v465 = vld [vmem:[%s3 + $0x20] sm:$0xff]
        %v466 = vld [vmem:[%s3 + $0x28] sm:$0xff]
        %v467 = vld [vmem:[%s3 + $0x30] sm:$0xff]
        %v468 = vld [vmem:[%s3 + $0x38] sm:$0xff]
        %v469 = vld [vmem:[%s3 + $0x40] sm:$0xff]
        %v470 = vld [vmem:[%s3 + $0x48] sm:$0xff]
        %v471 = vld [vmem:[%s3 + $0x50] sm:$0xff]
        %v472 = vld [vmem:[%s3 + $0x58] sm:$0xff]
        %v473 = vld [vmem:[%s3 + $0x60] sm:$0xff]
        %v474 = vld [vmem:[%s3 + $0x68] sm:$0xff]
        %v475 = vld [vmem:[%s3 + $0x70] sm:$0xff]
        %v476 = vld [vmem:[%s3 + $0x78] sm:$0xff]
        %v477 = vld [vmem:[%s3 + $0x80] sm:$0xff]
        %v478 = vld [vmem:[%s3 + $0x88] sm:$0xff]
        %v479 = vld [vmem:[%s3 + $0x90] sm:$0xff]
        %v480 = vld [vmem:[%s3 + $0x98] sm:$0xff]
        %v481 = vld [vmem:[%s3 + $0xa0] sm:$0xff]
        %v482 = vld [vmem:[%s3 + $0xa8] sm:$0xff]
        %v483 = vld [vmem:[%s3 + $0xb0] sm:$0xff]
        %v484 = vld [vmem:[%s3 + $0xb8] sm:$0xff]
        %v485 = vld [vmem:[%s3 + $0xc0] sm:$0xff]
        %v486 = vld [vmem:[%s3 + $0xc8] sm:$0xff]
        %v487 = vld [vmem:[%s3 + $0xd0] sm:$0xff]
        %v488 = vld [vmem:[%s3 + $0xd8] sm:$0xff]
        %v489 = vld [vmem:[%s3 + $0xe0] sm:$0xff]
        %v490 = vld [vmem:[%s3 + $0xe8] sm:$0xff]
        %v491 = vld [vmem:[%s3 + $0xf0] sm:$0xff]
        %v492 = vld [vmem:[%s3 + $0xf8] sm:$0xff]
        %v493 = vld [vmem:[%s3 + $0x100] sm:$0xff]
        %v494 = vld [vmem:[%s3 + $0x108] sm:$0xff]
        %v495 = vld [vmem:[%s3 + $0x110] sm:$0xff]
        %v496 = vld [vmem:[%s3 + $0x118] sm:$0xff]
        %v497 = vld [vmem:[%s3 + $0x120] sm:$0xff]
        %v498 = vld [vmem:[%s3 + $0x128] sm:$0xff]
        %v499 = vld [vmem:[%s3 + $0x130] sm:$0xff]
        %v500 = vld [vmem:[%s3 + $0x138] sm:$0xff]
        %v501 = vld [vmem:[%s3 + $0x140] sm:$0xff]
        %v502 = vld [vmem:[%s3 + $0x148] sm:$0xff]
        %v503 = vld [vmem:[%s3 + $0x150] sm:$0xff]
        %v504 = vld [vmem:[%s3 + $0x158] sm:$0xff]
        %v505 = vld [vmem:[%s3 + $0x160] sm:$0xff]
        %v506 = vld [vmem:[%s3 + $0x168] sm:$0xff]
        %v507 = vld [vmem:[%s3 + $0x170] sm:$0xff]
        %v508 = vld [vmem:[%s3 + $0x178] sm:$0xff]
        %v509 = vld [vmem:[%s3 + $0x180] sm:$0xff]
        %v510 = vld [vmem:[%s3 + $0x188] sm:$0xff]
        %v511 = vld [vmem:[%s3 + $0x190] sm:$0xff]
        %v512 = vld [vmem:[%s3 + $0x198] sm:$0xff]
        %v513 = vld [vmem:[%s3 + $0x1a0] sm:$0xff]
        %v514 = vld [vmem:[%s3 + $0x1a8] sm:$0xff]
        %v515 = vld [vmem:[%s3 + $0x1b0] sm:$0xff]
        %v516 = vld [vmem:[%s3 + $0x1b8] sm:$0xff]
        %v517 = vld [vmem:[%s3 + $0x1c0] sm:$0xff]
        %v518 = vld [vmem:[%s3 + $0x1c8] sm:$0xff]
        %v519 = vld [vmem:[%s3 + $0x1d0] sm:$0xff]
        %v520 = vld [vmem:[%s3 + $0x1d8] sm:$0xff]
        %v521 = vld [vmem:[%s3 + $0x1e0] sm:$0xff]
        %v522 = vld [vmem:[%s3 + $0x1e8] sm:$0xff]
        %v523 = vld [vmem:[%s3 + $0x1f0] sm:$0xff]
        %v524 = vld [vmem:[%s3 + $0x1f8] sm:$0xff]
        %v525 = vld [vmem:[%s4] sm:$0xff]
        %v526 = vld [vmem:[%s4 + $0x8] sm:$0xff]
        %v527 = vld [vmem:[%s4 + $0x10] sm:$0xff]
        %v528 = vld [vmem:[%s4 + $0x18] sm:$0xff]
        %v529 = vld [vmem:[%s4 + $0x20] sm:$0xff]
        %v530 = vld [vmem:[%s4 + $0x28] sm:$0xff]
        %v531 = vld [vmem:[%s4 + $0x30] sm:$0xff]
        %v532 = vld [vmem:[%s4 + $0x38] sm:$0xff]
        %v533 = vld [vmem:[%s4 + $0x40] sm:$0xff]
        %v534 = vld [vmem:[%s4 + $0x48] sm:$0xff]
        %v535 = vld [vmem:[%s4 + $0x50] sm:$0xff]
        %v536 = vld [vmem:[%s4 + $0x58] sm:$0xff]
        %v537 = vld [vmem:[%s4 + $0x60] sm:$0xff]
        %v538 = vld [vmem:[%s4 + $0x68] sm:$0xff]
        %v539 = vld [vmem:[%s4 + $0x70] sm:$0xff]
        %v540 = vld [vmem:[%s4 + $0x78] sm:$0xff]
        %v541 = vld [vmem:[%s4 + $0x80] sm:$0xff]
        %v542 = vld [vmem:[%s4 + $0x88] sm:$0xff]
        %v543 = vld [vmem:[%s4 + $0x90] sm:$0xff]
        %v544 = vld [vmem:[%s4 + $0x98] sm:$0xff]
        %v545 = vld [vmem:[%s4 + $0xa0] sm:$0xff]
        %v546 = vld [vmem:[%s4 + $0xa8] sm:$0xff]
        %v547 = vld [vmem:[%s4 + $0xb0] sm:$0xff]
        %v548 = vld [vmem:[%s4 + $0xb8] sm:$0xff]
        %v549 = vld [vmem:[%s4 + $0xc0] sm:$0xff]
        %v550 = vld [vmem:[%s4 + $0xc8] sm:$0xff]
        %v551 = vld [vmem:[%s4 + $0xd0] sm:$0xff]
        %v552 = vld [vmem:[%s4 + $0xd8] sm:$0xff]
        %v553 = vld [vmem:[%s4 + $0xe0] sm:$0xff]
        %v554 = vld [vmem:[%s4 + $0xe8] sm:$0xff]
        %v555 = vld [vmem:[%s4 + $0xf0] sm:$0xff]
        %v556 = vld [vmem:[%s4 + $0xf8] sm:$0xff]
        %v557 = vld [vmem:[%s4 + $0x100] sm:$0xff]
        %v558 = vld [vmem:[%s4 + $0x108] sm:$0xff]
        %v559 = vld [vmem:[%s4 + $0x110] sm:$0xff]
        %v560 = vld [vmem:[%s4 + $0x118] sm:$0xff]
        %v561 = vld [vmem:[%s4 + $0x120] sm:$0xff]
        %v562 = vld [vmem:[%s4 + $0x128] sm:$0xff]
        %v563 = vld [vmem:[%s4 + $0x130] sm:$0xff]
        %v564 = vld [vmem:[%s4 + $0x138] sm:$0xff]
        %v565 = vld [vmem:[%s4 + $0x140] sm:$0xff]
        %v566 = vld [vmem:[%s4 + $0x148] sm:$0xff]
        %v567 = vld [vmem:[%s4 + $0x150] sm:$0xff]
        %v568 = vld [vmem:[%s4 + $0x158] sm:$0xff]
        %v569 = vld [vmem:[%s4 + $0x160] sm:$0xff]
        %v570 = vld [vmem:[%s4 + $0x168] sm:$0xff]
        %v571 = vld [vmem:[%s4 + $0x170] sm:$0xff]
        %v572 = vld [vmem:[%s4 + $0x178] sm:$0xff]
        %v573 = vld [vmem:[%s4 + $0x180] sm:$0xff]
        %v574 = vld [vmem:[%s4 + $0x188] sm:$0xff]
        %v575 = vld [vmem:[%s4 + $0x190] sm:$0xff]
        %v576 = vld [vmem:[%s4 + $0x198] sm:$0xff]
        %v577 = vld [vmem:[%s4 + $0x1a0] sm:$0xff]
        %v578 = vld [vmem:[%s4 + $0x1a8] sm:$0xff]
        %v579 = vld [vmem:[%s4 + $0x1b0] sm:$0xff]
        %v580 = vld [vmem:[%s4 + $0x1b8] sm:$0xff]
        %v581 = vld [vmem:[%s4 + $0x1c0] sm:$0xff]
        %v582 = vld [vmem:[%s4 + $0x1c8] sm:$0xff]
        %v583 = vld [vmem:[%s4 + $0x1d0] sm:$0xff]
        %v584 = vld [vmem:[%s4 + $0x1d8] sm:$0xff]
        %v585 = vld [vmem:[%s4 + $0x1e0] sm:$0xff]
        %v586 = vld [vmem:[%s4 + $0x1e8] sm:$0xff]
        %v587 = vld [vmem:[%s4 + $0x1f0] sm:$0xff]
        %v588 = vld [vmem:[%s4 + $0x1f8] sm:$0xff]
        %vm589 = vcmask 72704
        %v591 = vsel %vm589, %v525, 0
        %v594 = vsel %vm589, %v526, 0
        %v597 = vsel %vm589, %v527, 0
        %v600 = vsel %vm589, %v528, 0
        %v603 = vsel %vm589, %v529, 0
        %v606 = vsel %vm589, %v530, 0
        %v609 = vsel %vm589, %v531, 0
        %v612 = vsel %vm589, %v532, 0
        %v615 = vsel %vm589, %v533, 0
        %v618 = vsel %vm589, %v534, 0
        %v621 = vsel %vm589, %v535, 0
        %v624 = vsel %vm589, %v536, 0
        %v627 = vsel %vm589, %v537, 0
        %v630 = vsel %vm589, %v538, 0
        %v633 = vsel %vm589, %v539, 0
        %v636 = vsel %vm589, %v540, 0
        %v639 = vsel %vm589, %v541, 0
        %v642 = vsel %vm589, %v542, 0
        %v645 = vsel %vm589, %v543, 0
        %v648 = vsel %vm589, %v544, 0
        %v651 = vsel %vm589, %v545, 0
        %v654 = vsel %vm589, %v546, 0
        %v657 = vsel %vm589, %v547, 0
        %v660 = vsel %vm589, %v548, 0
        %v663 = vsel %vm589, %v549, 0
        %v666 = vsel %vm589, %v550, 0
        %v669 = vsel %vm589, %v551, 0
        %v672 = vsel %vm589, %v552, 0
        %v675 = vsel %vm589, %v553, 0
        %v678 = vsel %vm589, %v554, 0
        %v681 = vsel %vm589, %v555, 0
        %v684 = vsel %vm589, %v556, 0
        %v687 = vsel %vm589, %v557, 0
        %v690 = vsel %vm589, %v558, 0
        %v693 = vsel %vm589, %v559, 0
        %v696 = vsel %vm589, %v560, 0
        %v699 = vsel %vm589, %v561, 0
        %v702 = vsel %vm589, %v562, 0
        %v705 = vsel %vm589, %v563, 0
        %v708 = vsel %vm589, %v564, 0
        %v711 = vsel %vm589, %v565, 0
        %v714 = vsel %vm589, %v566, 0
        %v717 = vsel %vm589, %v567, 0
        %v720 = vsel %vm589, %v568, 0
        %v723 = vsel %vm589, %v569, 0
        %v726 = vsel %vm589, %v570, 0
        %v729 = vsel %vm589, %v571, 0
        %v732 = vsel %vm589, %v572, 0
        %v735 = vsel %vm589, %v573, 0
        %v738 = vsel %vm589, %v574, 0
        %v741 = vsel %vm589, %v575, 0
        %v744 = vsel %vm589, %v576, 0
        %v747 = vsel %vm589, %v577, 0
        %v750 = vsel %vm589, %v578, 0
        %v753 = vsel %vm589, %v579, 0
        %v756 = vsel %vm589, %v580, 0
        %v759 = vsel %vm589, %v581, 0
        %v762 = vsel %vm589, %v582, 0
        %v765 = vsel %vm589, %v583, 0
        %v768 = vsel %vm589, %v584, 0
        %v771 = vsel %vm589, %v585, 0
        %v774 = vsel %vm589, %v586, 0
        %v777 = vsel %vm589, %v587, 0
        %v780 = vsel %vm589, %v588, 0
        %vm782 = vcmask 1040384
        %v784 = vsel %vm782, %v459, 0
        %v787 = vsel %vm782, %v460, 0
        %789 = vmatpush.msra.mxu0 0.0
        %790 = vmatpush.msra.mxu0 0.0
        %791 = vmatpush.msra.mxu0 0.0
        %792 = vmatpush.msra.mxu0 0.0
        %793 = vmatpush.msra.mxu0 0.0
        %794 = vmatpush.msra.mxu0 0.0
        %795 = vmatpush.msra.mxu0 0.0
        %796 = vmatpush.msra.mxu0 0.0
        %797 = vmatpush.msra.mxu0 0.0
        %798 = vmatpush.msra.mxu0 0.0
        %799 = vmatpush.msra.mxu0 0.0
        %800 = vmatpush.msra.mxu0 0.0
        %801 = vmatpush.msra.mxu0 0.0
        %802 = vmatpush.msra.mxu0 0.0
        %803 = vmatpush.msra.mxu0 %v784
        %804 = vmatpush.msra.mxu0 %v457
        %805 = vmatmul.f32.gmra.mxu0 %v591
        %v806 = vpop.f32.mrf.mxu0
        %v807 = vadd.f32 0.0, %v806
        %808 = vmatmul.f32.gmra.mxu0 %v594
        %v809 = vpop.f32.mrf.mxu0
        %v810 = vadd.f32 0.0, %v809
        %811 = vmatmul.f32.gmra.mxu0 %v597
        %v812 = vpop.f32.mrf.mxu0
        %v813 = vadd.f32 0.0, %v812
        %814 = vmatmul.f32.gmra.mxu0 %v600
        %v815 = vpop.f32.mrf.mxu0
        %v816 = vadd.f32 0.0, %v815
        %817 = vmatmul.f32.gmra.mxu0 %v603
        %v818 = vpop.f32.mrf.mxu0
        %v819 = vadd.f32 0.0, %v818
        %820 = vmatmul.f32.gmra.mxu0 %v606
        %v821 = vpop.f32.mrf.mxu0
        %v822 = vadd.f32 0.0, %v821
        %823 = vmatmul.f32.gmra.mxu0 %v609
        %v824 = vpop.f32.mrf.mxu0
        %v825 = vadd.f32 0.0, %v824
        %826 = vmatmul.f32.gmra.mxu0 %v612
        %v827 = vpop.f32.mrf.mxu0
        %v828 = vadd.f32 0.0, %v827
        %829 = vmatmul.f32.gmra.mxu0 %v615
        %v830 = vpop.f32.mrf.mxu0
        %v831 = vadd.f32 0.0, %v830
        %832 = vmatmul.f32.gmra.mxu0 %v618
        %v833 = vpop.f32.mrf.mxu0
        %v834 = vadd.f32 0.0, %v833
        %835 = vmatmul.f32.gmra.mxu0 %v621
        %v836 = vpop.f32.mrf.mxu0
        %v837 = vadd.f32 0.0, %v836
        %838 = vmatmul.f32.gmra.mxu0 %v624
        %v839 = vpop.f32.mrf.mxu0
        %v840 = vadd.f32 0.0, %v839
        %841 = vmatmul.f32.gmra.mxu0 %v627
        %v842 = vpop.f32.mrf.mxu0
        %v843 = vadd.f32 0.0, %v842
        %844 = vmatmul.f32.gmra.mxu0 %v630
        %v845 = vpop.f32.mrf.mxu0
        %v846 = vadd.f32 0.0, %v845
        %847 = vmatmul.f32.gmra.mxu0 %v633
        %v848 = vpop.f32.mrf.mxu0
        %v849 = vadd.f32 0.0, %v848
        %850 = vmatmul.f32.gmra.mxu0 %v636
        %v851 = vpop.f32.mrf.mxu0
        %v852 = vadd.f32 0.0, %v851
        %853 = vmatmul.f32.gmra.mxu0 %v639
        %v854 = vpop.f32.mrf.mxu0
        %v855 = vadd.f32 0.0, %v854
        %856 = vmatmul.f32.gmra.mxu0 %v642
        %v857 = vpop.f32.mrf.mxu0
        %v858 = vadd.f32 0.0, %v857
        %859 = vmatmul.f32.gmra.mxu0 %v645
        %v860 = vpop.f32.mrf.mxu0
        %v861 = vadd.f32 0.0, %v860
        %862 = vmatmul.f32.gmra.mxu0 %v648
        %v863 = vpop.f32.mrf.mxu0
        %v864 = vadd.f32 0.0, %v863
        %865 = vmatmul.f32.gmra.mxu0 %v651
        %v866 = vpop.f32.mrf.mxu0
        %v867 = vadd.f32 0.0, %v866
        %868 = vmatmul.f32.gmra.mxu0 %v654
        %v869 = vpop.f32.mrf.mxu0
        %v870 = vadd.f32 0.0, %v869
        %871 = vmatmul.f32.gmra.mxu0 %v657
        %v872 = vpop.f32.mrf.mxu0
        %v873 = vadd.f32 0.0, %v872
        %874 = vmatmul.f32.gmra.mxu0 %v660
        %v875 = vpop.f32.mrf.mxu0
        %v876 = vadd.f32 0.0, %v875
        %877 = vmatmul.f32.gmra.mxu0 %v663
        %v878 = vpop.f32.mrf.mxu0
        %v879 = vadd.f32 0.0, %v878
        %880 = vmatmul.f32.gmra.mxu0 %v666
        %v881 = vpop.f32.mrf.mxu0
        %v882 = vadd.f32 0.0, %v881
        %883 = vmatmul.f32.gmra.mxu0 %v669
        %v884 = vpop.f32.mrf.mxu0
        %v885 = vadd.f32 0.0, %v884
        %886 = vmatmul.f32.gmra.mxu0 %v672
        %v887 = vpop.f32.mrf.mxu0
        %v888 = vadd.f32 0.0, %v887
        %889 = vmatmul.f32.gmra.mxu0 %v675
        %v890 = vpop.f32.mrf.mxu0
        %v891 = vadd.f32 0.0, %v890
        %892 = vmatmul.f32.gmra.mxu0 %v678
        %v893 = vpop.f32.mrf.mxu0
        %v894 = vadd.f32 0.0, %v893
        %895 = vmatmul.f32.gmra.mxu0 %v681
        %v896 = vpop.f32.mrf.mxu0
        %v897 = vadd.f32 0.0, %v896
        %898 = vmatmul.f32.gmra.mxu0 %v684
        %v899 = vpop.f32.mrf.mxu0
        %v900 = vadd.f32 0.0, %v899
        %901 = vmatmul.f32.gmra.mxu0 %v687
        %v902 = vpop.f32.mrf.mxu0
        %v903 = vadd.f32 0.0, %v902
        %904 = vmatmul.f32.gmra.mxu0 %v690
        %v905 = vpop.f32.mrf.mxu0
        %v906 = vadd.f32 0.0, %v905
        %907 = vmatmul.f32.gmra.mxu0 %v693
        %v908 = vpop.f32.mrf.mxu0
        %v909 = vadd.f32 0.0, %v908
        %910 = vmatmul.f32.gmra.mxu0 %v696
        %v911 = vpop.f32.mrf.mxu0
        %v912 = vadd.f32 0.0, %v911
        %913 = vmatmul.f32.gmra.mxu0 %v699
        %v914 = vpop.f32.mrf.mxu0
        %v915 = vadd.f32 0.0, %v914
        %916 = vmatmul.f32.gmra.mxu0 %v702
        %v917 = vpop.f32.mrf.mxu0
        %v918 = vadd.f32 0.0, %v917
        %919 = vmatmul.f32.gmra.mxu0 %v705
        %v920 = vpop.f32.mrf.mxu0
        %v921 = vadd.f32 0.0, %v920
        %922 = vmatmul.f32.gmra.mxu0 %v708
        %v923 = vpop.f32.mrf.mxu0
        %v924 = vadd.f32 0.0, %v923
        %925 = vmatmul.f32.gmra.mxu0 %v711
        %v926 = vpop.f32.mrf.mxu0
        %v927 = vadd.f32 0.0, %v926
        %928 = vmatmul.f32.gmra.mxu0 %v714
        %v929 = vpop.f32.mrf.mxu0
        %v930 = vadd.f32 0.0, %v929
        %931 = vmatmul.f32.gmra.mxu0 %v717
        %v932 = vpop.f32.mrf.mxu0
        %v933 = vadd.f32 0.0, %v932
        %934 = vmatmul.f32.gmra.mxu0 %v720
        %v935 = vpop.f32.mrf.mxu0
        %v936 = vadd.f32 0.0, %v935
        %937 = vmatmul.f32.gmra.mxu0 %v723
        %v938 = vpop.f32.mrf.mxu0
        %v939 = vadd.f32 0.0, %v938
        %940 = vmatmul.f32.gmra.mxu0 %v726
        %v941 = vpop.f32.mrf.mxu0
        %v942 = vadd.f32 0.0, %v941
        %943 = vmatmul.f32.gmra.mxu0 %v729
        %v944 = vpop.f32.mrf.mxu0
        %v945 = vadd.f32 0.0, %v944
        %946 = vmatmul.f32.gmra.mxu0 %v732
        %v947 = vpop.f32.mrf.mxu0
        %v948 = vadd.f32 0.0, %v947
        %949 = vmatmul.f32.gmra.mxu0 %v735
        %v950 = vpop.f32.mrf.mxu0
        %v951 = vadd.f32 0.0, %v950
        %952 = vmatmul.f32.gmra.mxu0 %v738
        %v953 = vpop.f32.mrf.mxu0
        %v954 = vadd.f32 0.0, %v953
        %955 = vmatmul.f32.gmra.mxu0 %v741
        %v956 = vpop.f32.mrf.mxu0
        %v957 = vadd.f32 0.0, %v956
        %958 = vmatmul.f32.gmra.mxu0 %v744
        %v959 = vpop.f32.mrf.mxu0
        %v960 = vadd.f32 0.0, %v959
        %961 = vmatmul.f32.gmra.mxu0 %v747
        %v962 = vpop.f32.mrf.mxu0
        %v963 = vadd.f32 0.0, %v962
        %964 = vmatmul.f32.gmra.mxu0 %v750
        %v965 = vpop.f32.mrf.mxu0
        %v966 = vadd.f32 0.0, %v965
        %967 = vmatmul.f32.gmra.mxu0 %v753
        %v968 = vpop.f32.mrf.mxu0
        %v969 = vadd.f32 0.0, %v968
        %970 = vmatmul.f32.gmra.mxu0 %v756
        %v971 = vpop.f32.mrf.mxu0
        %v972 = vadd.f32 0.0, %v971
        %973 = vmatmul.f32.gmra.mxu0 %v759
        %v974 = vpop.f32.mrf.mxu0
        %v975 = vadd.f32 0.0, %v974
        %976 = vmatmul.f32.gmra.mxu0 %v762
        %v977 = vpop.f32.mrf.mxu0
        %v978 = vadd.f32 0.0, %v977
        %979 = vmatmul.f32.gmra.mxu0 %v765
        %v980 = vpop.f32.mrf.mxu0
        %v981 = vadd.f32 0.0, %v980
        %982 = vmatmul.f32.gmra.mxu0 %v768
        %v983 = vpop.f32.mrf.mxu0
        %v984 = vadd.f32 0.0, %v983
        %985 = vmatmul.f32.gmra.mxu0 %v771
        %v986 = vpop.f32.mrf.mxu0
        %v987 = vadd.f32 0.0, %v986
        %988 = vmatmul.f32.gmra.mxu0 %v774
        %v989 = vpop.f32.mrf.mxu0
        %v990 = vadd.f32 0.0, %v989
        %991 = vmatmul.f32.gmra.mxu0 %v777
        %v992 = vpop.f32.mrf.mxu0
        %v993 = vadd.f32 0.0, %v992
        %994 = vmatmul.f32.gmra.mxu0 %v780
        %v995 = vpop.f32.mrf.mxu0
        %v996 = vadd.f32 0.0, %v995
        %997 = vdwg.mxu0
        %998 = vmatpush.msra.mxu0 0.0
        %999 = vmatpush.msra.mxu0 0.0
        %1000 = vmatpush.msra.mxu0 0.0
        %1001 = vmatpush.msra.mxu0 0.0
        %1002 = vmatpush.msra.mxu0 0.0
        %1003 = vmatpush.msra.mxu0 0.0
        %1004 = vmatpush.msra.mxu0 0.0
        %1005 = vmatpush.msra.mxu0 0.0
        %1006 = vmatpush.msra.mxu0 0.0
        %1007 = vmatpush.msra.mxu0 0.0
        %1008 = vmatpush.msra.mxu0 0.0
        %1009 = vmatpush.msra.mxu0 0.0
        %1010 = vmatpush.msra.mxu0 0.0
        %1011 = vmatpush.msra.mxu0 0.0
        %1012 = vmatpush.msra.mxu0 %v787
        %1013 = vmatpush.msra.mxu0 %v458
        %1014 = vmatmul.f32.gmra.mxu0 %v591
        %v1015 = vpop.f32.mrf.mxu0
        %v1016 = vadd.f32 0.0, %v1015
        %1017 = vmatmul.f32.gmra.mxu0 %v594
        %v1018 = vpop.f32.mrf.mxu0
        %v1019 = vadd.f32 0.0, %v1018
        %1020 = vmatmul.f32.gmra.mxu0 %v597
        %v1021 = vpop.f32.mrf.mxu0
        %v1022 = vadd.f32 0.0, %v1021
        %1023 = vmatmul.f32.gmra.mxu0 %v600
        %v1024 = vpop.f32.mrf.mxu0
        %v1025 = vadd.f32 0.0, %v1024
        %1026 = vmatmul.f32.gmra.mxu0 %v603
        %v1027 = vpop.f32.mrf.mxu0
        %v1028 = vadd.f32 0.0, %v1027
        %1029 = vmatmul.f32.gmra.mxu0 %v606
        %v1030 = vpop.f32.mrf.mxu0
        %v1031 = vadd.f32 0.0, %v1030
        %1032 = vmatmul.f32.gmra.mxu0 %v609
        %v1033 = vpop.f32.mrf.mxu0
        %v1034 = vadd.f32 0.0, %v1033
        %1035 = vmatmul.f32.gmra.mxu0 %v612
        %v1036 = vpop.f32.mrf.mxu0
        %v1037 = vadd.f32 0.0, %v1036
        %1038 = vmatmul.f32.gmra.mxu0 %v615
        %v1039 = vpop.f32.mrf.mxu0
        %v1040 = vadd.f32 0.0, %v1039
        %1041 = vmatmul.f32.gmra.mxu0 %v618
        %v1042 = vpop.f32.mrf.mxu0
        %v1043 = vadd.f32 0.0, %v1042
        %1044 = vmatmul.f32.gmra.mxu0 %v621
        %v1045 = vpop.f32.mrf.mxu0
        %v1046 = vadd.f32 0.0, %v1045
        %1047 = vmatmul.f32.gmra.mxu0 %v624
        %v1048 = vpop.f32.mrf.mxu0
        %v1049 = vadd.f32 0.0, %v1048
        %1050 = vmatmul.f32.gmra.mxu0 %v627
        %v1051 = vpop.f32.mrf.mxu0
        %v1052 = vadd.f32 0.0, %v1051
        %1053 = vmatmul.f32.gmra.mxu0 %v630
        %v1054 = vpop.f32.mrf.mxu0
        %v1055 = vadd.f32 0.0, %v1054
        %1056 = vmatmul.f32.gmra.mxu0 %v633
        %v1057 = vpop.f32.mrf.mxu0
        %v1058 = vadd.f32 0.0, %v1057
        %1059 = vmatmul.f32.gmra.mxu0 %v636
        %v1060 = vpop.f32.mrf.mxu0
        %v1061 = vadd.f32 0.0, %v1060
        %1062 = vmatmul.f32.gmra.mxu0 %v639
        %v1063 = vpop.f32.mrf.mxu0
        %v1064 = vadd.f32 0.0, %v1063
        %1065 = vmatmul.f32.gmra.mxu0 %v642
        %v1066 = vpop.f32.mrf.mxu0
        %v1067 = vadd.f32 0.0, %v1066
        %1068 = vmatmul.f32.gmra.mxu0 %v645
        %v1069 = vpop.f32.mrf.mxu0
        %v1070 = vadd.f32 0.0, %v1069
        %1071 = vmatmul.f32.gmra.mxu0 %v648
        %v1072 = vpop.f32.mrf.mxu0
        %v1073 = vadd.f32 0.0, %v1072
        %1074 = vmatmul.f32.gmra.mxu0 %v651
        %v1075 = vpop.f32.mrf.mxu0
        %v1076 = vadd.f32 0.0, %v1075
        %1077 = vmatmul.f32.gmra.mxu0 %v654
        %v1078 = vpop.f32.mrf.mxu0
        %v1079 = vadd.f32 0.0, %v1078
        %1080 = vmatmul.f32.gmra.mxu0 %v657
        %v1081 = vpop.f32.mrf.mxu0
        %v1082 = vadd.f32 0.0, %v1081
        %1083 = vmatmul.f32.gmra.mxu0 %v660
        %v1084 = vpop.f32.mrf.mxu0
        %v1085 = vadd.f32 0.0, %v1084
        %1086 = vmatmul.f32.gmra.mxu0 %v663
        %v1087 = vpop.f32.mrf.mxu0
        %v1088 = vadd.f32 0.0, %v1087
        %1089 = vmatmul.f32.gmra.mxu0 %v666
        %v1090 = vpop.f32.mrf.mxu0
        %v1091 = vadd.f32 0.0, %v1090
        %1092 = vmatmul.f32.gmra.mxu0 %v669
        %v1093 = vpop.f32.mrf.mxu0
        %v1094 = vadd.f32 0.0, %v1093
        %1095 = vmatmul.f32.gmra.mxu0 %v672
        %v1096 = vpop.f32.mrf.mxu0
        %v1097 = vadd.f32 0.0, %v1096
        %1098 = vmatmul.f32.gmra.mxu0 %v675
        %v1099 = vpop.f32.mrf.mxu0
        %v1100 = vadd.f32 0.0, %v1099
        %1101 = vmatmul.f32.gmra.mxu0 %v678
        %v1102 = vpop.f32.mrf.mxu0
        %v1103 = vadd.f32 0.0, %v1102
        %1104 = vmatmul.f32.gmra.mxu0 %v681
        %v1105 = vpop.f32.mrf.mxu0
        %v1106 = vadd.f32 0.0, %v1105
        %1107 = vmatmul.f32.gmra.mxu0 %v684
        %v1108 = vpop.f32.mrf.mxu0
        %v1109 = vadd.f32 0.0, %v1108
        %1110 = vmatmul.f32.gmra.mxu0 %v687
        %v1111 = vpop.f32.mrf.mxu0
        %v1112 = vadd.f32 0.0, %v1111
        %1113 = vmatmul.f32.gmra.mxu0 %v690
        %v1114 = vpop.f32.mrf.mxu0
        %v1115 = vadd.f32 0.0, %v1114
        %1116 = vmatmul.f32.gmra.mxu0 %v693
        %v1117 = vpop.f32.mrf.mxu0
        %v1118 = vadd.f32 0.0, %v1117
        %1119 = vmatmul.f32.gmra.mxu0 %v696
        %v1120 = vpop.f32.mrf.mxu0
        %v1121 = vadd.f32 0.0, %v1120
        %1122 = vmatmul.f32.gmra.mxu0 %v699
        %v1123 = vpop.f32.mrf.mxu0
        %v1124 = vadd.f32 0.0, %v1123
        %1125 = vmatmul.f32.gmra.mxu0 %v702
        %v1126 = vpop.f32.mrf.mxu0
        %v1127 = vadd.f32 0.0, %v1126
        %1128 = vmatmul.f32.gmra.mxu0 %v705
        %v1129 = vpop.f32.mrf.mxu0
        %v1130 = vadd.f32 0.0, %v1129
        %1131 = vmatmul.f32.gmra.mxu0 %v708
        %v1132 = vpop.f32.mrf.mxu0
        %v1133 = vadd.f32 0.0, %v1132
        %1134 = vmatmul.f32.gmra.mxu0 %v711
        %v1135 = vpop.f32.mrf.mxu0
        %v1136 = vadd.f32 0.0, %v1135
        %1137 = vmatmul.f32.gmra.mxu0 %v714
        %v1138 = vpop.f32.mrf.mxu0
        %v1139 = vadd.f32 0.0, %v1138
        %1140 = vmatmul.f32.gmra.mxu0 %v717
        %v1141 = vpop.f32.mrf.mxu0
        %v1142 = vadd.f32 0.0, %v1141
        %1143 = vmatmul.f32.gmra.mxu0 %v720
        %v1144 = vpop.f32.mrf.mxu0
        %v1145 = vadd.f32 0.0, %v1144
        %1146 = vmatmul.f32.gmra.mxu0 %v723
        %v1147 = vpop.f32.mrf.mxu0
        %v1148 = vadd.f32 0.0, %v1147
        %1149 = vmatmul.f32.gmra.mxu0 %v726
        %v1150 = vpop.f32.mrf.mxu0
        %v1151 = vadd.f32 0.0, %v1150
        %1152 = vmatmul.f32.gmra.mxu0 %v729
        %v1153 = vpop.f32.mrf.mxu0
        %v1154 = vadd.f32 0.0, %v1153
        %1155 = vmatmul.f32.gmra.mxu0 %v732
        %v1156 = vpop.f32.mrf.mxu0
        %v1157 = vadd.f32 0.0, %v1156
        %1158 = vmatmul.f32.gmra.mxu0 %v735
        %v1159 = vpop.f32.mrf.mxu0
        %v1160 = vadd.f32 0.0, %v1159
        %1161 = vmatmul.f32.gmra.mxu0 %v738
        %v1162 = vpop.f32.mrf.mxu0
        %v1163 = vadd.f32 0.0, %v1162
        %1164 = vmatmul.f32.gmra.mxu0 %v741
        %v1165 = vpop.f32.mrf.mxu0
        %v1166 = vadd.f32 0.0, %v1165
        %1167 = vmatmul.f32.gmra.mxu0 %v744
        %v1168 = vpop.f32.mrf.mxu0
        %v1169 = vadd.f32 0.0, %v1168
        %1170 = vmatmul.f32.gmra.mxu0 %v747
        %v1171 = vpop.f32.mrf.mxu0
        %v1172 = vadd.f32 0.0, %v1171
        %1173 = vmatmul.f32.gmra.mxu0 %v750
        %v1174 = vpop.f32.mrf.mxu0
        %v1175 = vadd.f32 0.0, %v1174
        %1176 = vmatmul.f32.gmra.mxu0 %v753
        %v1177 = vpop.f32.mrf.mxu0
        %v1178 = vadd.f32 0.0, %v1177
        %1179 = vmatmul.f32.gmra.mxu0 %v756
        %v1180 = vpop.f32.mrf.mxu0
        %v1181 = vadd.f32 0.0, %v1180
        %1182 = vmatmul.f32.gmra.mxu0 %v759
        %v1183 = vpop.f32.mrf.mxu0
        %v1184 = vadd.f32 0.0, %v1183
        %1185 = vmatmul.f32.gmra.mxu0 %v762
        %v1186 = vpop.f32.mrf.mxu0
        %v1187 = vadd.f32 0.0, %v1186
        %1188 = vmatmul.f32.gmra.mxu0 %v765
        %v1189 = vpop.f32.mrf.mxu0
        %v1190 = vadd.f32 0.0, %v1189
        %1191 = vmatmul.f32.gmra.mxu0 %v768
        %v1192 = vpop.f32.mrf.mxu0
        %v1193 = vadd.f32 0.0, %v1192
        %1194 = vmatmul.f32.gmra.mxu0 %v771
        %v1195 = vpop.f32.mrf.mxu0
        %v1196 = vadd.f32 0.0, %v1195
        %1197 = vmatmul.f32.gmra.mxu0 %v774
        %v1198 = vpop.f32.mrf.mxu0
        %v1199 = vadd.f32 0.0, %v1198
        %1200 = vmatmul.f32.gmra.mxu0 %v777
        %v1201 = vpop.f32.mrf.mxu0
        %v1202 = vadd.f32 0.0, %v1201
        %1203 = vmatmul.f32.gmra.mxu0 %v780
        %v1204 = vpop.f32.mrf.mxu0
        %v1205 = vadd.f32 0.0, %v1204
        %1206 = vdwg.mxu0
        %1208 = vst [vmem:[#allocation1] ss:$2 sm:$0xff] %v456
        %v1209 = vld.sshfl [vmem:[#allocation1] sm:$0xff pattern:$0x75316420]
        %v1210 = vld.sshfl [vmem:[#allocation1 + $0x8] sm:$0xff pattern:$0x75316420]
        %vm1211 = vcmask 31744
        %v1213 = vsel %vm1211, %v461, 0
        %v1216 = vsel %vm1211, %v462, 0
        %v1219 = vsel %vm1211, %v463, 0
        %v1222 = vsel %vm1211, %v464, 0
        %v1225 = vsel %vm1211, %v465, 0
        %v1228 = vsel %vm1211, %v466, 0
        %v1231 = vsel %vm1211, %v467, 0
        %v1234 = vsel %vm1211, %v468, 0
        %v1237 = vsel %vm1211, %v469, 0
        %v1240 = vsel %vm1211, %v470, 0
        %v1243 = vsel %vm1211, %v471, 0
        %v1246 = vsel %vm1211, %v472, 0
        %v1249 = vsel %vm1211, %v473, 0
        %v1252 = vsel %vm1211, %v474, 0
        %v1255 = vsel %vm1211, %v475, 0
        %v1258 = vsel %vm1211, %v476, 0
        %v1261 = vsel %vm1211, %v477, 0
        %v1264 = vsel %vm1211, %v478, 0
        %v1267 = vsel %vm1211, %v479, 0
        %v1270 = vsel %vm1211, %v480, 0
        %v1273 = vsel %vm1211, %v481, 0
        %v1276 = vsel %vm1211, %v482, 0
        %v1279 = vsel %vm1211, %v483, 0
        %v1282 = vsel %vm1211, %v484, 0
        %v1285 = vsel %vm1211, %v485, 0
        %v1288 = vsel %vm1211, %v486, 0
        %v1291 = vsel %vm1211, %v487, 0
        %v1294 = vsel %vm1211, %v488, 0
        %v1297 = vsel %vm1211, %v489, 0
        %v1300 = vsel %vm1211, %v490, 0
        %v1303 = vsel %vm1211, %v491, 0
        %v1306 = vsel %vm1211, %v492, 0
        %v1309 = vsel %vm1211, %v493, 0
        %v1312 = vsel %vm1211, %v494, 0
        %v1315 = vsel %vm1211, %v495, 0
        %v1318 = vsel %vm1211, %v496, 0
        %v1321 = vsel %vm1211, %v497, 0
        %v1324 = vsel %vm1211, %v498, 0
        %v1327 = vsel %vm1211, %v499, 0
        %v1330 = vsel %vm1211, %v500, 0
        %v1333 = vsel %vm1211, %v501, 0
        %v1336 = vsel %vm1211, %v502, 0
        %v1339 = vsel %vm1211, %v503, 0
        %v1342 = vsel %vm1211, %v504, 0
        %v1345 = vsel %vm1211, %v505, 0
        %v1348 = vsel %vm1211, %v506, 0
        %v1351 = vsel %vm1211, %v507, 0
        %v1354 = vsel %vm1211, %v508, 0
        %v1357 = vsel %vm1211, %v509, 0
        %v1360 = vsel %vm1211, %v510, 0
        %v1363 = vsel %vm1211, %v511, 0
        %v1366 = vsel %vm1211, %v512, 0
        %v1369 = vsel %vm1211, %v513, 0
        %v1372 = vsel %vm1211, %v514, 0
        %v1375 = vsel %vm1211, %v515, 0
        %v1378 = vsel %vm1211, %v516, 0
        %v1381 = vsel %vm1211, %v517, 0
        %v1384 = vsel %vm1211, %v518, 0
        %v1387 = vsel %vm1211, %v519, 0
        %v1390 = vsel %vm1211, %v520, 0
        %v1393 = vsel %vm1211, %v521, 0
        %v1396 = vsel %vm1211, %v522, 0
        %v1399 = vsel %vm1211, %v523, 0
        %v1402 = vsel %vm1211, %v524, 0
        %vm1404 = vcmask 1043456
        %v1405 = vsel %vm1404, %v1209, 0
        %v1407 = vsel %vm1404, %v1210, 0
        %1409 = vmatpush.msra.mxu0 0.0
        %1410 = vmatpush.msra.mxu0 0.0
        %1411 = vmatpush.msra.mxu0 0.0
        %1412 = vmatpush.msra.mxu0 0.0
        %1413 = vmatpush.msra.mxu0 0.0
        %1414 = vmatpush.msra.mxu0 0.0
        %1415 = vmatpush.msra.mxu0 0.0
        %1416 = vmatpush.msra.mxu0 0.0
        %1417 = vmatpush.msra.mxu0 0.0
        %1418 = vmatpush.msra.mxu0 0.0
        %1419 = vmatpush.msra.mxu0 0.0
        %1420 = vmatpush.msra.mxu0 0.0
        %1421 = vmatpush.msra.mxu0 0.0
        %1422 = vmatpush.msra.mxu0 0.0
        %1423 = vmatpush.msra.mxu0 0.0
        %1424 = vmatpush.msra.mxu0 %v1405
        %1425 = vmatmul.f32.gmra.mxu0 %v1213
        %v1426 = vpop.f32.mrf.mxu0
        %v1427 = vadd.f32 %v807, %v1426
        %1428 = vmatmul.f32.gmra.mxu0 %v1216
        %v1429 = vpop.f32.mrf.mxu0
        %v1430 = vadd.f32 %v810, %v1429
        %1431 = vmatmul.f32.gmra.mxu0 %v1219
        %v1432 = vpop.f32.mrf.mxu0
        %v1433 = vadd.f32 %v813, %v1432
        %1434 = vmatmul.f32.gmra.mxu0 %v1222
        %v1435 = vpop.f32.mrf.mxu0
        %v1436 = vadd.f32 %v816, %v1435
        %1437 = vmatmul.f32.gmra.mxu0 %v1225
        %v1438 = vpop.f32.mrf.mxu0
        %v1439 = vadd.f32 %v819, %v1438
        %1440 = vmatmul.f32.gmra.mxu0 %v1228
        %v1441 = vpop.f32.mrf.mxu0
        %v1442 = vadd.f32 %v822, %v1441
        %1443 = vmatmul.f32.gmra.mxu0 %v1231
        %v1444 = vpop.f32.mrf.mxu0
        %v1445 = vadd.f32 %v825, %v1444
        %1446 = vmatmul.f32.gmra.mxu0 %v1234
        %v1447 = vpop.f32.mrf.mxu0
        %v1448 = vadd.f32 %v828, %v1447
        %1449 = vmatmul.f32.gmra.mxu0 %v1237
        %v1450 = vpop.f32.mrf.mxu0
        %v1451 = vadd.f32 %v831, %v1450
        %1452 = vmatmul.f32.gmra.mxu0 %v1240
        %v1453 = vpop.f32.mrf.mxu0
        %v1454 = vadd.f32 %v834, %v1453
        %1455 = vmatmul.f32.gmra.mxu0 %v1243
        %v1456 = vpop.f32.mrf.mxu0
        %v1457 = vadd.f32 %v837, %v1456
        %1458 = vmatmul.f32.gmra.mxu0 %v1246
        %v1459 = vpop.f32.mrf.mxu0
        %v1460 = vadd.f32 %v840, %v1459
        %1461 = vmatmul.f32.gmra.mxu0 %v1249
        %v1462 = vpop.f32.mrf.mxu0
        %v1463 = vadd.f32 %v843, %v1462
        %1464 = vmatmul.f32.gmra.mxu0 %v1252
        %v1465 = vpop.f32.mrf.mxu0
        %v1466 = vadd.f32 %v846, %v1465
        %1467 = vmatmul.f32.gmra.mxu0 %v1255
        %v1468 = vpop.f32.mrf.mxu0
        %v1469 = vadd.f32 %v849, %v1468
        %1470 = vmatmul.f32.gmra.mxu0 %v1258
        %v1471 = vpop.f32.mrf.mxu0
        %v1472 = vadd.f32 %v852, %v1471
        %1473 = vmatmul.f32.gmra.mxu0 %v1261
        %v1474 = vpop.f32.mrf.mxu0
        %v1475 = vadd.f32 %v855, %v1474
        %1476 = vmatmul.f32.gmra.mxu0 %v1264
        %v1477 = vpop.f32.mrf.mxu0
        %v1478 = vadd.f32 %v858, %v1477
        %1479 = vmatmul.f32.gmra.mxu0 %v1267
        %v1480 = vpop.f32.mrf.mxu0
        %v1481 = vadd.f32 %v861, %v1480
        %1482 = vmatmul.f32.gmra.mxu0 %v1270
        %v1483 = vpop.f32.mrf.mxu0
        %v1484 = vadd.f32 %v864, %v1483
        %1485 = vmatmul.f32.gmra.mxu0 %v1273
        %v1486 = vpop.f32.mrf.mxu0
        %v1487 = vadd.f32 %v867, %v1486
        %1488 = vmatmul.f32.gmra.mxu0 %v1276
        %v1489 = vpop.f32.mrf.mxu0
        %v1490 = vadd.f32 %v870, %v1489
        %1491 = vmatmul.f32.gmra.mxu0 %v1279
        %v1492 = vpop.f32.mrf.mxu0
        %v1493 = vadd.f32 %v873, %v1492
        %1494 = vmatmul.f32.gmra.mxu0 %v1282
        %v1495 = vpop.f32.mrf.mxu0
        %v1496 = vadd.f32 %v876, %v1495
        %1497 = vmatmul.f32.gmra.mxu0 %v1285
        %v1498 = vpop.f32.mrf.mxu0
        %v1499 = vadd.f32 %v879, %v1498
        %1500 = vmatmul.f32.gmra.mxu0 %v1288
        %v1501 = vpop.f32.mrf.mxu0
        %v1502 = vadd.f32 %v882, %v1501
        %1503 = vmatmul.f32.gmra.mxu0 %v1291
        %v1504 = vpop.f32.mrf.mxu0
        %v1505 = vadd.f32 %v885, %v1504
        %1506 = vmatmul.f32.gmra.mxu0 %v1294
        %v1507 = vpop.f32.mrf.mxu0
        %v1508 = vadd.f32 %v888, %v1507
        %1509 = vmatmul.f32.gmra.mxu0 %v1297
        %v1510 = vpop.f32.mrf.mxu0
        %v1511 = vadd.f32 %v891, %v1510
        %1512 = vmatmul.f32.gmra.mxu0 %v1300
        %v1513 = vpop.f32.mrf.mxu0
        %v1514 = vadd.f32 %v894, %v1513
        %1515 = vmatmul.f32.gmra.mxu0 %v1303
        %v1516 = vpop.f32.mrf.mxu0
        %v1517 = vadd.f32 %v897, %v1516
        %1518 = vmatmul.f32.gmra.mxu0 %v1306
        %v1519 = vpop.f32.mrf.mxu0
        %v1520 = vadd.f32 %v900, %v1519
        %1521 = vmatmul.f32.gmra.mxu0 %v1309
        %v1522 = vpop.f32.mrf.mxu0
        %v1523 = vadd.f32 %v903, %v1522
        %1524 = vmatmul.f32.gmra.mxu0 %v1312
        %v1525 = vpop.f32.mrf.mxu0
        %v1526 = vadd.f32 %v906, %v1525
        %1527 = vmatmul.f32.gmra.mxu0 %v1315
        %v1528 = vpop.f32.mrf.mxu0
        %v1529 = vadd.f32 %v909, %v1528
        %1530 = vmatmul.f32.gmra.mxu0 %v1318
        %v1531 = vpop.f32.mrf.mxu0
        %v1532 = vadd.f32 %v912, %v1531
        %1533 = vmatmul.f32.gmra.mxu0 %v1321
        %v1534 = vpop.f32.mrf.mxu0
        %v1535 = vadd.f32 %v915, %v1534
        %1536 = vmatmul.f32.gmra.mxu0 %v1324
        %v1537 = vpop.f32.mrf.mxu0
        %v1538 = vadd.f32 %v918, %v1537
        %1539 = vmatmul.f32.gmra.mxu0 %v1327
        %v1540 = vpop.f32.mrf.mxu0
        %v1541 = vadd.f32 %v921, %v1540
        %1542 = vmatmul.f32.gmra.mxu0 %v1330
        %v1543 = vpop.f32.mrf.mxu0
        %v1544 = vadd.f32 %v924, %v1543
        %1545 = vmatmul.f32.gmra.mxu0 %v1333
        %v1546 = vpop.f32.mrf.mxu0
        %v1547 = vadd.f32 %v927, %v1546
        %1548 = vmatmul.f32.gmra.mxu0 %v1336
        %v1549 = vpop.f32.mrf.mxu0
        %v1550 = vadd.f32 %v930, %v1549
        %1551 = vmatmul.f32.gmra.mxu0 %v1339
        %v1552 = vpop.f32.mrf.mxu0
        %v1553 = vadd.f32 %v933, %v1552
        %1554 = vmatmul.f32.gmra.mxu0 %v1342
        %v1555 = vpop.f32.mrf.mxu0
        %v1556 = vadd.f32 %v936, %v1555
        %1557 = vmatmul.f32.gmra.mxu0 %v1345
        %v1558 = vpop.f32.mrf.mxu0
        %v1559 = vadd.f32 %v939, %v1558
        %1560 = vmatmul.f32.gmra.mxu0 %v1348
        %v1561 = vpop.f32.mrf.mxu0
        %v1562 = vadd.f32 %v942, %v1561
        %1563 = vmatmul.f32.gmra.mxu0 %v1351
        %v1564 = vpop.f32.mrf.mxu0
        %v1565 = vadd.f32 %v945, %v1564
        %1566 = vmatmul.f32.gmra.mxu0 %v1354
        %v1567 = vpop.f32.mrf.mxu0
        %v1568 = vadd.f32 %v948, %v1567
        %1569 = vmatmul.f32.gmra.mxu0 %v1357
        %v1570 = vpop.f32.mrf.mxu0
        %v1571 = vadd.f32 %v951, %v1570
        %1572 = vmatmul.f32.gmra.mxu0 %v1360
        %v1573 = vpop.f32.mrf.mxu0
        %v1574 = vadd.f32 %v954, %v1573
        %1575 = vmatmul.f32.gmra.mxu0 %v1363
        %v1576 = vpop.f32.mrf.mxu0
        %v1577 = vadd.f32 %v957, %v1576
        %1578 = vmatmul.f32.gmra.mxu0 %v1366
        %v1579 = vpop.f32.mrf.mxu0
        %v1580 = vadd.f32 %v960, %v1579
        %1581 = vmatmul.f32.gmra.mxu0 %v1369
        %v1582 = vpop.f32.mrf.mxu0
        %v1583 = vadd.f32 %v963, %v1582
        %1584 = vmatmul.f32.gmra.mxu0 %v1372
        %v1585 = vpop.f32.mrf.mxu0
        %v1586 = vadd.f32 %v966, %v1585
        %1587 = vmatmul.f32.gmra.mxu0 %v1375
        %v1588 = vpop.f32.mrf.mxu0
        %v1589 = vadd.f32 %v969, %v1588
        %1590 = vmatmul.f32.gmra.mxu0 %v1378
        %v1591 = vpop.f32.mrf.mxu0
        %v1592 = vadd.f32 %v972, %v1591
        %1593 = vmatmul.f32.gmra.mxu0 %v1381
        %v1594 = vpop.f32.mrf.mxu0
        %v1595 = vadd.f32 %v975, %v1594
        %1596 = vmatmul.f32.gmra.mxu0 %v1384
        %v1597 = vpop.f32.mrf.mxu0
        %v1598 = vadd.f32 %v978, %v1597
        %1599 = vmatmul.f32.gmra.mxu0 %v1387
        %v1600 = vpop.f32.mrf.mxu0
        %v1601 = vadd.f32 %v981, %v1600
        %1602 = vmatmul.f32.gmra.mxu0 %v1390
        %v1603 = vpop.f32.mrf.mxu0
        %v1604 = vadd.f32 %v984, %v1603
        %1605 = vmatmul.f32.gmra.mxu0 %v1393
        %v1606 = vpop.f32.mrf.mxu0
        %v1607 = vadd.f32 %v987, %v1606
        %1608 = vmatmul.f32.gmra.mxu0 %v1396
        %v1609 = vpop.f32.mrf.mxu0
        %v1610 = vadd.f32 %v990, %v1609
        %1611 = vmatmul.f32.gmra.mxu0 %v1399
        %v1612 = vpop.f32.mrf.mxu0
        %v1613 = vadd.f32 %v993, %v1612
        %1614 = vmatmul.f32.gmra.mxu0 %v1402
        %v1615 = vpop.f32.mrf.mxu0
        %v1616 = vadd.f32 %v996, %v1615
        %1617 = vdwg.mxu0
        %1618 = vmatpush.msra.mxu0 0.0
        %1619 = vmatpush.msra.mxu0 0.0
        %1620 = vmatpush.msra.mxu0 0.0
        %1621 = vmatpush.msra.mxu0 0.0
        %1622 = vmatpush.msra.mxu0 0.0
        %1623 = vmatpush.msra.mxu0 0.0
        %1624 = vmatpush.msra.mxu0 0.0
        %1625 = vmatpush.msra.mxu0 0.0
        %1626 = vmatpush.msra.mxu0 0.0
        %1627 = vmatpush.msra.mxu0 0.0
        %1628 = vmatpush.msra.mxu0 0.0
        %1629 = vmatpush.msra.mxu0 0.0
        %1630 = vmatpush.msra.mxu0 0.0
        %1631 = vmatpush.msra.mxu0 0.0
        %1632 = vmatpush.msra.mxu0 0.0
        %1633 = vmatpush.msra.mxu0 %v1407
        %1634 = vmatmul.f32.gmra.mxu0 %v1213
        %v1635 = vpop.f32.mrf.mxu0
        %v1636 = vadd.f32 %v1016, %v1635
        %1637 = vmatmul.f32.gmra.mxu0 %v1216
        %v1638 = vpop.f32.mrf.mxu0
        %v1639 = vadd.f32 %v1019, %v1638
        %1640 = vmatmul.f32.gmra.mxu0 %v1219
        %v1641 = vpop.f32.mrf.mxu0
        %v1642 = vadd.f32 %v1022, %v1641
        %1643 = vmatmul.f32.gmra.mxu0 %v1222
        %v1644 = vpop.f32.mrf.mxu0
        %v1645 = vadd.f32 %v1025, %v1644
        %1646 = vmatmul.f32.gmra.mxu0 %v1225
        %v1647 = vpop.f32.mrf.mxu0
        %v1648 = vadd.f32 %v1028, %v1647
        %1649 = vmatmul.f32.gmra.mxu0 %v1228
        %v1650 = vpop.f32.mrf.mxu0
        %v1651 = vadd.f32 %v1031, %v1650
        %1652 = vmatmul.f32.gmra.mxu0 %v1231
        %v1653 = vpop.f32.mrf.mxu0
        %v1654 = vadd.f32 %v1034, %v1653
        %1655 = vmatmul.f32.gmra.mxu0 %v1234
        %v1656 = vpop.f32.mrf.mxu0
        %v1657 = vadd.f32 %v1037, %v1656
        %1658 = vmatmul.f32.gmra.mxu0 %v1237
        %v1659 = vpop.f32.mrf.mxu0
        %v1660 = vadd.f32 %v1040, %v1659
        %1661 = vmatmul.f32.gmra.mxu0 %v1240
        %v1662 = vpop.f32.mrf.mxu0
        %v1663 = vadd.f32 %v1043, %v1662
        %1664 = vmatmul.f32.gmra.mxu0 %v1243
        %v1665 = vpop.f32.mrf.mxu0
        %v1666 = vadd.f32 %v1046, %v1665
        %1667 = vmatmul.f32.gmra.mxu0 %v1246
        %v1668 = vpop.f32.mrf.mxu0
        %v1669 = vadd.f32 %v1049, %v1668
        %1670 = vmatmul.f32.gmra.mxu0 %v1249
        %v1671 = vpop.f32.mrf.mxu0
        %v1672 = vadd.f32 %v1052, %v1671
        %1673 = vmatmul.f32.gmra.mxu0 %v1252
        %v1674 = vpop.f32.mrf.mxu0
        %v1675 = vadd.f32 %v1055, %v1674
        %1676 = vmatmul.f32.gmra.mxu0 %v1255
        %v1677 = vpop.f32.mrf.mxu0
        %v1678 = vadd.f32 %v1058, %v1677
        %1679 = vmatmul.f32.gmra.mxu0 %v1258
        %v1680 = vpop.f32.mrf.mxu0
        %v1681 = vadd.f32 %v1061, %v1680
        %1682 = vmatmul.f32.gmra.mxu0 %v1261
        %v1683 = vpop.f32.mrf.mxu0
        %v1684 = vadd.f32 %v1064, %v1683
        %1685 = vmatmul.f32.gmra.mxu0 %v1264
        %v1686 = vpop.f32.mrf.mxu0
        %v1687 = vadd.f32 %v1067, %v1686
        %1688 = vmatmul.f32.gmra.mxu0 %v1267
        %v1689 = vpop.f32.mrf.mxu0
        %v1690 = vadd.f32 %v1070, %v1689
        %1691 = vmatmul.f32.gmra.mxu0 %v1270
        %v1692 = vpop.f32.mrf.mxu0
        %v1693 = vadd.f32 %v1073, %v1692
        %1694 = vmatmul.f32.gmra.mxu0 %v1273
        %v1695 = vpop.f32.mrf.mxu0
        %v1696 = vadd.f32 %v1076, %v1695
        %1697 = vmatmul.f32.gmra.mxu0 %v1276
        %v1698 = vpop.f32.mrf.mxu0
        %v1699 = vadd.f32 %v1079, %v1698
        %1700 = vmatmul.f32.gmra.mxu0 %v1279
        %v1701 = vpop.f32.mrf.mxu0
        %v1702 = vadd.f32 %v1082, %v1701
        %1703 = vmatmul.f32.gmra.mxu0 %v1282
        %v1704 = vpop.f32.mrf.mxu0
        %v1705 = vadd.f32 %v1085, %v1704
        %1706 = vmatmul.f32.gmra.mxu0 %v1285
        %v1707 = vpop.f32.mrf.mxu0
        %v1708 = vadd.f32 %v1088, %v1707
        %1709 = vmatmul.f32.gmra.mxu0 %v1288
        %v1710 = vpop.f32.mrf.mxu0
        %v1711 = vadd.f32 %v1091, %v1710
        %1712 = vmatmul.f32.gmra.mxu0 %v1291
        %v1713 = vpop.f32.mrf.mxu0
        %v1714 = vadd.f32 %v1094, %v1713
        %1715 = vmatmul.f32.gmra.mxu0 %v1294
        %v1716 = vpop.f32.mrf.mxu0
        %v1717 = vadd.f32 %v1097, %v1716
        %1718 = vmatmul.f32.gmra.mxu0 %v1297
        %v1719 = vpop.f32.mrf.mxu0
        %v1720 = vadd.f32 %v1100, %v1719
        %1721 = vmatmul.f32.gmra.mxu0 %v1300
        %v1722 = vpop.f32.mrf.mxu0
        %v1723 = vadd.f32 %v1103, %v1722
        %1724 = vmatmul.f32.gmra.mxu0 %v1303
        %v1725 = vpop.f32.mrf.mxu0
        %v1726 = vadd.f32 %v1106, %v1725
        %1727 = vmatmul.f32.gmra.mxu0 %v1306
        %v1728 = vpop.f32.mrf.mxu0
        %v1729 = vadd.f32 %v1109, %v1728
        %1730 = vmatmul.f32.gmra.mxu0 %v1309
        %v1731 = vpop.f32.mrf.mxu0
        %v1732 = vadd.f32 %v1112, %v1731
        %1733 = vmatmul.f32.gmra.mxu0 %v1312
        %v1734 = vpop.f32.mrf.mxu0
        %v1735 = vadd.f32 %v1115, %v1734
        %1736 = vmatmul.f32.gmra.mxu0 %v1315
        %v1737 = vpop.f32.mrf.mxu0
        %v1738 = vadd.f32 %v1118, %v1737
        %1739 = vmatmul.f32.gmra.mxu0 %v1318
        %v1740 = vpop.f32.mrf.mxu0
        %v1741 = vadd.f32 %v1121, %v1740
        %1742 = vmatmul.f32.gmra.mxu0 %v1321
        %v1743 = vpop.f32.mrf.mxu0
        %v1744 = vadd.f32 %v1124, %v1743
        %1745 = vmatmul.f32.gmra.mxu0 %v1324
        %v1746 = vpop.f32.mrf.mxu0
        %v1747 = vadd.f32 %v1127, %v1746
        %1748 = vmatmul.f32.gmra.mxu0 %v1327
        %v1749 = vpop.f32.mrf.mxu0
        %v1750 = vadd.f32 %v1130, %v1749
        %1751 = vmatmul.f32.gmra.mxu0 %v1330
        %v1752 = vpop.f32.mrf.mxu0
        %v1753 = vadd.f32 %v1133, %v1752
        %1754 = vmatmul.f32.gmra.mxu0 %v1333
        %v1755 = vpop.f32.mrf.mxu0
        %v1756 = vadd.f32 %v1136, %v1755
        %1757 = vmatmul.f32.gmra.mxu0 %v1336
        %v1758 = vpop.f32.mrf.mxu0
        %v1759 = vadd.f32 %v1139, %v1758
        %1760 = vmatmul.f32.gmra.mxu0 %v1339
        %v1761 = vpop.f32.mrf.mxu0
        %v1762 = vadd.f32 %v1142, %v1761
        %1763 = vmatmul.f32.gmra.mxu0 %v1342
        %v1764 = vpop.f32.mrf.mxu0
        %v1765 = vadd.f32 %v1145, %v1764
        %1766 = vmatmul.f32.gmra.mxu0 %v1345
        %v1767 = vpop.f32.mrf.mxu0
        %v1768 = vadd.f32 %v1148, %v1767
        %1769 = vmatmul.f32.gmra.mxu0 %v1348
        %v1770 = vpop.f32.mrf.mxu0
        %v1771 = vadd.f32 %v1151, %v1770
        %1772 = vmatmul.f32.gmra.mxu0 %v1351
        %v1773 = vpop.f32.mrf.mxu0
        %v1774 = vadd.f32 %v1154, %v1773
        %1775 = vmatmul.f32.gmra.mxu0 %v1354
        %v1776 = vpop.f32.mrf.mxu0
        %v1777 = vadd.f32 %v1157, %v1776
        %1778 = vmatmul.f32.gmra.mxu0 %v1357
        %v1779 = vpop.f32.mrf.mxu0
        %v1780 = vadd.f32 %v1160, %v1779
        %1781 = vmatmul.f32.gmra.mxu0 %v1360
        %v1782 = vpop.f32.mrf.mxu0
        %v1783 = vadd.f32 %v1163, %v1782
        %1784 = vmatmul.f32.gmra.mxu0 %v1363
        %v1785 = vpop.f32.mrf.mxu0
        %v1786 = vadd.f32 %v1166, %v1785
        %1787 = vmatmul.f32.gmra.mxu0 %v1366
        %v1788 = vpop.f32.mrf.mxu0
        %v1789 = vadd.f32 %v1169, %v1788
        %1790 = vmatmul.f32.gmra.mxu0 %v1369
        %v1791 = vpop.f32.mrf.mxu0
        %v1792 = vadd.f32 %v1172, %v1791
        %1793 = vmatmul.f32.gmra.mxu0 %v1372
        %v1794 = vpop.f32.mrf.mxu0
        %v1795 = vadd.f32 %v1175, %v1794
        %1796 = vmatmul.f32.gmra.mxu0 %v1375
        %v1797 = vpop.f32.mrf.mxu0
        %v1798 = vadd.f32 %v1178, %v1797
        %1799 = vmatmul.f32.gmra.mxu0 %v1378
        %v1800 = vpop.f32.mrf.mxu0
        %v1801 = vadd.f32 %v1181, %v1800
        %1802 = vmatmul.f32.gmra.mxu0 %v1381
        %v1803 = vpop.f32.mrf.mxu0
        %v1804 = vadd.f32 %v1184, %v1803
        %1805 = vmatmul.f32.gmra.mxu0 %v1384
        %v1806 = vpop.f32.mrf.mxu0
        %v1807 = vadd.f32 %v1187, %v1806
        %1808 = vmatmul.f32.gmra.mxu0 %v1387
        %v1809 = vpop.f32.mrf.mxu0
        %v1810 = vadd.f32 %v1190, %v1809
        %1811 = vmatmul.f32.gmra.mxu0 %v1390
        %v1812 = vpop.f32.mrf.mxu0
        %v1813 = vadd.f32 %v1193, %v1812
        %1814 = vmatmul.f32.gmra.mxu0 %v1393
        %v1815 = vpop.f32.mrf.mxu0
        %v1816 = vadd.f32 %v1196, %v1815
        %1817 = vmatmul.f32.gmra.mxu0 %v1396
        %v1818 = vpop.f32.mrf.mxu0
        %v1819 = vadd.f32 %v1199, %v1818
        %1820 = vmatmul.f32.gmra.mxu0 %v1399
        %v1821 = vpop.f32.mrf.mxu0
        %v1822 = vadd.f32 %v1202, %v1821
        %1823 = vmatmul.f32.gmra.mxu0 %v1402
        %v1824 = vpop.f32.mrf.mxu0
        %v1825 = vadd.f32 %v1205, %v1824
        %1826 = vdwg.mxu0
        %v1827 = vld [vmem:[%s5] sm:$0xff]
        %v1828 = vld [vmem:[%s5 + $0x8] sm:$0xff]
        %v1829 = vld [vmem:[%s5 + $0x10] sm:$0xff]
        %v1830 = vld [vmem:[%s5 + $0x18] sm:$0xff]
        %v1831 = vld [vmem:[%s5 + $0x20] sm:$0xff]
        %v1832 = vld [vmem:[%s5 + $0x28] sm:$0xff]
        %v1833 = vld [vmem:[%s5 + $0x30] sm:$0xff]
        %v1834 = vld [vmem:[%s5 + $0x38] sm:$0xff]
        %v1835 = vld [vmem:[%s5 + $0x40] sm:$0xff]
        %v1836 = vld [vmem:[%s5 + $0x48] sm:$0xff]
        %v1837 = vld [vmem:[%s5 + $0x50] sm:$0xff]
        %v1838 = vld [vmem:[%s5 + $0x58] sm:$0xff]
        %v1839 = vld [vmem:[%s5 + $0x60] sm:$0xff]
        %v1840 = vld [vmem:[%s5 + $0x68] sm:$0xff]
        %v1841 = vld [vmem:[%s5 + $0x70] sm:$0xff]
        %v1842 = vld [vmem:[%s5 + $0x78] sm:$0xff]
        %v1843 = vld [vmem:[%s5 + $0x80] sm:$0xff]
        %v1844 = vld [vmem:[%s5 + $0x88] sm:$0xff]
        %v1845 = vld [vmem:[%s5 + $0x90] sm:$0xff]
        %v1846 = vld [vmem:[%s5 + $0x98] sm:$0xff]
        %v1847 = vld [vmem:[%s5 + $0xa0] sm:$0xff]
        %v1848 = vld [vmem:[%s5 + $0xa8] sm:$0xff]
        %v1849 = vld [vmem:[%s5 + $0xb0] sm:$0xff]
        %v1850 = vld [vmem:[%s5 + $0xb8] sm:$0xff]
        %v1851 = vld [vmem:[%s5 + $0xc0] sm:$0xff]
        %v1852 = vld [vmem:[%s5 + $0xc8] sm:$0xff]
        %v1853 = vld [vmem:[%s5 + $0xd0] sm:$0xff]
        %v1854 = vld [vmem:[%s5 + $0xd8] sm:$0xff]
        %v1855 = vld [vmem:[%s5 + $0xe0] sm:$0xff]
        %v1856 = vld [vmem:[%s5 + $0xe8] sm:$0xff]
        %v1857 = vld [vmem:[%s5 + $0xf0] sm:$0xff]
        %v1858 = vld [vmem:[%s5 + $0xf8] sm:$0xff]
        %v1859 = vld [vmem:[%s5 + $0x100] sm:$0xff]
        %v1860 = vld [vmem:[%s5 + $0x108] sm:$0xff]
        %v1861 = vld [vmem:[%s5 + $0x110] sm:$0xff]
        %v1862 = vld [vmem:[%s5 + $0x118] sm:$0xff]
        %v1863 = vld [vmem:[%s5 + $0x120] sm:$0xff]
        %v1864 = vld [vmem:[%s5 + $0x128] sm:$0xff]
        %v1865 = vld [vmem:[%s5 + $0x130] sm:$0xff]
        %v1866 = vld [vmem:[%s5 + $0x138] sm:$0xff]
        %v1867 = vld [vmem:[%s5 + $0x140] sm:$0xff]
        %v1868 = vld [vmem:[%s5 + $0x148] sm:$0xff]
        %v1869 = vld [vmem:[%s5 + $0x150] sm:$0xff]
        %v1870 = vld [vmem:[%s5 + $0x158] sm:$0xff]
        %v1871 = vld [vmem:[%s5 + $0x160] sm:$0xff]
        %v1872 = vld [vmem:[%s5 + $0x168] sm:$0xff]
        %v1873 = vld [vmem:[%s5 + $0x170] sm:$0xff]
        %v1874 = vld [vmem:[%s5 + $0x178] sm:$0xff]
        %v1875 = vld [vmem:[%s5 + $0x180] sm:$0xff]
        %v1876 = vld [vmem:[%s5 + $0x188] sm:$0xff]
        %v1877 = vld [vmem:[%s5 + $0x190] sm:$0xff]
        %v1878 = vld [vmem:[%s5 + $0x198] sm:$0xff]
        %v1879 = vld [vmem:[%s5 + $0x1a0] sm:$0xff]
        %v1880 = vld [vmem:[%s5 + $0x1a8] sm:$0xff]
        %v1881 = vld [vmem:[%s5 + $0x1b0] sm:$0xff]
        %v1882 = vld [vmem:[%s5 + $0x1b8] sm:$0xff]
        %v1883 = vld [vmem:[%s5 + $0x1c0] sm:$0xff]
        %v1884 = vld [vmem:[%s5 + $0x1c8] sm:$0xff]
        %v1885 = vld [vmem:[%s5 + $0x1d0] sm:$0xff]
        %v1886 = vld [vmem:[%s5 + $0x1d8] sm:$0xff]
        %v1887 = vld [vmem:[%s5 + $0x1e0] sm:$0xff]
        %v1888 = vld [vmem:[%s5 + $0x1e8] sm:$0xff]
        %v1889 = vld [vmem:[%s5 + $0x1f0] sm:$0xff]
        %v1890 = vld [vmem:[%s5 + $0x1f8] sm:$0xff]
        %1892 = vset.pattern.permute.xlu0 0
        %1893 = vperm.xlu0 %1892, %v1827
        %v1894 = vpop.permute.xlu0 %1893
        %1897 = vset.pattern.permute.xlu0 0
        %1898 = vperm.xlu0 %1897, %v1828
        %v1899 = vpop.permute.xlu0 %1898
        %1902 = vset.pattern.permute.xlu0 0
        %1903 = vperm.xlu0 %1902, %v1829
        %v1904 = vpop.permute.xlu0 %1903
        %1907 = vset.pattern.permute.xlu0 0
        %1908 = vperm.xlu0 %1907, %v1830
        %v1909 = vpop.permute.xlu0 %1908
        %1912 = vset.pattern.permute.xlu0 0
        %1913 = vperm.xlu0 %1912, %v1831
        %v1914 = vpop.permute.xlu0 %1913
        %1917 = vset.pattern.permute.xlu0 0
        %1918 = vperm.xlu0 %1917, %v1832
        %v1919 = vpop.permute.xlu0 %1918
        %1922 = vset.pattern.permute.xlu0 0
        %1923 = vperm.xlu0 %1922, %v1833
        %v1924 = vpop.permute.xlu0 %1923
        %1927 = vset.pattern.permute.xlu0 0
        %1928 = vperm.xlu0 %1927, %v1834
        %v1929 = vpop.permute.xlu0 %1928
        %1932 = vset.pattern.permute.xlu0 0
        %1933 = vperm.xlu0 %1932, %v1835
        %v1934 = vpop.permute.xlu0 %1933
        %1937 = vset.pattern.permute.xlu0 0
        %1938 = vperm.xlu0 %1937, %v1836
        %v1939 = vpop.permute.xlu0 %1938
        %1942 = vset.pattern.permute.xlu0 0
        %1943 = vperm.xlu0 %1942, %v1837
        %v1944 = vpop.permute.xlu0 %1943
        %1947 = vset.pattern.permute.xlu0 0
        %1948 = vperm.xlu0 %1947, %v1838
        %v1949 = vpop.permute.xlu0 %1948
        %1952 = vset.pattern.permute.xlu0 0
        %1953 = vperm.xlu0 %1952, %v1839
        %v1954 = vpop.permute.xlu0 %1953
        %1957 = vset.pattern.permute.xlu0 0
        %1958 = vperm.xlu0 %1957, %v1840
        %v1959 = vpop.permute.xlu0 %1958
        %1962 = vset.pattern.permute.xlu0 0
        %1963 = vperm.xlu0 %1962, %v1841
        %v1964 = vpop.permute.xlu0 %1963
        %1967 = vset.pattern.permute.xlu0 0
        %1968 = vperm.xlu0 %1967, %v1842
        %v1969 = vpop.permute.xlu0 %1968
        %1972 = vset.pattern.permute.xlu0 0
        %1973 = vperm.xlu0 %1972, %v1843
        %v1974 = vpop.permute.xlu0 %1973
        %1977 = vset.pattern.permute.xlu0 0
        %1978 = vperm.xlu0 %1977, %v1844
        %v1979 = vpop.permute.xlu0 %1978
        %1982 = vset.pattern.permute.xlu0 0
        %1983 = vperm.xlu0 %1982, %v1845
        %v1984 = vpop.permute.xlu0 %1983
        %1987 = vset.pattern.permute.xlu0 0
        %1988 = vperm.xlu0 %1987, %v1846
        %v1989 = vpop.permute.xlu0 %1988
        %1992 = vset.pattern.permute.xlu0 0
        %1993 = vperm.xlu0 %1992, %v1847
        %v1994 = vpop.permute.xlu0 %1993
        %1997 = vset.pattern.permute.xlu0 0
        %1998 = vperm.xlu0 %1997, %v1848
        %v1999 = vpop.permute.xlu0 %1998
        %2002 = vset.pattern.permute.xlu0 0
        %2003 = vperm.xlu0 %2002, %v1849
        %v2004 = vpop.permute.xlu0 %2003
        %2007 = vset.pattern.permute.xlu0 0
        %2008 = vperm.xlu0 %2007, %v1850
        %v2009 = vpop.permute.xlu0 %2008
        %2012 = vset.pattern.permute.xlu0 0
        %2013 = vperm.xlu0 %2012, %v1851
        %v2014 = vpop.permute.xlu0 %2013
        %2017 = vset.pattern.permute.xlu0 0
        %2018 = vperm.xlu0 %2017, %v1852
        %v2019 = vpop.permute.xlu0 %2018
        %2022 = vset.pattern.permute.xlu0 0
        %2023 = vperm.xlu0 %2022, %v1853
        %v2024 = vpop.permute.xlu0 %2023
        %2027 = vset.pattern.permute.xlu0 0
        %2028 = vperm.xlu0 %2027, %v1854
        %v2029 = vpop.permute.xlu0 %2028
        %2032 = vset.pattern.permute.xlu0 0
        %2033 = vperm.xlu0 %2032, %v1855
        %v2034 = vpop.permute.xlu0 %2033
        %2037 = vset.pattern.permute.xlu0 0
        %2038 = vperm.xlu0 %2037, %v1856
        %v2039 = vpop.permute.xlu0 %2038
        %2042 = vset.pattern.permute.xlu0 0
        %2043 = vperm.xlu0 %2042, %v1857
        %v2044 = vpop.permute.xlu0 %2043
        %2047 = vset.pattern.permute.xlu0 0
        %2048 = vperm.xlu0 %2047, %v1858
        %v2049 = vpop.permute.xlu0 %2048
        %2052 = vset.pattern.permute.xlu0 0
        %2053 = vperm.xlu0 %2052, %v1859
        %v2054 = vpop.permute.xlu0 %2053
        %2057 = vset.pattern.permute.xlu0 0
        %2058 = vperm.xlu0 %2057, %v1860
        %v2059 = vpop.permute.xlu0 %2058
        %2062 = vset.pattern.permute.xlu0 0
        %2063 = vperm.xlu0 %2062, %v1861
        %v2064 = vpop.permute.xlu0 %2063
        %2067 = vset.pattern.permute.xlu0 0
        %2068 = vperm.xlu0 %2067, %v1862
        %v2069 = vpop.permute.xlu0 %2068
        %2072 = vset.pattern.permute.xlu0 0
        %2073 = vperm.xlu0 %2072, %v1863
        %v2074 = vpop.permute.xlu0 %2073
        %2077 = vset.pattern.permute.xlu0 0
        %2078 = vperm.xlu0 %2077, %v1864
        %v2079 = vpop.permute.xlu0 %2078
        %2082 = vset.pattern.permute.xlu0 0
        %2083 = vperm.xlu0 %2082, %v1865
        %v2084 = vpop.permute.xlu0 %2083
        %2087 = vset.pattern.permute.xlu0 0
        %2088 = vperm.xlu0 %2087, %v1866
        %v2089 = vpop.permute.xlu0 %2088
        %2092 = vset.pattern.permute.xlu0 0
        %2093 = vperm.xlu0 %2092, %v1867
        %v2094 = vpop.permute.xlu0 %2093
        %2097 = vset.pattern.permute.xlu0 0
        %2098 = vperm.xlu0 %2097, %v1868
        %v2099 = vpop.permute.xlu0 %2098
        %2102 = vset.pattern.permute.xlu0 0
        %2103 = vperm.xlu0 %2102, %v1869
        %v2104 = vpop.permute.xlu0 %2103
        %2107 = vset.pattern.permute.xlu0 0
        %2108 = vperm.xlu0 %2107, %v1870
        %v2109 = vpop.permute.xlu0 %2108
        %2112 = vset.pattern.permute.xlu0 0
        %2113 = vperm.xlu0 %2112, %v1871
        %v2114 = vpop.permute.xlu0 %2113
        %2117 = vset.pattern.permute.xlu0 0
        %2118 = vperm.xlu0 %2117, %v1872
        %v2119 = vpop.permute.xlu0 %2118
        %2122 = vset.pattern.permute.xlu0 0
        %2123 = vperm.xlu0 %2122, %v1873
        %v2124 = vpop.permute.xlu0 %2123
        %2127 = vset.pattern.permute.xlu0 0
        %2128 = vperm.xlu0 %2127, %v1874
        %v2129 = vpop.permute.xlu0 %2128
        %2132 = vset.pattern.permute.xlu0 0
        %2133 = vperm.xlu0 %2132, %v1875
        %v2134 = vpop.permute.xlu0 %2133
        %2137 = vset.pattern.permute.xlu0 0
        %2138 = vperm.xlu0 %2137, %v1876
        %v2139 = vpop.permute.xlu0 %2138
        %2142 = vset.pattern.permute.xlu0 0
        %2143 = vperm.xlu0 %2142, %v1877
        %v2144 = vpop.permute.xlu0 %2143
        %2147 = vset.pattern.permute.xlu0 0
        %2148 = vperm.xlu0 %2147, %v1878
        %v2149 = vpop.permute.xlu0 %2148
        %2152 = vset.pattern.permute.xlu0 0
        %2153 = vperm.xlu0 %2152, %v1879
        %v2154 = vpop.permute.xlu0 %2153
        %2157 = vset.pattern.permute.xlu0 0
        %2158 = vperm.xlu0 %2157, %v1880
        %v2159 = vpop.permute.xlu0 %2158
        %2162 = vset.pattern.permute.xlu0 0
        %2163 = vperm.xlu0 %2162, %v1881
        %v2164 = vpop.permute.xlu0 %2163
        %2167 = vset.pattern.permute.xlu0 0
        %2168 = vperm.xlu0 %2167, %v1882
        %v2169 = vpop.permute.xlu0 %2168
        %2172 = vset.pattern.permute.xlu0 0
        %2173 = vperm.xlu0 %2172, %v1883
        %v2174 = vpop.permute.xlu0 %2173
        %2177 = vset.pattern.permute.xlu0 0
        %2178 = vperm.xlu0 %2177, %v1884
        %v2179 = vpop.permute.xlu0 %2178
        %2182 = vset.pattern.permute.xlu0 0
        %2183 = vperm.xlu0 %2182, %v1885
        %v2184 = vpop.permute.xlu0 %2183
        %2187 = vset.pattern.permute.xlu0 0
        %2188 = vperm.xlu0 %2187, %v1886
        %v2189 = vpop.permute.xlu0 %2188
        %2192 = vset.pattern.permute.xlu0 0
        %2193 = vperm.xlu0 %2192, %v1887
        %v2194 = vpop.permute.xlu0 %2193
        %2197 = vset.pattern.permute.xlu0 0
        %2198 = vperm.xlu0 %2197, %v1888
        %v2199 = vpop.permute.xlu0 %2198
        %2202 = vset.pattern.permute.xlu0 0
        %2203 = vperm.xlu0 %2202, %v1889
        %v2204 = vpop.permute.xlu0 %2203
        %2207 = vset.pattern.permute.xlu0 0
        %2208 = vperm.xlu0 %2207, %v1890
        %v2209 = vpop.permute.xlu0 %2208
        %v2211 = vadd.f32 %v1427, %v1894
        %v2212 = vadd.f32 %v1636, %v1894
        %v2213 = vadd.f32 %v1430, %v1899
        %v2214 = vadd.f32 %v1639, %v1899
        %v2215 = vadd.f32 %v1433, %v1904
        %v2216 = vadd.f32 %v1642, %v1904
        %v2217 = vadd.f32 %v1436, %v1909
        %v2218 = vadd.f32 %v1645, %v1909
        %v2219 = vadd.f32 %v1439, %v1914
        %v2220 = vadd.f32 %v1648, %v1914
        %v2221 = vadd.f32 %v1442, %v1919
        %v2222 = vadd.f32 %v1651, %v1919
        %v2223 = vadd.f32 %v1445, %v1924
        %v2224 = vadd.f32 %v1654, %v1924
        %v2225 = vadd.f32 %v1448, %v1929
        %v2226 = vadd.f32 %v1657, %v1929
        %v2227 = vadd.f32 %v1451, %v1934
        %v2228 = vadd.f32 %v1660, %v1934
        %v2229 = vadd.f32 %v1454, %v1939
        %v2230 = vadd.f32 %v1663, %v1939
        %v2231 = vadd.f32 %v1457, %v1944
        %v2232 = vadd.f32 %v1666, %v1944
        %v2233 = vadd.f32 %v1460, %v1949
        %v2234 = vadd.f32 %v1669, %v1949
        %v2235 = vadd.f32 %v1463, %v1954
        %v2236 = vadd.f32 %v1672, %v1954
        %v2237 = vadd.f32 %v1466, %v1959
        %v2238 = vadd.f32 %v1675, %v1959
        %v2239 = vadd.f32 %v1469, %v1964
        %v2240 = vadd.f32 %v1678, %v1964
        %v2241 = vadd.f32 %v1472, %v1969
        %v2242 = vadd.f32 %v1681, %v1969
        %v2243 = vadd.f32 %v1475, %v1974
        %v2244 = vadd.f32 %v1684, %v1974
        %v2245 = vadd.f32 %v1478, %v1979
        %v2246 = vadd.f32 %v1687, %v1979
        %v2247 = vadd.f32 %v1481, %v1984
        %v2248 = vadd.f32 %v1690, %v1984
        %v2249 = vadd.f32 %v1484, %v1989
        %v2250 = vadd.f32 %v1693, %v1989
        %v2251 = vadd.f32 %v1487, %v1994
        %v2252 = vadd.f32 %v1696, %v1994
        %v2253 = vadd.f32 %v1490, %v1999
        %v2254 = vadd.f32 %v1699, %v1999
        %v2255 = vadd.f32 %v1493, %v2004
        %v2256 = vadd.f32 %v1702, %v2004
        %v2257 = vadd.f32 %v1496, %v2009
        %v2258 = vadd.f32 %v1705, %v2009
        %v2259 = vadd.f32 %v1499, %v2014
        %v2260 = vadd.f32 %v1708, %v2014
        %v2261 = vadd.f32 %v1502, %v2019
        %v2262 = vadd.f32 %v1711, %v2019
        %v2263 = vadd.f32 %v1505, %v2024
        %v2264 = vadd.f32 %v1714, %v2024
        %v2265 = vadd.f32 %v1508, %v2029
        %v2266 = vadd.f32 %v1717, %v2029
        %v2267 = vadd.f32 %v1511, %v2034
        %v2268 = vadd.f32 %v1720, %v2034
        %v2269 = vadd.f32 %v1514, %v2039
        %v2270 = vadd.f32 %v1723, %v2039
        %v2271 = vadd.f32 %v1517, %v2044
        %v2272 = vadd.f32 %v1726, %v2044
        %v2273 = vadd.f32 %v1520, %v2049
        %v2274 = vadd.f32 %v1729, %v2049
        %v2275 = vadd.f32 %v1523, %v2054
        %v2276 = vadd.f32 %v1732, %v2054
        %v2277 = vadd.f32 %v1526, %v2059
        %v2278 = vadd.f32 %v1735, %v2059
        %v2279 = vadd.f32 %v1529, %v2064
        %v2280 = vadd.f32 %v1738, %v2064
        %v2281 = vadd.f32 %v1532, %v2069
        %v2282 = vadd.f32 %v1741, %v2069
        %v2283 = vadd.f32 %v1535, %v2074
        %v2284 = vadd.f32 %v1744, %v2074
        %v2285 = vadd.f32 %v1538, %v2079
        %v2286 = vadd.f32 %v1747, %v2079
        %v2287 = vadd.f32 %v1541, %v2084
        %v2288 = vadd.f32 %v1750, %v2084
        %v2289 = vadd.f32 %v1544, %v2089
        %v2290 = vadd.f32 %v1753, %v2089
        %v2291 = vadd.f32 %v1547, %v2094
        %v2292 = vadd.f32 %v1756, %v2094
        %v2293 = vadd.f32 %v1550, %v2099
        %v2294 = vadd.f32 %v1759, %v2099
        %v2295 = vadd.f32 %v1553, %v2104
        %v2296 = vadd.f32 %v1762, %v2104
        %v2297 = vadd.f32 %v1556, %v2109
        %v2298 = vadd.f32 %v1765, %v2109
        %v2299 = vadd.f32 %v1559, %v2114
        %v2300 = vadd.f32 %v1768, %v2114
        %v2301 = vadd.f32 %v1562, %v2119
        %v2302 = vadd.f32 %v1771, %v2119
        %v2303 = vadd.f32 %v1565, %v2124
        %v2304 = vadd.f32 %v1774, %v2124
        %v2305 = vadd.f32 %v1568, %v2129
        %v2306 = vadd.f32 %v1777, %v2129
        %v2307 = vadd.f32 %v1571, %v2134
        %v2308 = vadd.f32 %v1780, %v2134
        %v2309 = vadd.f32 %v1574, %v2139
        %v2310 = vadd.f32 %v1783, %v2139
        %v2311 = vadd.f32 %v1577, %v2144
        %v2312 = vadd.f32 %v1786, %v2144
        %v2313 = vadd.f32 %v1580, %v2149
        %v2314 = vadd.f32 %v1789, %v2149
        %v2315 = vadd.f32 %v1583, %v2154
        %v2316 = vadd.f32 %v1792, %v2154
        %v2317 = vadd.f32 %v1586, %v2159
        %v2318 = vadd.f32 %v1795, %v2159
        %v2319 = vadd.f32 %v1589, %v2164
        %v2320 = vadd.f32 %v1798, %v2164
        %v2321 = vadd.f32 %v1592, %v2169
        %v2322 = vadd.f32 %v1801, %v2169
        %v2323 = vadd.f32 %v1595, %v2174
        %v2324 = vadd.f32 %v1804, %v2174
        %v2325 = vadd.f32 %v1598, %v2179
        %v2326 = vadd.f32 %v1807, %v2179
        %v2327 = vadd.f32 %v1601, %v2184
        %v2328 = vadd.f32 %v1810, %v2184
        %v2329 = vadd.f32 %v1604, %v2189
        %v2330 = vadd.f32 %v1813, %v2189
        %v2331 = vadd.f32 %v1607, %v2194
        %v2332 = vadd.f32 %v1816, %v2194
        %v2333 = vadd.f32 %v1610, %v2199
        %v2334 = vadd.f32 %v1819, %v2199
        %v2335 = vadd.f32 %v1613, %v2204
        %v2336 = vadd.f32 %v1822, %v2204
        %v2337 = vadd.f32 %v1616, %v2209
        %v2338 = vadd.f32 %v1825, %v2209
        %v2339 = vld [vmem:[%s6] sm:$0xff]
        %v2340 = vld [vmem:[%s6 + $0x8] sm:$0xff]
        %v2341 = vld [vmem:[%s6 + $0x10] sm:$0xff]
        %v2342 = vld [vmem:[%s6 + $0x18] sm:$0xff]
        %v2343 = vld [vmem:[%s6 + $0x20] sm:$0xff]
        %v2344 = vld [vmem:[%s6 + $0x28] sm:$0xff]
        %v2345 = vld [vmem:[%s6 + $0x30] sm:$0xff]
        %v2346 = vld [vmem:[%s6 + $0x38] sm:$0xff]
        %v2347 = vld [vmem:[%s6 + $0x40] sm:$0xff]
        %v2348 = vld [vmem:[%s6 + $0x48] sm:$0xff]
        %v2349 = vld [vmem:[%s6 + $0x50] sm:$0xff]
        %v2350 = vld [vmem:[%s6 + $0x58] sm:$0xff]
        %v2351 = vld [vmem:[%s6 + $0x60] sm:$0xff]
        %v2352 = vld [vmem:[%s6 + $0x68] sm:$0xff]
        %v2353 = vld [vmem:[%s6 + $0x70] sm:$0xff]
        %v2354 = vld [vmem:[%s6 + $0x78] sm:$0xff]
        %v2355 = vld [vmem:[%s6 + $0x80] sm:$0xff]
        %v2356 = vld [vmem:[%s6 + $0x88] sm:$0xff]
        %v2357 = vld [vmem:[%s6 + $0x90] sm:$0xff]
        %v2358 = vld [vmem:[%s6 + $0x98] sm:$0xff]
        %v2359 = vld [vmem:[%s6 + $0xa0] sm:$0xff]
        %v2360 = vld [vmem:[%s6 + $0xa8] sm:$0xff]
        %v2361 = vld [vmem:[%s6 + $0xb0] sm:$0xff]
        %v2362 = vld [vmem:[%s6 + $0xb8] sm:$0xff]
        %v2363 = vld [vmem:[%s6 + $0xc0] sm:$0xff]
        %v2364 = vld [vmem:[%s6 + $0xc8] sm:$0xff]
        %v2365 = vld [vmem:[%s6 + $0xd0] sm:$0xff]
        %v2366 = vld [vmem:[%s6 + $0xd8] sm:$0xff]
        %v2367 = vld [vmem:[%s6 + $0xe0] sm:$0xff]
        %v2368 = vld [vmem:[%s6 + $0xe8] sm:$0xff]
        %v2369 = vld [vmem:[%s6 + $0xf0] sm:$0xff]
        %v2370 = vld [vmem:[%s6 + $0xf8] sm:$0xff]
        %v2371 = vld [vmem:[%s6 + $0x100] sm:$0xff]
        %v2372 = vld [vmem:[%s6 + $0x108] sm:$0xff]
        %v2373 = vld [vmem:[%s6 + $0x110] sm:$0xff]
        %v2374 = vld [vmem:[%s6 + $0x118] sm:$0xff]
        %v2375 = vld [vmem:[%s6 + $0x120] sm:$0xff]
        %v2376 = vld [vmem:[%s6 + $0x128] sm:$0xff]
        %v2377 = vld [vmem:[%s6 + $0x130] sm:$0xff]
        %v2378 = vld [vmem:[%s6 + $0x138] sm:$0xff]
        %v2379 = vld [vmem:[%s6 + $0x140] sm:$0xff]
        %v2380 = vld [vmem:[%s6 + $0x148] sm:$0xff]
        %v2381 = vld [vmem:[%s6 + $0x150] sm:$0xff]
        %v2382 = vld [vmem:[%s6 + $0x158] sm:$0xff]
        %v2383 = vld [vmem:[%s6 + $0x160] sm:$0xff]
        %v2384 = vld [vmem:[%s6 + $0x168] sm:$0xff]
        %v2385 = vld [vmem:[%s6 + $0x170] sm:$0xff]
        %v2386 = vld [vmem:[%s6 + $0x178] sm:$0xff]
        %v2387 = vld [vmem:[%s6 + $0x180] sm:$0xff]
        %v2388 = vld [vmem:[%s6 + $0x188] sm:$0xff]
        %v2389 = vld [vmem:[%s6 + $0x190] sm:$0xff]
        %v2390 = vld [vmem:[%s6 + $0x198] sm:$0xff]
        %v2391 = vld [vmem:[%s6 + $0x1a0] sm:$0xff]
        %v2392 = vld [vmem:[%s6 + $0x1a8] sm:$0xff]
        %v2393 = vld [vmem:[%s6 + $0x1b0] sm:$0xff]
        %v2394 = vld [vmem:[%s6 + $0x1b8] sm:$0xff]
        %v2395 = vld [vmem:[%s6 + $0x1c0] sm:$0xff]
        %v2396 = vld [vmem:[%s6 + $0x1c8] sm:$0xff]
        %v2397 = vld [vmem:[%s6 + $0x1d0] sm:$0xff]
        %v2398 = vld [vmem:[%s6 + $0x1d8] sm:$0xff]
        %v2399 = vld [vmem:[%s6 + $0x1e0] sm:$0xff]
        %v2400 = vld [vmem:[%s6 + $0x1e8] sm:$0xff]
        %v2401 = vld [vmem:[%s6 + $0x1f0] sm:$0xff]
        %v2402 = vld [vmem:[%s6 + $0x1f8] sm:$0xff]
        %v2403 = vld [vmem:[%s6 + $0x200] sm:$0xff]
        %v2404 = vld [vmem:[%s6 + $0x208] sm:$0xff]
        %v2405 = vld [vmem:[%s6 + $0x210] sm:$0xff]
        %v2406 = vld [vmem:[%s6 + $0x218] sm:$0xff]
        %v2407 = vld [vmem:[%s6 + $0x220] sm:$0xff]
        %v2408 = vld [vmem:[%s6 + $0x228] sm:$0xff]
        %v2409 = vld [vmem:[%s6 + $0x230] sm:$0xff]
        %v2410 = vld [vmem:[%s6 + $0x238] sm:$0xff]
        %v2411 = vld [vmem:[%s6 + $0x240] sm:$0xff]
        %v2412 = vld [vmem:[%s6 + $0x248] sm:$0xff]
        %v2413 = vld [vmem:[%s6 + $0x250] sm:$0xff]
        %v2414 = vld [vmem:[%s6 + $0x258] sm:$0xff]
        %v2415 = vld [vmem:[%s6 + $0x260] sm:$0xff]
        %v2416 = vld [vmem:[%s6 + $0x268] sm:$0xff]
        %v2417 = vld [vmem:[%s6 + $0x270] sm:$0xff]
        %v2418 = vld [vmem:[%s6 + $0x278] sm:$0xff]
        %v2419 = vld [vmem:[%s6 + $0x280] sm:$0xff]
        %v2420 = vld [vmem:[%s6 + $0x288] sm:$0xff]
        %v2421 = vld [vmem:[%s6 + $0x290] sm:$0xff]
        %v2422 = vld [vmem:[%s6 + $0x298] sm:$0xff]
        %v2423 = vld [vmem:[%s6 + $0x2a0] sm:$0xff]
        %v2424 = vld [vmem:[%s6 + $0x2a8] sm:$0xff]
        %v2425 = vld [vmem:[%s6 + $0x2b0] sm:$0xff]
        %v2426 = vld [vmem:[%s6 + $0x2b8] sm:$0xff]
        %v2427 = vld [vmem:[%s6 + $0x2c0] sm:$0xff]
        %v2428 = vld [vmem:[%s6 + $0x2c8] sm:$0xff]
        %v2429 = vld [vmem:[%s6 + $0x2d0] sm:$0xff]
        %v2430 = vld [vmem:[%s6 + $0x2d8] sm:$0xff]
        %v2431 = vld [vmem:[%s6 + $0x2e0] sm:$0xff]
        %v2432 = vld [vmem:[%s6 + $0x2e8] sm:$0xff]
        %v2433 = vld [vmem:[%s6 + $0x2f0] sm:$0xff]
        %v2434 = vld [vmem:[%s6 + $0x2f8] sm:$0xff]
        %v2435 = vld [vmem:[%s6 + $0x300] sm:$0xff]
        %v2436 = vld [vmem:[%s6 + $0x308] sm:$0xff]
        %v2437 = vld [vmem:[%s6 + $0x310] sm:$0xff]
        %v2438 = vld [vmem:[%s6 + $0x318] sm:$0xff]
        %v2439 = vld [vmem:[%s6 + $0x320] sm:$0xff]
        %v2440 = vld [vmem:[%s6 + $0x328] sm:$0xff]
        %v2441 = vld [vmem:[%s6 + $0x330] sm:$0xff]
        %v2442 = vld [vmem:[%s6 + $0x338] sm:$0xff]
        %v2443 = vld [vmem:[%s6 + $0x340] sm:$0xff]
        %v2444 = vld [vmem:[%s6 + $0x348] sm:$0xff]
        %v2445 = vld [vmem:[%s6 + $0x350] sm:$0xff]
        %v2446 = vld [vmem:[%s6 + $0x358] sm:$0xff]
        %v2447 = vld [vmem:[%s6 + $0x360] sm:$0xff]
        %v2448 = vld [vmem:[%s6 + $0x368] sm:$0xff]
        %v2449 = vld [vmem:[%s6 + $0x370] sm:$0xff]
        %v2450 = vld [vmem:[%s6 + $0x378] sm:$0xff]
        %v2451 = vld [vmem:[%s6 + $0x380] sm:$0xff]
        %v2452 = vld [vmem:[%s6 + $0x388] sm:$0xff]
        %v2453 = vld [vmem:[%s6 + $0x390] sm:$0xff]
        %v2454 = vld [vmem:[%s6 + $0x398] sm:$0xff]
        %v2455 = vld [vmem:[%s6 + $0x3a0] sm:$0xff]
        %v2456 = vld [vmem:[%s6 + $0x3a8] sm:$0xff]
        %v2457 = vld [vmem:[%s6 + $0x3b0] sm:$0xff]
        %v2458 = vld [vmem:[%s6 + $0x3b8] sm:$0xff]
        %v2459 = vld [vmem:[%s6 + $0x3c0] sm:$0xff]
        %v2460 = vld [vmem:[%s6 + $0x3c8] sm:$0xff]
        %v2461 = vld [vmem:[%s6 + $0x3d0] sm:$0xff]
        %v2462 = vld [vmem:[%s6 + $0x3d8] sm:$0xff]
        %v2463 = vld [vmem:[%s6 + $0x3e0] sm:$0xff]
        %v2464 = vld [vmem:[%s6 + $0x3e8] sm:$0xff]
        %v2465 = vld [vmem:[%s6 + $0x3f0] sm:$0xff]
        %v2466 = vld [vmem:[%s6 + $0x3f8] sm:$0xff]
        %v2467 = vld [vmem:[%s450] sm:$0x3]
        %v2469 = vperm.slane %v2467, 0
        %v2470 = vperm.slane %v2467, 1
        %v2473 = vmul.f32 %v2339, %v2469
        %v2474 = vmul.f32 %v2340, %v2470
        %v2475 = vmul.f32 %v2341, %v2469
        %v2476 = vmul.f32 %v2342, %v2470
        %v2477 = vmul.f32 %v2343, %v2469
        %v2478 = vmul.f32 %v2344, %v2470
        %v2479 = vmul.f32 %v2345, %v2469
        %v2480 = vmul.f32 %v2346, %v2470
        %v2481 = vmul.f32 %v2347, %v2469
        %v2482 = vmul.f32 %v2348, %v2470
        %v2483 = vmul.f32 %v2349, %v2469
        %v2484 = vmul.f32 %v2350, %v2470
        %v2485 = vmul.f32 %v2351, %v2469
        %v2486 = vmul.f32 %v2352, %v2470
        %v2487 = vmul.f32 %v2353, %v2469
        %v2488 = vmul.f32 %v2354, %v2470
        %v2489 = vmul.f32 %v2355, %v2469
        %v2490 = vmul.f32 %v2356, %v2470
        %v2491 = vmul.f32 %v2357, %v2469
        %v2492 = vmul.f32 %v2358, %v2470
        %v2493 = vmul.f32 %v2359, %v2469
        %v2494 = vmul.f32 %v2360, %v2470
        %v2495 = vmul.f32 %v2361, %v2469
        %v2496 = vmul.f32 %v2362, %v2470
        %v2497 = vmul.f32 %v2363, %v2469
        %v2498 = vmul.f32 %v2364, %v2470
        %v2499 = vmul.f32 %v2365, %v2469
        %v2500 = vmul.f32 %v2366, %v2470
        %v2501 = vmul.f32 %v2367, %v2469
        %v2502 = vmul.f32 %v2368, %v2470
        %v2503 = vmul.f32 %v2369, %v2469
        %v2504 = vmul.f32 %v2370, %v2470
        %v2505 = vmul.f32 %v2371, %v2469
        %v2506 = vmul.f32 %v2372, %v2470
        %v2507 = vmul.f32 %v2373, %v2469
        %v2508 = vmul.f32 %v2374, %v2470
        %v2509 = vmul.f32 %v2375, %v2469
        %v2510 = vmul.f32 %v2376, %v2470
        %v2511 = vmul.f32 %v2377, %v2469
        %v2512 = vmul.f32 %v2378, %v2470
        %v2513 = vmul.f32 %v2379, %v2469
        %v2514 = vmul.f32 %v2380, %v2470
        %v2515 = vmul.f32 %v2381, %v2469
        %v2516 = vmul.f32 %v2382, %v2470
        %v2517 = vmul.f32 %v2383, %v2469
        %v2518 = vmul.f32 %v2384, %v2470
        %v2519 = vmul.f32 %v2385, %v2469
        %v2520 = vmul.f32 %v2386, %v2470
        %v2521 = vmul.f32 %v2387, %v2469
        %v2522 = vmul.f32 %v2388, %v2470
        %v2523 = vmul.f32 %v2389, %v2469
        %v2524 = vmul.f32 %v2390, %v2470
        %v2525 = vmul.f32 %v2391, %v2469
        %v2526 = vmul.f32 %v2392, %v2470
        %v2527 = vmul.f32 %v2393, %v2469
        %v2528 = vmul.f32 %v2394, %v2470
        %v2529 = vmul.f32 %v2395, %v2469
        %v2530 = vmul.f32 %v2396, %v2470
        %v2531 = vmul.f32 %v2397, %v2469
        %v2532 = vmul.f32 %v2398, %v2470
        %v2533 = vmul.f32 %v2399, %v2469
        %v2534 = vmul.f32 %v2400, %v2470
        %v2535 = vmul.f32 %v2401, %v2469
        %v2536 = vmul.f32 %v2402, %v2470
        %v2537 = vmul.f32 %v2403, %v2469
        %v2538 = vmul.f32 %v2404, %v2470
        %v2539 = vmul.f32 %v2405, %v2469
        %v2540 = vmul.f32 %v2406, %v2470
        %v2541 = vmul.f32 %v2407, %v2469
        %v2542 = vmul.f32 %v2408, %v2470
        %v2543 = vmul.f32 %v2409, %v2469
        %v2544 = vmul.f32 %v2410, %v2470
        %v2545 = vmul.f32 %v2411, %v2469
        %v2546 = vmul.f32 %v2412, %v2470
        %v2547 = vmul.f32 %v2413, %v2469
        %v2548 = vmul.f32 %v2414, %v2470
        %v2549 = vmul.f32 %v2415, %v2469
        %v2550 = vmul.f32 %v2416, %v2470
        %v2551 = vmul.f32 %v2417, %v2469
        %v2552 = vmul.f32 %v2418, %v2470
        %v2553 = vmul.f32 %v2419, %v2469
        %v2554 = vmul.f32 %v2420, %v2470
        %v2555 = vmul.f32 %v2421, %v2469
        %v2556 = vmul.f32 %v2422, %v2470
        %v2557 = vmul.f32 %v2423, %v2469
        %v2558 = vmul.f32 %v2424, %v2470
        %v2559 = vmul.f32 %v2425, %v2469
        %v2560 = vmul.f32 %v2426, %v2470
        %v2561 = vmul.f32 %v2427, %v2469
        %v2562 = vmul.f32 %v2428, %v2470
        %v2563 = vmul.f32 %v2429, %v2469
        %v2564 = vmul.f32 %v2430, %v2470
        %v2565 = vmul.f32 %v2431, %v2469
        %v2566 = vmul.f32 %v2432, %v2470
        %v2567 = vmul.f32 %v2433, %v2469
        %v2568 = vmul.f32 %v2434, %v2470
        %v2569 = vmul.f32 %v2435, %v2469
        %v2570 = vmul.f32 %v2436, %v2470
        %v2571 = vmul.f32 %v2437, %v2469
        %v2572 = vmul.f32 %v2438, %v2470
        %v2573 = vmul.f32 %v2439, %v2469
        %v2574 = vmul.f32 %v2440, %v2470
        %v2575 = vmul.f32 %v2441, %v2469
        %v2576 = vmul.f32 %v2442, %v2470
        %v2577 = vmul.f32 %v2443, %v2469
        %v2578 = vmul.f32 %v2444, %v2470
        %v2579 = vmul.f32 %v2445, %v2469
        %v2580 = vmul.f32 %v2446, %v2470
        %v2581 = vmul.f32 %v2447, %v2469
        %v2582 = vmul.f32 %v2448, %v2470
        %v2583 = vmul.f32 %v2449, %v2469
        %v2584 = vmul.f32 %v2450, %v2470
        %v2585 = vmul.f32 %v2451, %v2469
        %v2586 = vmul.f32 %v2452, %v2470
        %v2587 = vmul.f32 %v2453, %v2469
        %v2588 = vmul.f32 %v2454, %v2470
        %v2589 = vmul.f32 %v2455, %v2469
        %v2590 = vmul.f32 %v2456, %v2470
        %v2591 = vmul.f32 %v2457, %v2469
        %v2592 = vmul.f32 %v2458, %v2470
        %v2593 = vmul.f32 %v2459, %v2469
        %v2594 = vmul.f32 %v2460, %v2470
        %v2595 = vmul.f32 %v2461, %v2469
        %v2596 = vmul.f32 %v2462, %v2470
        %v2597 = vmul.f32 %v2463, %v2469
        %v2598 = vmul.f32 %v2464, %v2470
        %v2599 = vmul.f32 %v2465, %v2469
        %v2600 = vmul.f32 %v2466, %v2470
        %v2601 = vadd.f32 %v2473, %v2474
        %2602 = vadd.xlane.f32.xlu0 %v2601
        %v2603 = vpop.xlane.xlu0 %2602
        %v2604 = vadd.f32 %v2475, %v2476
        %2605 = vadd.xlane.f32.xlu0 %v2604
        %v2606 = vpop.xlane.xlu0 %2605
        %v2607 = vadd.f32 %v2477, %v2478
        %2608 = vadd.xlane.f32.xlu0 %v2607
        %v2609 = vpop.xlane.xlu0 %2608
        %v2610 = vadd.f32 %v2479, %v2480
        %2611 = vadd.xlane.f32.xlu0 %v2610
        %v2612 = vpop.xlane.xlu0 %2611
        %v2613 = vadd.f32 %v2481, %v2482
        %2614 = vadd.xlane.f32.xlu0 %v2613
        %v2615 = vpop.xlane.xlu0 %2614
        %v2616 = vadd.f32 %v2483, %v2484
        %2617 = vadd.xlane.f32.xlu0 %v2616
        %v2618 = vpop.xlane.xlu0 %2617
        %v2619 = vadd.f32 %v2485, %v2486
        %2620 = vadd.xlane.f32.xlu0 %v2619
        %v2621 = vpop.xlane.xlu0 %2620
        %v2622 = vadd.f32 %v2487, %v2488
        %2623 = vadd.xlane.f32.xlu0 %v2622
        %v2624 = vpop.xlane.xlu0 %2623
        %v2625 = vadd.f32 %v2489, %v2490
        %2626 = vadd.xlane.f32.xlu0 %v2625
        %v2627 = vpop.xlane.xlu0 %2626
        %v2628 = vadd.f32 %v2491, %v2492
        %2629 = vadd.xlane.f32.xlu0 %v2628
        %v2630 = vpop.xlane.xlu0 %2629
        %v2631 = vadd.f32 %v2493, %v2494
        %2632 = vadd.xlane.f32.xlu0 %v2631
        %v2633 = vpop.xlane.xlu0 %2632
        %v2634 = vadd.f32 %v2495, %v2496
        %2635 = vadd.xlane.f32.xlu0 %v2634
        %v2636 = vpop.xlane.xlu0 %2635
        %v2637 = vadd.f32 %v2497, %v2498
        %2638 = vadd.xlane.f32.xlu0 %v2637
        %v2639 = vpop.xlane.xlu0 %2638
        %v2640 = vadd.f32 %v2499, %v2500
        %2641 = vadd.xlane.f32.xlu0 %v2640
        %v2642 = vpop.xlane.xlu0 %2641
        %v2643 = vadd.f32 %v2501, %v2502
        %2644 = vadd.xlane.f32.xlu0 %v2643
        %v2645 = vpop.xlane.xlu0 %2644
        %v2646 = vadd.f32 %v2503, %v2504
        %2647 = vadd.xlane.f32.xlu0 %v2646
        %v2648 = vpop.xlane.xlu0 %2647
        %v2649 = vadd.f32 %v2505, %v2506
        %2650 = vadd.xlane.f32.xlu0 %v2649
        %v2651 = vpop.xlane.xlu0 %2650
        %v2652 = vadd.f32 %v2507, %v2508
        %2653 = vadd.xlane.f32.xlu0 %v2652
        %v2654 = vpop.xlane.xlu0 %2653
        %v2655 = vadd.f32 %v2509, %v2510
        %2656 = vadd.xlane.f32.xlu0 %v2655
        %v2657 = vpop.xlane.xlu0 %2656
        %v2658 = vadd.f32 %v2511, %v2512
        %2659 = vadd.xlane.f32.xlu0 %v2658
        %v2660 = vpop.xlane.xlu0 %2659
        %v2661 = vadd.f32 %v2513, %v2514
        %2662 = vadd.xlane.f32.xlu0 %v2661
        %v2663 = vpop.xlane.xlu0 %2662
        %v2664 = vadd.f32 %v2515, %v2516
        %2665 = vadd.xlane.f32.xlu0 %v2664
        %v2666 = vpop.xlane.xlu0 %2665
        %v2667 = vadd.f32 %v2517, %v2518
        %2668 = vadd.xlane.f32.xlu0 %v2667
        %v2669 = vpop.xlane.xlu0 %2668
        %v2670 = vadd.f32 %v2519, %v2520
        %2671 = vadd.xlane.f32.xlu0 %v2670
        %v2672 = vpop.xlane.xlu0 %2671
        %v2673 = vadd.f32 %v2521, %v2522
        %2674 = vadd.xlane.f32.xlu0 %v2673
        %v2675 = vpop.xlane.xlu0 %2674
        %v2676 = vadd.f32 %v2523, %v2524
        %2677 = vadd.xlane.f32.xlu0 %v2676
        %v2678 = vpop.xlane.xlu0 %2677
        %v2679 = vadd.f32 %v2525, %v2526
        %2680 = vadd.xlane.f32.xlu0 %v2679
        %v2681 = vpop.xlane.xlu0 %2680
        %v2682 = vadd.f32 %v2527, %v2528
        %2683 = vadd.xlane.f32.xlu0 %v2682
        %v2684 = vpop.xlane.xlu0 %2683
        %v2685 = vadd.f32 %v2529, %v2530
        %2686 = vadd.xlane.f32.xlu0 %v2685
        %v2687 = vpop.xlane.xlu0 %2686
        %v2688 = vadd.f32 %v2531, %v2532
        %2689 = vadd.xlane.f32.xlu0 %v2688
        %v2690 = vpop.xlane.xlu0 %2689
        %v2691 = vadd.f32 %v2533, %v2534
        %2692 = vadd.xlane.f32.xlu0 %v2691
        %v2693 = vpop.xlane.xlu0 %2692
        %v2694 = vadd.f32 %v2535, %v2536
        %2695 = vadd.xlane.f32.xlu0 %v2694
        %v2696 = vpop.xlane.xlu0 %2695
        %v2697 = vadd.f32 %v2537, %v2538
        %2698 = vadd.xlane.f32.xlu0 %v2697
        %v2699 = vpop.xlane.xlu0 %2698
        %v2700 = vadd.f32 %v2539, %v2540
        %2701 = vadd.xlane.f32.xlu0 %v2700
        %v2702 = vpop.xlane.xlu0 %2701
        %v2703 = vadd.f32 %v2541, %v2542
        %2704 = vadd.xlane.f32.xlu0 %v2703
        %v2705 = vpop.xlane.xlu0 %2704
        %v2706 = vadd.f32 %v2543, %v2544
        %2707 = vadd.xlane.f32.xlu0 %v2706
        %v2708 = vpop.xlane.xlu0 %2707
        %v2709 = vadd.f32 %v2545, %v2546
        %2710 = vadd.xlane.f32.xlu0 %v2709
        %v2711 = vpop.xlane.xlu0 %2710
        %v2712 = vadd.f32 %v2547, %v2548
        %2713 = vadd.xlane.f32.xlu0 %v2712
        %v2714 = vpop.xlane.xlu0 %2713
        %v2715 = vadd.f32 %v2549, %v2550
        %2716 = vadd.xlane.f32.xlu0 %v2715
        %v2717 = vpop.xlane.xlu0 %2716
        %v2718 = vadd.f32 %v2551, %v2552
        %2719 = vadd.xlane.f32.xlu0 %v2718
        %v2720 = vpop.xlane.xlu0 %2719
        %v2721 = vadd.f32 %v2553, %v2554
        %2722 = vadd.xlane.f32.xlu0 %v2721
        %v2723 = vpop.xlane.xlu0 %2722
        %v2724 = vadd.f32 %v2555, %v2556
        %2725 = vadd.xlane.f32.xlu0 %v2724
        %v2726 = vpop.xlane.xlu0 %2725
        %v2727 = vadd.f32 %v2557, %v2558
        %2728 = vadd.xlane.f32.xlu0 %v2727
        %v2729 = vpop.xlane.xlu0 %2728
        %v2730 = vadd.f32 %v2559, %v2560
        %2731 = vadd.xlane.f32.xlu0 %v2730
        %v2732 = vpop.xlane.xlu0 %2731
        %v2733 = vadd.f32 %v2561, %v2562
        %2734 = vadd.xlane.f32.xlu0 %v2733
        %v2735 = vpop.xlane.xlu0 %2734
        %v2736 = vadd.f32 %v2563, %v2564
        %2737 = vadd.xlane.f32.xlu0 %v2736
        %v2738 = vpop.xlane.xlu0 %2737
        %v2739 = vadd.f32 %v2565, %v2566
        %2740 = vadd.xlane.f32.xlu0 %v2739
        %v2741 = vpop.xlane.xlu0 %2740
        %v2742 = vadd.f32 %v2567, %v2568
        %2743 = vadd.xlane.f32.xlu0 %v2742
        %v2744 = vpop.xlane.xlu0 %2743
        %v2745 = vadd.f32 %v2569, %v2570
        %2746 = vadd.xlane.f32.xlu0 %v2745
        %v2747 = vpop.xlane.xlu0 %2746
        %v2748 = vadd.f32 %v2571, %v2572
        %2749 = vadd.xlane.f32.xlu0 %v2748
        %v2750 = vpop.xlane.xlu0 %2749
        %v2751 = vadd.f32 %v2573, %v2574
        %2752 = vadd.xlane.f32.xlu0 %v2751
        %v2753 = vpop.xlane.xlu0 %2752
        %v2754 = vadd.f32 %v2575, %v2576
        %2755 = vadd.xlane.f32.xlu0 %v2754
        %v2756 = vpop.xlane.xlu0 %2755
        %v2757 = vadd.f32 %v2577, %v2578
        %2758 = vadd.xlane.f32.xlu0 %v2757
        %v2759 = vpop.xlane.xlu0 %2758
        %v2760 = vadd.f32 %v2579, %v2580
        %2761 = vadd.xlane.f32.xlu0 %v2760
        %v2762 = vpop.xlane.xlu0 %2761
        %v2763 = vadd.f32 %v2581, %v2582
        %2764 = vadd.xlane.f32.xlu0 %v2763
        %v2765 = vpop.xlane.xlu0 %2764
        %v2766 = vadd.f32 %v2583, %v2584
        %2767 = vadd.xlane.f32.xlu0 %v2766
        %v2768 = vpop.xlane.xlu0 %2767
        %v2769 = vadd.f32 %v2585, %v2586
        %2770 = vadd.xlane.f32.xlu0 %v2769
        %v2771 = vpop.xlane.xlu0 %2770
        %v2772 = vadd.f32 %v2587, %v2588
        %2773 = vadd.xlane.f32.xlu0 %v2772
        %v2774 = vpop.xlane.xlu0 %2773
        %v2775 = vadd.f32 %v2589, %v2590
        %2776 = vadd.xlane.f32.xlu0 %v2775
        %v2777 = vpop.xlane.xlu0 %2776
        %v2778 = vadd.f32 %v2591, %v2592
        %2779 = vadd.xlane.f32.xlu0 %v2778
        %v2780 = vpop.xlane.xlu0 %2779
        %v2781 = vadd.f32 %v2593, %v2594
        %2782 = vadd.xlane.f32.xlu0 %v2781
        %v2783 = vpop.xlane.xlu0 %2782
        %v2784 = vadd.f32 %v2595, %v2596
        %2785 = vadd.xlane.f32.xlu0 %v2784
        %v2786 = vpop.xlane.xlu0 %2785
        %v2787 = vadd.f32 %v2597, %v2598
        %2788 = vadd.xlane.f32.xlu0 %v2787
        %v2789 = vpop.xlane.xlu0 %2788
        %v2790 = vadd.f32 %v2599, %v2600
        %2791 = vadd.xlane.f32.xlu0 %v2790
        %v2792 = vpop.xlane.xlu0 %2791
        %v2793 = vadd.f32 %v2211, %v2603
        %v2794 = vadd.f32 %v2212, %v2603
        %v2795 = vadd.f32 %v2213, %v2606
        %v2796 = vadd.f32 %v2214, %v2606
        %v2797 = vadd.f32 %v2215, %v2609
        %v2798 = vadd.f32 %v2216, %v2609
        %v2799 = vadd.f32 %v2217, %v2612
        %v2800 = vadd.f32 %v2218, %v2612
        %v2801 = vadd.f32 %v2219, %v2615
        %v2802 = vadd.f32 %v2220, %v2615
        %v2803 = vadd.f32 %v2221, %v2618
        %v2804 = vadd.f32 %v2222, %v2618
        %v2805 = vadd.f32 %v2223, %v2621
        %v2806 = vadd.f32 %v2224, %v2621
        %v2807 = vadd.f32 %v2225, %v2624
        %v2808 = vadd.f32 %v2226, %v2624
        %v2809 = vadd.f32 %v2227, %v2627
        %v2810 = vadd.f32 %v2228, %v2627
        %v2811 = vadd.f32 %v2229, %v2630
        %v2812 = vadd.f32 %v2230, %v2630
        %v2813 = vadd.f32 %v2231, %v2633
        %v2814 = vadd.f32 %v2232, %v2633
        %v2815 = vadd.f32 %v2233, %v2636
        %v2816 = vadd.f32 %v2234, %v2636
        %v2817 = vadd.f32 %v2235, %v2639
        %v2818 = vadd.f32 %v2236, %v2639
        %v2819 = vadd.f32 %v2237, %v2642
        %v2820 = vadd.f32 %v2238, %v2642
        %v2821 = vadd.f32 %v2239, %v2645
        %v2822 = vadd.f32 %v2240, %v2645
        %v2823 = vadd.f32 %v2241, %v2648
        %v2824 = vadd.f32 %v2242, %v2648
        %v2825 = vadd.f32 %v2243, %v2651
        %v2826 = vadd.f32 %v2244, %v2651
        %v2827 = vadd.f32 %v2245, %v2654
        %v2828 = vadd.f32 %v2246, %v2654
        %v2829 = vadd.f32 %v2247, %v2657
        %v2830 = vadd.f32 %v2248, %v2657
        %v2831 = vadd.f32 %v2249, %v2660
        %v2832 = vadd.f32 %v2250, %v2660
        %v2833 = vadd.f32 %v2251, %v2663
        %v2834 = vadd.f32 %v2252, %v2663
        %v2835 = vadd.f32 %v2253, %v2666
        %v2836 = vadd.f32 %v2254, %v2666
        %v2837 = vadd.f32 %v2255, %v2669
        %v2838 = vadd.f32 %v2256, %v2669
        %v2839 = vadd.f32 %v2257, %v2672
        %v2840 = vadd.f32 %v2258, %v2672
        %v2841 = vadd.f32 %v2259, %v2675
        %v2842 = vadd.f32 %v2260, %v2675
        %v2843 = vadd.f32 %v2261, %v2678
        %v2844 = vadd.f32 %v2262, %v2678
        %v2845 = vadd.f32 %v2263, %v2681
        %v2846 = vadd.f32 %v2264, %v2681
        %v2847 = vadd.f32 %v2265, %v2684
        %v2848 = vadd.f32 %v2266, %v2684
        %v2849 = vadd.f32 %v2267, %v2687
        %v2850 = vadd.f32 %v2268, %v2687
        %v2851 = vadd.f32 %v2269, %v2690
        %v2852 = vadd.f32 %v2270, %v2690
        %v2853 = vadd.f32 %v2271, %v2693
        %v2854 = vadd.f32 %v2272, %v2693
        %v2855 = vadd.f32 %v2273, %v2696
        %v2856 = vadd.f32 %v2274, %v2696
        %v2857 = vadd.f32 %v2275, %v2699
        %v2858 = vadd.f32 %v2276, %v2699
        %v2859 = vadd.f32 %v2277, %v2702
        %v2860 = vadd.f32 %v2278, %v2702
        %v2861 = vadd.f32 %v2279, %v2705
        %v2862 = vadd.f32 %v2280, %v2705
        %v2863 = vadd.f32 %v2281, %v2708
        %v2864 = vadd.f32 %v2282, %v2708
        %v2865 = vadd.f32 %v2283, %v2711
        %v2866 = vadd.f32 %v2284, %v2711
        %v2867 = vadd.f32 %v2285, %v2714
        %v2868 = vadd.f32 %v2286, %v2714
        %v2869 = vadd.f32 %v2287, %v2717
        %v2870 = vadd.f32 %v2288, %v2717
        %v2871 = vadd.f32 %v2289, %v2720
        %v2872 = vadd.f32 %v2290, %v2720
        %v2873 = vadd.f32 %v2291, %v2723
        %v2874 = vadd.f32 %v2292, %v2723
        %v2875 = vadd.f32 %v2293, %v2726
        %v2876 = vadd.f32 %v2294, %v2726
        %v2877 = vadd.f32 %v2295, %v2729
        %v2878 = vadd.f32 %v2296, %v2729
        %v2879 = vadd.f32 %v2297, %v2732
        %v2880 = vadd.f32 %v2298, %v2732
        %v2881 = vadd.f32 %v2299, %v2735
        %v2882 = vadd.f32 %v2300, %v2735
        %v2883 = vadd.f32 %v2301, %v2738
        %v2884 = vadd.f32 %v2302, %v2738
        %v2885 = vadd.f32 %v2303, %v2741
        %v2886 = vadd.f32 %v2304, %v2741
        %v2887 = vadd.f32 %v2305, %v2744
        %v2888 = vadd.f32 %v2306, %v2744
        %v2889 = vadd.f32 %v2307, %v2747
        %v2890 = vadd.f32 %v2308, %v2747
        %v2891 = vadd.f32 %v2309, %v2750
        %v2892 = vadd.f32 %v2310, %v2750
        %v2893 = vadd.f32 %v2311, %v2753
        %v2894 = vadd.f32 %v2312, %v2753
        %v2895 = vadd.f32 %v2313, %v2756
        %v2896 = vadd.f32 %v2314, %v2756
        %v2897 = vadd.f32 %v2315, %v2759
        %v2898 = vadd.f32 %v2316, %v2759
        %v2899 = vadd.f32 %v2317, %v2762
        %v2900 = vadd.f32 %v2318, %v2762
        %v2901 = vadd.f32 %v2319, %v2765
        %v2902 = vadd.f32 %v2320, %v2765
        %v2903 = vadd.f32 %v2321, %v2768
        %v2904 = vadd.f32 %v2322, %v2768
        %v2905 = vadd.f32 %v2323, %v2771
        %v2906 = vadd.f32 %v2324, %v2771
        %v2907 = vadd.f32 %v2325, %v2774
        %v2908 = vadd.f32 %v2326, %v2774
        %v2909 = vadd.f32 %v2327, %v2777
        %v2910 = vadd.f32 %v2328, %v2777
        %v2911 = vadd.f32 %v2329, %v2780
        %v2912 = vadd.f32 %v2330, %v2780
        %v2913 = vadd.f32 %v2331, %v2783
        %v2914 = vadd.f32 %v2332, %v2783
        %v2915 = vadd.f32 %v2333, %v2786
        %v2916 = vadd.f32 %v2334, %v2786
        %v2917 = vadd.f32 %v2335, %v2789
        %v2918 = vadd.f32 %v2336, %v2789
        %v2919 = vadd.f32 %v2337, %v2792
        %v2920 = vadd.f32 %v2338, %v2792
        %v2921 = vtanh.pop %v2793
        %v2922 = vtanh.pop %v2794
        %v2923 = vtanh.pop %v2795
        %v2924 = vtanh.pop %v2796
        %v2925 = vtanh.pop %v2797
        %v2926 = vtanh.pop %v2798
        %v2927 = vtanh.pop %v2799
        %v2928 = vtanh.pop %v2800
        %v2929 = vtanh.pop %v2801
        %v2930 = vtanh.pop %v2802
        %v2931 = vtanh.pop %v2803
        %v2932 = vtanh.pop %v2804
        %v2933 = vtanh.pop %v2805
        %v2934 = vtanh.pop %v2806
        %v2935 = vtanh.pop %v2807
        %v2936 = vtanh.pop %v2808
        %v2937 = vtanh.pop %v2809
        %v2938 = vtanh.pop %v2810
        %v2939 = vtanh.pop %v2811
        %v2940 = vtanh.pop %v2812
        %v2941 = vtanh.pop %v2813
        %v2942 = vtanh.pop %v2814
        %v2943 = vtanh.pop %v2815
        %v2944 = vtanh.pop %v2816
        %v2945 = vtanh.pop %v2817
        %v2946 = vtanh.pop %v2818
        %v2947 = vtanh.pop %v2819
        %v2948 = vtanh.pop %v2820
        %v2949 = vtanh.pop %v2821
        %v2950 = vtanh.pop %v2822
        %v2951 = vtanh.pop %v2823
        %v2952 = vtanh.pop %v2824
        %v2953 = vtanh.pop %v2825
        %v2954 = vtanh.pop %v2826
        %v2955 = vtanh.pop %v2827
        %v2956 = vtanh.pop %v2828
        %v2957 = vtanh.pop %v2829
        %v2958 = vtanh.pop %v2830
        %v2959 = vtanh.pop %v2831
        %v2960 = vtanh.pop %v2832
        %v2961 = vtanh.pop %v2833
        %v2962 = vtanh.pop %v2834
        %v2963 = vtanh.pop %v2835
        %v2964 = vtanh.pop %v2836
        %v2965 = vtanh.pop %v2837
        %v2966 = vtanh.pop %v2838
        %v2967 = vtanh.pop %v2839
        %v2968 = vtanh.pop %v2840
        %v2969 = vtanh.pop %v2841
        %v2970 = vtanh.pop %v2842
        %v2971 = vtanh.pop %v2843
        %v2972 = vtanh.pop %v2844
        %v2973 = vtanh.pop %v2845
        %v2974 = vtanh.pop %v2846
        %v2975 = vtanh.pop %v2847
        %v2976 = vtanh.pop %v2848
        %v2977 = vtanh.pop %v2849
        %v2978 = vtanh.pop %v2850
        %v2979 = vtanh.pop %v2851
        %v2980 = vtanh.pop %v2852
        %v2981 = vtanh.pop %v2853
        %v2982 = vtanh.pop %v2854
        %v2983 = vtanh.pop %v2855
        %v2984 = vtanh.pop %v2856
        %v2985 = vtanh.pop %v2857
        %v2986 = vtanh.pop %v2858
        %v2987 = vtanh.pop %v2859
        %v2988 = vtanh.pop %v2860
        %v2989 = vtanh.pop %v2861
        %v2990 = vtanh.pop %v2862
        %v2991 = vtanh.pop %v2863
        %v2992 = vtanh.pop %v2864
        %v2993 = vtanh.pop %v2865
        %v2994 = vtanh.pop %v2866
        %v2995 = vtanh.pop %v2867
        %v2996 = vtanh.pop %v2868
        %v2997 = vtanh.pop %v2869
        %v2998 = vtanh.pop %v2870
        %v2999 = vtanh.pop %v2871
        %v3000 = vtanh.pop %v2872
        %v3001 = vtanh.pop %v2873
        %v3002 = vtanh.pop %v2874
        %v3003 = vtanh.pop %v2875
        %v3004 = vtanh.pop %v2876
        %v3005 = vtanh.pop %v2877
        %v3006 = vtanh.pop %v2878
        %v3007 = vtanh.pop %v2879
        %v3008 = vtanh.pop %v2880
        %v3009 = vtanh.pop %v2881
        %v3010 = vtanh.pop %v2882
        %v3011 = vtanh.pop %v2883
        %v3012 = vtanh.pop %v2884
        %v3013 = vtanh.pop %v2885
        %v3014 = vtanh.pop %v2886
        %v3015 = vtanh.pop %v2887
        %v3016 = vtanh.pop %v2888
        %v3017 = vtanh.pop %v2889
        %v3018 = vtanh.pop %v2890
        %v3019 = vtanh.pop %v2891
        %v3020 = vtanh.pop %v2892
        %v3021 = vtanh.pop %v2893
        %v3022 = vtanh.pop %v2894
        %v3023 = vtanh.pop %v2895
        %v3024 = vtanh.pop %v2896
        %v3025 = vtanh.pop %v2897
        %v3026 = vtanh.pop %v2898
        %v3027 = vtanh.pop %v2899
        %v3028 = vtanh.pop %v2900
        %v3029 = vtanh.pop %v2901
        %v3030 = vtanh.pop %v2902
        %v3031 = vtanh.pop %v2903
        %v3032 = vtanh.pop %v2904
        %v3033 = vtanh.pop %v2905
        %v3034 = vtanh.pop %v2906
        %v3035 = vtanh.pop %v2907
        %v3036 = vtanh.pop %v2908
        %v3037 = vtanh.pop %v2909
        %v3038 = vtanh.pop %v2910
        %v3039 = vtanh.pop %v2911
        %v3040 = vtanh.pop %v2912
        %v3041 = vtanh.pop %v2913
        %v3042 = vtanh.pop %v2914
        %v3043 = vtanh.pop %v2915
        %v3044 = vtanh.pop %v2916
        %v3045 = vtanh.pop %v2917
        %v3046 = vtanh.pop %v2918
        %v3047 = vtanh.pop %v2919
        %v3048 = vtanh.pop %v2920
        %v3049 = vld [vmem:[%s7] sm:$0xf]
        %v3050 = vld [vmem:[#allocation2] sm:$0x1]
        %3052 = vset.pattern.permute.xlu0 0
        %3053 = vperm.xlu0 %3052, %v3050
        %v3054 = vpop.permute.xlu0 %3053
        %v3056 = vperm.slane %v3054, 0
        %v3058 = vperm.slane %v3049, 0
        %v3059 = vperm.slane %v3049, 1
        %v3060 = vperm.slane %v3049, 2
        %v3061 = vperm.slane %v3049, 3
        %3066 = vmatpush.msra.mxu0 %v2951
        %3067 = vmatpush.msra.mxu0 %v2949
        %3068 = vmatpush.msra.mxu0 %v2947
        %3069 = vmatpush.msra.mxu0 %v2945
        %3070 = vmatpush.msra.mxu0 %v2943
        %3071 = vmatpush.msra.mxu0 %v2941
        %3072 = vmatpush.msra.mxu0 %v2939
        %3073 = vmatpush.msra.mxu0 %v2937
        %3074 = vmatpush.msra.mxu0 %v2935
        %3075 = vmatpush.msra.mxu0 %v2933
        %3076 = vmatpush.msra.mxu0 %v2931
        %3077 = vmatpush.msra.mxu0 %v2929
        %3078 = vmatpush.msra.mxu0 %v2927
        %3079 = vmatpush.msra.mxu0 %v2925
        %3080 = vmatpush.msra.mxu0 %v2923
        %3081 = vmatpush.msra.mxu0 %v2921
        %3082 = vmatmul.f32.gmra.mxu0 %v3058
        %v3083 = vpop.f32.mrf.mxu0
        %v3084 = vadd.f32 %v3056, %v3083
        %3085 = vdwg.mxu0
        %3086 = vmatpush.msra.mxu0 %v2983
        %3087 = vmatpush.msra.mxu0 %v2981
        %3088 = vmatpush.msra.mxu0 %v2979
        %3089 = vmatpush.msra.mxu0 %v2977
        %3090 = vmatpush.msra.mxu0 %v2975
        %3091 = vmatpush.msra.mxu0 %v2973
        %3092 = vmatpush.msra.mxu0 %v2971
        %3093 = vmatpush.msra.mxu0 %v2969
        %3094 = vmatpush.msra.mxu0 %v2967
        %3095 = vmatpush.msra.mxu0 %v2965
        %3096 = vmatpush.msra.mxu0 %v2963
        %3097 = vmatpush.msra.mxu0 %v2961
        %3098 = vmatpush.msra.mxu0 %v2959
        %3099 = vmatpush.msra.mxu0 %v2957
        %3100 = vmatpush.msra.mxu0 %v2955
        %3101 = vmatpush.msra.mxu0 %v2953
        %3102 = vmatmul.f32.gmra.mxu0 %v3059
        %v3103 = vpop.f32.mrf.mxu0
        %v3104 = vadd.f32 %v3084, %v3103
        %3105 = vdwg.mxu0
        %3106 = vmatpush.msra.mxu0 %v3015
        %3107 = vmatpush.msra.mxu0 %v3013
        %3108 = vmatpush.msra.mxu0 %v3011
        %3109 = vmatpush.msra.mxu0 %v3009
        %3110 = vmatpush.msra.mxu0 %v3007
        %3111 = vmatpush.msra.mxu0 %v3005
        %3112 = vmatpush.msra.mxu0 %v3003
        %3113 = vmatpush.msra.mxu0 %v3001
        %3114 = vmatpush.msra.mxu0 %v2999
        %3115 = vmatpush.msra.mxu0 %v2997
        %3116 = vmatpush.msra.mxu0 %v2995
        %3117 = vmatpush.msra.mxu0 %v2993
        %3118 = vmatpush.msra.mxu0 %v2991
        %3119 = vmatpush.msra.mxu0 %v2989
        %3120 = vmatpush.msra.mxu0 %v2987
        %3121 = vmatpush.msra.mxu0 %v2985
        %3122 = vmatmul.f32.gmra.mxu0 %v3060
        %v3123 = vpop.f32.mrf.mxu0
        %v3124 = vadd.f32 %v3104, %v3123
        %3125 = vdwg.mxu0
        %3126 = vmatpush.msra.mxu0 %v3047
        %3127 = vmatpush.msra.mxu0 %v3045
        %3128 = vmatpush.msra.mxu0 %v3043
        %3129 = vmatpush.msra.mxu0 %v3041
        %3130 = vmatpush.msra.mxu0 %v3039
        %3131 = vmatpush.msra.mxu0 %v3037
        %3132 = vmatpush.msra.mxu0 %v3035
        %3133 = vmatpush.msra.mxu0 %v3033
        %3134 = vmatpush.msra.mxu0 %v3031
        %3135 = vmatpush.msra.mxu0 %v3029
        %3136 = vmatpush.msra.mxu0 %v3027
        %3137 = vmatpush.msra.mxu0 %v3025
        %3138 = vmatpush.msra.mxu0 %v3023
        %3139 = vmatpush.msra.mxu0 %v3021
        %3140 = vmatpush.msra.mxu0 %v3019
        %3141 = vmatpush.msra.mxu0 %v3017
        %3142 = vmatmul.f32.gmra.mxu0 %v3061
        %v3143 = vpop.f32.mrf.mxu0
        %v3144 = vadd.f32 %v3124, %v3143
        %3145 = vdwg.mxu0
        %3146 = vmatpush.msra.mxu0 %v2952
        %3147 = vmatpush.msra.mxu0 %v2950
        %3148 = vmatpush.msra.mxu0 %v2948
        %3149 = vmatpush.msra.mxu0 %v2946
        %3150 = vmatpush.msra.mxu0 %v2944
        %3151 = vmatpush.msra.mxu0 %v2942
        %3152 = vmatpush.msra.mxu0 %v2940
        %3153 = vmatpush.msra.mxu0 %v2938
        %3154 = vmatpush.msra.mxu0 %v2936
        %3155 = vmatpush.msra.mxu0 %v2934
        %3156 = vmatpush.msra.mxu0 %v2932
        %3157 = vmatpush.msra.mxu0 %v2930
        %3158 = vmatpush.msra.mxu0 %v2928
        %3159 = vmatpush.msra.mxu0 %v2926
        %3160 = vmatpush.msra.mxu0 %v2924
        %3161 = vmatpush.msra.mxu0 %v2922
        %3162 = vmatmul.f32.gmra.mxu0 %v3058
        %v3163 = vpop.f32.mrf.mxu0
        %v3164 = vadd.f32 %v3056, %v3163
        %3165 = vdwg.mxu0
        %3166 = vmatpush.msra.mxu0 %v2984
        %3167 = vmatpush.msra.mxu0 %v2982
        %3168 = vmatpush.msra.mxu0 %v2980
        %3169 = vmatpush.msra.mxu0 %v2978
        %3170 = vmatpush.msra.mxu0 %v2976
        %3171 = vmatpush.msra.mxu0 %v2974
        %3172 = vmatpush.msra.mxu0 %v2972
        %3173 = vmatpush.msra.mxu0 %v2970
        %3174 = vmatpush.msra.mxu0 %v2968
        %3175 = vmatpush.msra.mxu0 %v2966
        %3176 = vmatpush.msra.mxu0 %v2964
        %3177 = vmatpush.msra.mxu0 %v2962
        %3178 = vmatpush.msra.mxu0 %v2960
        %3179 = vmatpush.msra.mxu0 %v2958
        %3180 = vmatpush.msra.mxu0 %v2956
        %3181 = vmatpush.msra.mxu0 %v2954
        %3182 = vmatmul.f32.gmra.mxu0 %v3059
        %v3183 = vpop.f32.mrf.mxu0
        %v3184 = vadd.f32 %v3164, %v3183
        %3185 = vdwg.mxu0
        %3186 = vmatpush.msra.mxu0 %v3016
        %3187 = vmatpush.msra.mxu0 %v3014
        %3188 = vmatpush.msra.mxu0 %v3012
        %3189 = vmatpush.msra.mxu0 %v3010
        %3190 = vmatpush.msra.mxu0 %v3008
        %3191 = vmatpush.msra.mxu0 %v3006
        %3192 = vmatpush.msra.mxu0 %v3004
        %3193 = vmatpush.msra.mxu0 %v3002
        %3194 = vmatpush.msra.mxu0 %v3000
        %3195 = vmatpush.msra.mxu0 %v2998
        %3196 = vmatpush.msra.mxu0 %v2996
        %3197 = vmatpush.msra.mxu0 %v2994
        %3198 = vmatpush.msra.mxu0 %v2992
        %3199 = vmatpush.msra.mxu0 %v2990
        %3200 = vmatpush.msra.mxu0 %v2988
        %3201 = vmatpush.msra.mxu0 %v2986
        %3202 = vmatmul.f32.gmra.mxu0 %v3060
        %v3203 = vpop.f32.mrf.mxu0
        %v3204 = vadd.f32 %v3184, %v3203
        %3205 = vdwg.mxu0
        %3206 = vmatpush.msra.mxu0 %v3048
        %3207 = vmatpush.msra.mxu0 %v3046
        %3208 = vmatpush.msra.mxu0 %v3044
        %3209 = vmatpush.msra.mxu0 %v3042
        %3210 = vmatpush.msra.mxu0 %v3040
        %3211 = vmatpush.msra.mxu0 %v3038
        %3212 = vmatpush.msra.mxu0 %v3036
        %3213 = vmatpush.msra.mxu0 %v3034
        %3214 = vmatpush.msra.mxu0 %v3032
        %3215 = vmatpush.msra.mxu0 %v3030
        %3216 = vmatpush.msra.mxu0 %v3028
        %3217 = vmatpush.msra.mxu0 %v3026
        %3218 = vmatpush.msra.mxu0 %v3024
        %3219 = vmatpush.msra.mxu0 %v3022
        %3220 = vmatpush.msra.mxu0 %v3020
        %3221 = vmatpush.msra.mxu0 %v3018
        %3222 = vmatmul.f32.gmra.mxu0 %v3061
        %v3223 = vpop.f32.mrf.mxu0
        %v3224 = vadd.f32 %v3204, %v3223
        %3225 = vdwg.mxu0
        %v3226 = vmul.f32 %v3144, 1.442695
        %v3227 = vpow.pop %v3226
        %v3228 = vmul.f32 %v3224, 1.442695
        %v3229 = vpow.pop %v3228
        %s3230 = smul.u32 %s35, 256
        %v3233 = vrot.slane %v3229, 7
        %v3234 = vsel %vm782, %v3227, %v3233
        %s3236 = sshra.s32 %s3230, 7
        %s3237 = sand.u32 %s3230, 127
        %s3238 = scalar_lea.vmem %s426, %s3236 [#allocation5]
        %v3239 = vlaneseq
        %vm3240 = vcmp.ge.s32.totalorder %v3239, 0
        %vm3241 = vcmp.lt.s32.totalorder %v3239, 256
        %vm3242 = vmand %vm3240, %vm3241
        %3243 = vst.msk [vmem:[%s3238] sm:$0x3] %vm3242, %v3234
        %3244 = vst [vmem:[#allocation1] ss:$2 sm:$0xff] %v456
        %v3245 = vld.sshfl [vmem:[#allocation1] sm:$0xff pattern:$0x75316420]
        %v3246 = vld.sshfl [vmem:[#allocation1 + $0x8] sm:$0xff pattern:$0x75316420]
        %3249 = vmatpush.xpose.msra.mxu0 0.0
        %3250 = vmatpush.xpose.msra.mxu0 0.0
        %3251 = vmatpush.xpose.msra.mxu0 0.0
        %3252 = vmatpush.xpose.msra.mxu0 0.0
        %3253 = vmatpush.xpose.msra.mxu0 0.0
        %3254 = vmatpush.xpose.msra.mxu0 0.0
        %3255 = vmatpush.xpose.msra.mxu0 0.0
        %3256 = vmatpush.xpose.msra.mxu0 0.0
        %3257 = vmatpush.xpose.msra.mxu0 0.0
        %3258 = vmatpush.xpose.msra.mxu0 0.0
        %3259 = vmatpush.xpose.msra.mxu0 0.0
        %3260 = vmatpush.xpose.msra.mxu0 0.0
        %3261 = vmatpush.xpose.msra.mxu0 0.0
        %3262 = vmatpush.xpose.msra.mxu0 0.0
        %3263 = vmatpush.xpose.msra.mxu0 0.0
        %3264 = vmatpush.xpose.msra.mxu0 %v3245
        %3265 = vmatmul.f32.gmra.mxu0 %v3227
        %v3266 = vpop.f32.mrf.mxu0
        %v3267 = vadd.f32 0.0, %v3266
        %3268 = vdwg.mxu0
        %3269 = vmatpush.xpose.msra.mxu0 0.0
        %3270 = vmatpush.xpose.msra.mxu0 0.0
        %3271 = vmatpush.xpose.msra.mxu0 0.0
        %3272 = vmatpush.xpose.msra.mxu0 0.0
        %3273 = vmatpush.xpose.msra.mxu0 0.0
        %3274 = vmatpush.xpose.msra.mxu0 0.0
        %3275 = vmatpush.xpose.msra.mxu0 0.0
        %3276 = vmatpush.xpose.msra.mxu0 0.0
        %3277 = vmatpush.xpose.msra.mxu0 0.0
        %3278 = vmatpush.xpose.msra.mxu0 0.0
        %3279 = vmatpush.xpose.msra.mxu0 0.0
        %3280 = vmatpush.xpose.msra.mxu0 0.0
        %3281 = vmatpush.xpose.msra.mxu0 0.0
        %3282 = vmatpush.xpose.msra.mxu0 0.0
        %3283 = vmatpush.xpose.msra.mxu0 0.0
        %3284 = vmatpush.xpose.msra.mxu0 %v3246
        %3285 = vmatmul.f32.gmra.mxu0 %v3229
        %v3286 = vpop.f32.mrf.mxu0
        %v3287 = vadd.f32 %v3267, %v3286
        %3288 = vdwg.mxu0
        %v3289 = vld [vmem:[%s419] sm:$0x1]
        %v3290 = vadd.f32 %v3289, %v3287
        %vm3291 = vcmask 24576
        %3292 = vst.msk [vmem:[%s419] sm:$0x1] %vm3291, %v3290
        // Predicated region
        $region61: #{tpu_custom_call.1} parent=55 // pred_check
          %p3293 = pneg %p451
        $region62: #{tpu_custom_call.1} parent=55 // pred_check_branch
          %3295 = sbr.rel (%p3293) target = $region64
        $region63: #{tpu_custom_call.1} parent=55 // pred_region
          %v3296 = vld [vmem:[%s426] sm:$0x3]
          %v3298 = vperm.slane %v3296, 0
          %v3299 = vperm.slane %v3296, 1
          %v3302 = vsel %vm782, %v3298, 0.0
          %v3303 = vsel %vm782, %v3299, 0.0
          %v3304 = vadd.f32 %v3302, %v3303
          %3305 = vadd.xlane.f32.xlu0 %v3304
          %v3306 = vpop.xlane.xlu0 %3305
          %v3307 = vadd.f32 %v3306, 1e-08
          %v3308 = vrcp.pop %v3307
          %v3309 = vmul.f32 %v3307, %v3308
          %v3310 = vsub.f32 1.0, %v3309
          %v3311 = vmul.f32 %v3308, %v3310
          %v3312 = vadd.f32 %v3308, %v3311
          %vm3313 = vweird.f32 %v3307
          %vm3314 = vweird.f32 %v3308
          %vm3315 = vmor %vm3313, %vm3314
          %v3316 = vsel %vm3315, %v3308, %v3312
          %v3317 = vand.u32 2147483647, %v3307
          %vm3318 = vcmp.eq.f32.partialorder %v3317, 8.507059e+37
          %v3319 = vand.u32 %v3307, 2147483648
          %v3320 = vor.u32 1.1754944e-38, %v3319
          %v3321 = vsel %vm3318, %v3320, %v3316
          %v3323 = vperm.slane %v3321, 0
          %v3325 = vmul.f32 %v3296, %v3323
          %3326 = vst.msk [vmem:[%s426] sm:$0x3] %vm3242, %v3325
          %v3327 = vld [vmem:[%s419] sm:$0x1]
          %v3328 = vmul.f32 %v3327, %v3321
          %3329 = vst [vmem:[%s419] sm:$0x1] %v3328
        $region64: #{tpu_custom_call.1} parent=55 // pred_fallthru
          _
        %s3330 = sand.u32 %s258, 1
        %s3331 = scalar_lea.sflag [#allocation4], %s3330
        %s3332 = sand.u32 %s258, 1
        %s3333 = scalar_lea.vmem [#allocation3], %s3332
        %s3334 = sand.u32 %s284, 1
        %s3335 = scalar_lea.sflag [#allocation6], %s3334
        %s3336 = sand.u32 %s284, 1
        %s3337 = smul.addr %s3336, 2
        %s3338 = scalar_lea.vmem [#allocation5], %s3337
        // Predicated region
        $region65: #{tpu_custom_call.1} parent=55 // pred_check
          %p3339 = pneg %p268
        $region66: #{tpu_custom_call.1} parent=55 // pred_check_branch
          %3341 = sbr.rel (%p3339) target = $region68
        $region67: #{tpu_custom_call.1} parent=55 // pred_region
          %3343 = vsyncadd %s3331, 0
          %s3344 = scalar_lea.hbm %s9, %s34
          %s3346 = sshll.u32 %s3333, 4
          %s3347 = int_to_ptr.vmem [resolvable:$true] %s3346
          %s3348 = sshll.u32 %s3344, 4
          %s3349 = int_to_ptr.hbm [resolvable:$true] %s3348
          %3351 = dma.vmem_to_hbm [thread:$0]  %s3347, 16, %s3349, %s3331
        $region68: #{tpu_custom_call.1} parent=55 // pred_fallthru
          _
        // Predicated region
        $region69: #{tpu_custom_call.1} parent=55 // pred_check
          %p3352 = pneg %p294
        $region70: #{tpu_custom_call.1} parent=55 // pred_check_branch
          %3354 = sbr.rel (%p3352) target = $region72
        $region71: #{tpu_custom_call.1} parent=55 // pred_region
          %3356 = vsyncadd %s3335, 0
          %s3357 = smul.addr %s34, 2
          %s3358 = scalar_lea.hbm %s10, %s3357
          %s3360 = sshll.u32 %s3338, 4
          %s3361 = int_to_ptr.vmem [resolvable:$true] %s3360
          %s3362 = sshll.u32 %s3358, 4
          %s3363 = int_to_ptr.hbm [resolvable:$true] %s3362
          %3365 = dma.vmem_to_hbm [thread:$0]  %s3361, 32, %s3363, %s3335
        $region72: #{tpu_custom_call.1} parent=55 // pred_fallthru
          _
      $region56: #{tpu_custom_call.1} parent=5 // pred_fallthru
        _
      %p3366 = scmp.le.s32.totalorder 2, %s25
      // Predicated region
      $region73: #{tpu_custom_call.1} parent=5 // pred_check
        %p3367 = pneg %p3366
      $region74: #{tpu_custom_call.1} parent=5 // pred_check_branch
        %3369 = sbr.rel (%p3367) target = $region76
      $region75: #{tpu_custom_call.1} parent=5 // pred_region
        %s3370 = ssub.s32 %s25, 2
        // Predicated region
        $region77: #{tpu_custom_call.1} parent=75 // pred_check
          %p3371 = pneg %p274
        $region78: #{tpu_custom_call.1} parent=75 // pred_check_branch
          %3373 = sbr.rel (%p3371) target = $region80
        $region79: #{tpu_custom_call.1} parent=75 // pred_region
          %s3374 = sand.u32 %s259, 1
          %s3375 = scalar_lea.sflag [#allocation4], %s3374
          %s3376 = sand.u32 %s259, 1
          %s3377 = scalar_lea.vmem [#allocation3], %s3376
          %3379 = dma.done %s3375, 16
        $region80: #{tpu_custom_call.1} parent=75 // pred_fallthru
          _
        // Predicated region
        $region81: #{tpu_custom_call.1} parent=75 // pred_check
          %p3380 = pneg %p300
        $region82: #{tpu_custom_call.1} parent=75 // pred_check_branch
          %3382 = sbr.rel (%p3380) target = $region84
        $region83: #{tpu_custom_call.1} parent=75 // pred_region
          %s3383 = sand.u32 %s285, 1
          %s3384 = scalar_lea.sflag [#allocation6], %s3383
          %s3385 = sand.u32 %s285, 1
          %s3386 = smul.addr %s3385, 2
          %s3387 = scalar_lea.vmem [#allocation5], %s3386
          %3389 = dma.done %s3384, 32
        $region84: #{tpu_custom_call.1} parent=75 // pred_fallthru
          _
      $region76: #{tpu_custom_call.1} parent=5 // pred_fallthru
        _
    $region6: #{tpu_custom_call.1} parent=1 // loop_footer
      %s29 = sadd.s32 1, %s25
    $region7: #{tpu_custom_call.1} parent=1 // loop_footer_branch
      %24 = sbr.rel target = $region3
    $region8: #{tpu_custom_call.1} parent=1 // loop_exit
      _
    %3390 = vsyncpa [#allocation4], 1
    %s3391 = scalar_lea.sflag [#allocation4], 1
    %3392 = vsyncpa %s3391, 1
    %3393 = vsyncpa [#allocation6], 1
    %s3394 = scalar_lea.sflag [#allocation6], 1
    %3395 = vsyncpa %s3394, 1

</llo_original>
